<compile_context>
chip_gen: v6e
topology: v6e:2x2x1
jax: 0.10.0
libtpu: 0.0.40
codegen_flags: <defaults>
</compile_context>

<pallas_src>
import math
from functools import partial

import jax
import jax.numpy as jnp
from jax.experimental import pallas as pl
from jax.experimental.pallas import tpu as pltpu


# --------------------------------------------------------------------------- #
# Kernel: grid = (batch, row_tile).  One step handles `rt` src rows of one     #
# batch element; per-batch setup at r==0, global-feature finalize at r==last.  #
# --------------------------------------------------------------------------- #
def _node_edge_block_kernel(
    df,
    X_ref, E_ref, y_ref, mkey_ref, mrow_ref,
    Wqkv_ref, bqkv_ref,          # (dx, 3dx) bf16, (1, 3dx) f32   [q | k | v]
    We_ref, be_ref,              # (de, 2dx) bf16, (1, 2dx) f32   [e_mul | e_add]
    Wy2x_ref, by2x_ref,          # (dy, 4dx) f32,  (1, 4dx) f32   [ye_add|ye_mul|yx_add|yx_mul]
    Wyy_ref, byy_ref,            # (dy, dy), (1, dy)
    Wxy_ref, bxy_ref,            # (4dx, dy), (1, dy)             Xtoy
    Wey_ref, bey_ref,            # (4de, dy), (1, dy)             Etoy
    Wxout_ref, bxout_ref,        # (dx, dx), (1, dx)
    Weout_ref, beout_ref,        # (dx, de) bf16, (1, de) f32
    Wyout_ref, byout_ref,        # (2, dy, dy), (2, 1, dy)        y_out MLP
    newX_ref, newE_ref, newy_ref,
    qkv_ref, film_ref, ypart_ref, estats_ref,
):
    r = pl.program_id(1)
    n_rt = pl.num_programs(1)

    n, dx = X_ref.shape[1], X_ref.shape[2]
    rt = E_ref.shape[1]
    de = E_ref.shape[3]

    dot = partial(jnp.dot, preferred_element_type=jnp.float32)

    key_mask = mkey_ref[0]                     # (1, n)  mask over key / dst nodes
    xm_t = mrow_ref[0]                         # (rt, 1) mask over this tile's src rows

    # ---------------- per-batch setup (first row tile only) ----------------
    @pl.when(r == 0)
    def _setup():
        Xb = X_ref[0]                                    # (n, dx) bf16
        xm_all = key_mask.reshape(n, 1)                  # (n, 1)

        # fused Q|K|V projection (bf16 MXU, f32 accumulate), masked
        qkv = dot(Xb, Wqkv_ref[...]) + bqkv_ref[...]     # (n, 3dx) f32
        qkv_ref[...] = qkv * xm_all

        # fused y -> FiLM coefficients [ye_add | ye_mul | yx_add | yx_mul]
        yv = y_ref[0]                                    # (1, dy)
        film_ref[...] = dot(yv, Wy2x_ref[...]) + by2x_ref[...]

        # E-independent part of the global update: y_y(y) + x_y(X)
        Xf = Xb.astype(jnp.float32)
        y_lin = dot(yv, Wyy_ref[...]) + byy_ref[...]
        x_mean = jnp.mean(Xf, axis=0, keepdims=True)
        x_min = jnp.min(Xf, axis=0, keepdims=True)
        x_max = jnp.max(Xf, axis=0, keepdims=True)
        x_std = jnp.sqrt(
            jnp.sum((Xf - x_mean) ** 2, axis=0, keepdims=True) / max(n - 1, 1))
        Wxy = Wxy_ref[...]
        x_y = (dot(x_mean, Wxy[0:dx]) + dot(x_min, Wxy[dx:2 * dx])
               + dot(x_max, Wxy[2 * dx:3 * dx]) + dot(x_std, Wxy[3 * dx:4 * dx])
               + bxy_ref[...])
        ypart_ref[...] = y_lin + x_y

        # Etoy accumulators: rows = [sum, sum_sq, min, max]
        estats_ref[0:2, :] = jnp.zeros((2, de), jnp.float32)
        estats_ref[2:3, :] = jnp.full((1, de), jnp.inf, jnp.float32)
        estats_ref[3:4, :] = jnp.full((1, de), -jnp.inf, jnp.float32)

    # ---------------- per-row-tile attention / edge update -----------------
    start = pl.multiple_of(r * rt, rt)
    qkv_t = qkv_ref[pl.ds(start, rt), :]                 # (rt, 3dx)
    Q_t = qkv_t[:, 0:dx] * (1.0 / math.sqrt(df))         # 1/sqrt(df) folded into Q
    K = qkv_ref[:, dx:2 * dx]                            # (n, dx)
    V = qkv_ref[:, 2 * dx:3 * dx]                        # (n, dx)

    em_t = xm_t[:, None, :] * key_mask.reshape(1, n, 1)  # (rt, n, 1) = e_mask1*e_mask2

    Eb = E_ref[0]                                        # (rt, n, de) bf16
    E2d = Eb.reshape(rt * n, de)

    # attention logits with edge FiLM (fused e_mul | e_add projection)
    Y = Q_t[:, None, :] * K[None, :, :]                  # (rt, n, dx)
    e12 = dot(E2d, We_ref[...]) + be_ref[...]            # (rt*n, 2dx) f32
    e12 = e12.reshape(rt, n, 2 * dx) * em_t
    E1 = e12[:, :, 0:dx]                                 # e_mul
    E2 = e12[:, :, dx:2 * dx]                            # e_add
    Y = Y * (E1 + 1.0) + E2

    # edge output: y -> FiLM, e_out projection, mask
    film = film_ref[...]                                 # (1, 4dx)
    ye_add = film[:, 0:dx]
    ye_mul = film[:, dx:2 * dx]
    newE_pre = ye_add[None, :, :] + (ye_mul[None, :, :] + 1.0) * Y
    newE_proj = (dot(newE_pre.reshape(rt * n, dx).astype(jnp.bfloat16),
                     Weout_ref[...]) + beout_ref[...])   # (rt*n, de) f32
    # TODO(synk): lane-dense (rt, n*de) store skipped - it needs a minor-dim
    # merging in-kernel reshape; newE is written with the safe (rt, n, de) block.
    newE_ref[0] = newE_proj.reshape(rt, n, de) * em_t

    # masked softmax over keys (finite mask value -> NaN-safe for empty masks)
    # TODO(synk): torch masked_softmax returns the input unchanged when the
    # whole mask is zero (global early return); not reproduced (output is
    # finite and gets zeroed by the node mask instead).
    logits = jnp.where(key_mask.reshape(1, n, 1) > 0.0, Y, -1e30)
    lmax = jnp.max(logits, axis=1, keepdims=True)
    p = jnp.exp(logits - lmax)
    denom = jnp.sum(p, axis=1)                           # (rt, dx)
    attn = p * pl.reciprocal(denom, approx=True)[:, None, :]
    wV = jnp.sum(attn * V[None, :, :], axis=1)           # (rt, dx)

    yx_add = film[:, 2 * dx:3 * dx]
    yx_mul = film[:, 3 * dx:4 * dx]
    newX_pre = yx_add + (yx_mul + 1.0) * wV
    newX_ref[0] = (dot(newX_pre, Wxout_ref[...]) + bxout_ref[...]) * xm_t

    # Etoy running statistics over this tile's edges
    Ef = E2d.astype(jnp.float32)
    estats_ref[0:1, :] += jnp.sum(Ef, axis=0, keepdims=True)
    estats_ref[1:2, :] += jnp.sum(Ef * Ef, axis=0, keepdims=True)
    estats_ref[2:3, :] = jnp.minimum(estats_ref[2:3, :],
                                     jnp.min(Ef, axis=0, keepdims=True))
    estats_ref[3:4, :] = jnp.maximum(estats_ref[3:4, :],
                                     jnp.max(Ef, axis=0, keepdims=True))

    # ---------------- finalize global feature update (last tile) -----------
    @pl.when(r == n_rt - 1)
    def _finish():
        ne = n * n
        e_mean = estats_ref[0:1, :] * (1.0 / ne)
        e_var = jnp.maximum(estats_ref[1:2, :] - ne * e_mean * e_mean, 0.0)
        e_std = jnp.sqrt(e_var / max(ne - 1, 1))
        e_min = estats_ref[2:3, :]
        e_max = estats_ref[3:4, :]
        Wey = Wey_ref[...]
        e_y = (dot(e_mean, Wey[0:de]) + dot(e_min, Wey[de:2 * de])
               + dot(e_max, Wey[2 * de:3 * de]) + dot(e_std, Wey[3 * de:4 * de])
               + bey_ref[...])
        ny = ypart_ref[...] + e_y
        h = jnp.maximum(dot(ny, Wyout_ref[0]) + byout_ref[0], 0.0)
        newy_ref[0] = dot(h, Wyout_ref[1]) + byout_ref[1]


# --------------------------------------------------------------------------- #
# Wrapper                                                                      #
# --------------------------------------------------------------------------- #
def _pick_row_tile(n, target):
    """Largest row tile <= target that divides n and is 8-aligned (or == n)."""
    target = max(1, min(int(target), n))
    for c in range(target, 0, -1):
        if n % c == 0 and (c % 8 == 0 or c == n):
            return c
    return n


def node_edge_block(X, E, y, node_mask, params, n_head, row_tile=None):
    bs, n, dx = X.shape
    de = E.shape[-1]
    dy = y.shape[-1]
    df = dx // n_head

    dx_pad = -(-dx // 128) * 128
    de_pad = -(-de // 128) * 128

    if row_tile is None:
        # target ~24 MiB of live per-step f32 intermediates (v7x 64 MiB VMEM safe)
        per_row = n * (12 * dx_pad + 6 * de_pad) * 4
        row_tile = max(1, (24 << 20) // max(per_row, 1))
    rt = _pick_row_tile(n, row_tile)
    n_rt = n // rt

    # big tensors stay bf16 end-to-end (HBM -> VMEM -> MXU); masks/y in f32
    Xb = X.astype(jnp.bfloat16)
    Eb = E.astype(jnp.bfloat16)
    y3 = y.reshape(bs, 1, dy).astype(jnp.float32)
    mf = node_mask.astype(jnp.float32)
    m_key = mf.reshape(bs, 1, n)
    m_row = mf.reshape(bs, n, 1)

    # fused / bf16 weights for wide-N MXU passes
    Wqkv_f = jnp.concatenate([params["Wqkv"][i] for i in range(3)], axis=1).astype(jnp.bfloat16)
    bqkv_f = jnp.concatenate([params["bqkv"][i] for i in range(3)], axis=1).astype(jnp.float32)
    We_f = jnp.concatenate([params["We"][i] for i in range(2)], axis=1).astype(jnp.bfloat16)
    be_f = jnp.concatenate([params["be"][i] for i in range(2)], axis=1).astype(jnp.float32)
    Wy2x_f = jnp.concatenate([params["Wy2x"][i] for i in range(4)], axis=1)
    by2x_f = jnp.concatenate([params["by2x"][i] for i in range(4)], axis=1)
    Weout_b = params["Weout"].astype(jnp.bfloat16)

    weight_args = [
        Wqkv_f, bqkv_f, We_f, be_f, Wy2x_f, by2x_f,
        params["Wyy"], params["byy"], params["Wxy"], params["bxy"],
        params["Wey"], params["bey"], params["Wxout"], params["bxout"],
        Weout_b, params["beout"], params["Wyout"], params["byout"],
    ]

    def full_spec(a):
        nd = a.ndim
        return pl.BlockSpec(a.shape, lambda b, r, _nd=nd: (0,) * _nd)

    in_specs = [
        pl.BlockSpec((1, n, dx), lambda b, r: (b, 0, 0)),         # X (resident per batch)
        pl.BlockSpec((1, rt, n, de), lambda b, r: (b, r, 0, 0)),  # E row tile
        pl.BlockSpec((1, 1, dy), lambda b, r: (b, 0, 0)),         # y
        pl.BlockSpec((1, 1, n), lambda b, r: (b, 0, 0)),          # key mask
        pl.BlockSpec((1, rt, 1), lambda b, r: (b, r, 0)),         # row-tile mask
    ] + [full_spec(w) for w in weight_args]

    out_specs = [
        pl.BlockSpec((1, rt, dx), lambda b, r: (b, r, 0)),
        pl.BlockSpec((1, rt, n, de), lambda b, r: (b, r, 0, 0)),
        pl.BlockSpec((1, 1, dy), lambda b, r: (b, 0, 0)),
    ]
    out_shape = [
        jax.ShapeDtypeStruct((bs, n, dx), jnp.float32),
        jax.ShapeDtypeStruct((bs, n, n, de), jnp.float32),
        jax.ShapeDtypeStruct((bs, 1, dy), jnp.float32),
    ]

    scratch_shapes = [
        pltpu.VMEM((n, 3 * dx), jnp.float32),    # masked Q|K|V for one batch element
        pltpu.VMEM((1, 4 * dx), jnp.float32),    # y -> FiLM coefficients
        pltpu.VMEM((1, dy), jnp.float32),        # y_y(y) + x_y(X)
        pltpu.VMEM((4, de), jnp.float32),        # Etoy running [sum, sumsq, min, max]
    ]

    # VMEM budget: blocks (double-buffered) + f32 intermediates + weights + scratch
    est = (
        2 * n * dx_pad * 2
        + 2 * rt * n * de_pad * 2
        + 2 * (rt * dx_pad * 4 + rt * n * de_pad * 4 + 128 * 4)
        + 12 * rt * n * dx_pad * 4
        + 2 * sum(int(w.size) * jnp.dtype(w.dtype).itemsize for w in weight_args)
        + (n * 3 * dx + 4 * dx + dy + 4 * de) * 4
        + (2 << 20)
    )
    vmem_limit = int(min(max(est, 16 << 20), 48 << 20))

    newX, newE, newy3 = pl.pallas_call(
        partial(_node_edge_block_kernel, df),
        grid=(bs, n_rt),
        in_specs=in_specs,
        out_specs=out_specs,
        out_shape=out_shape,
        scratch_shapes=scratch_shapes,
        compiler_params=pltpu.CompilerParams(
            dimension_semantics=("parallel", "arbitrary"),
            vmem_limit_bytes=vmem_limit),
    )(Xb, Eb, y3, m_key, m_row, *weight_args)

    return newX, newE, newy3.reshape(bs, dy)


# --------------------------------------------------------------------------- #
# Deterministic parameter init (synthetic; not a checkpoint)                   #
# --------------------------------------------------------------------------- #
def init_params(key, dx, de, dy):
    keys = jax.random.split(key, 40)
    it = iter(keys)

    def lin(din, dout):
        kw, kb = next(it), next(it)
        W = jax.random.normal(kw, (din, dout), jnp.float32) / math.sqrt(din)
        b = 0.1 * jax.random.normal(kb, (1, dout), jnp.float32)
        return W, b

    Wq, bq = lin(dx, dx); Wk, bk = lin(dx, dx); Wv, bv = lin(dx, dx)
    Wem, bem = lin(de, dx); Wea, bea = lin(de, dx)
    Wyea, byea = lin(dy, dx); Wyem, byem = lin(dy, dx)
    Wyxa, byxa = lin(dy, dx); Wyxm, byxm = lin(dy, dx)
    Wyy, byy = lin(dy, dy)
    Wxy, bxy = lin(4 * dx, dy)
    Wey, bey = lin(4 * de, dy)
    Wxo, bxo = lin(dx, dx)
    Weo, beo = lin(dx, de)
    Wy0, by0 = lin(dy, dy)
    Wy1, by1 = lin(dy, dy)

    return dict(
        Wqkv=jnp.stack([Wq, Wk, Wv]), bqkv=jnp.stack([bq, bk, bv]),
        We=jnp.stack([Wem, Wea]), be=jnp.stack([bem, bea]),
        Wy2x=jnp.stack([Wyea, Wyem, Wyxa, Wyxm]),
        by2x=jnp.stack([byea, byem, byxa, byxm]),
        Wyy=Wyy, byy=byy,
        Wxy=Wxy, bxy=bxy,
        Wey=Wey, bey=bey,
        Wxout=Wxo, bxout=bxo,
        Weout=Weo, beout=beo,
        Wyout=jnp.stack([Wy0, Wy1]), byout=jnp.stack([by0, by1]),
    )


# --------------------------------------------------------------------------- #
# Pure-JAX reference mirroring the torch forward.  `mm_dtype=bf16` reproduces  #
# the kernel's MXU precision (bf16 operands, f32 accumulation) for tight       #
# numeric comparison; `mm_dtype=f32` is the exact torch-f32 mirror.            #
# --------------------------------------------------------------------------- #
def reference_forward(X, E, y, node_mask, params, n_head, mm_dtype=jnp.float32):
    bs, n, dx = X.shape
    df = dx // n_head

    def mm(a, w):
        return jnp.dot(a.astype(mm_dtype), w.astype(mm_dtype),
                       preferred_element_type=jnp.float32)

    m = node_mask.astype(jnp.float32)
    xm = m[:, :, None]
    em1 = xm[:, :, None, :]
    em2 = xm[:, None, :, :]

    Wq, Wk, Wv = params["Wqkv"]
    bq, bk, bv = params["bqkv"]
    Q = (mm(X, Wq) + bq[0]) * xm
    K = (mm(X, Wk) + bk[0]) * xm
    V = (mm(X, Wv) + bv[0]) * xm
    Y = Q[:, :, None, :] * K[:, None, :, :] / math.sqrt(df)

    E1 = (mm(E, params["We"][0]) + params["be"][0][0]) * em1 * em2
    E2 = (mm(E, params["We"][1]) + params["be"][1][0]) * em1 * em2
    Y = Y * (E1 + 1.0) + E2

    ye_add = (y @ params["Wy2x"][0] + params["by2x"][0][0])[:, None, None, :]
    ye_mul = (y @ params["Wy2x"][1] + params["by2x"][1][0])[:, None, None, :]
    newE = ye_add + (ye_mul + 1.0) * Y
    newE = (mm(newE, params["Weout"]) + params["beout"][0]) * em1 * em2

    key_mask = m[:, None, :, None]
    logits = jnp.where(key_mask > 0, Y, -jnp.inf)
    attn = jax.nn.softmax(logits, axis=2)
    wV = jnp.sum(attn * V[:, None, :, :], axis=2)

    yx_add = (y @ params["Wy2x"][2] + params["by2x"][2][0])[:, None, :]
    yx_mul = (y @ params["Wy2x"][3] + params["by2x"][3][0])[:, None, :]
    newX = yx_add + (yx_mul + 1.0) * wV
    newX = (newX @ params["Wxout"] + params["bxout"][0]) * xm

    y_lin = y @ params["Wyy"] + params["byy"][0]
    x_mean = X.mean(axis=1); x_min = X.min(axis=1); x_max = X.max(axis=1)
    x_std = jnp.sqrt(((X - x_mean[:, None, :]) ** 2).sum(axis=1) / max(n - 1, 1))
    zx = jnp.concatenate([x_mean, x_min, x_max, x_std], axis=-1)
    x_y = zx @ params["Wxy"] + params["bxy"][0]

    e_mean = E.mean(axis=(1, 2)); e_min = E.min(axis=(1, 2)); e_max = E.max(axis=(1, 2))
    e_std = jnp.sqrt(((E - e_mean[:, None, None, :]) ** 2).sum(axis=(1, 2)) / max(n * n - 1, 1))
    ze = jnp.concatenate([e_mean, e_min, e_max, e_std], axis=-1)
    e_y = ze @ params["Wey"] + params["bey"][0]

    ny = y_lin + x_y + e_y
    h = jax.nn.relu(ny @ params["Wyout"][0] + params["byout"][0][0])
    new_y = h @ params["Wyout"][1] + params["byout"][1][0]
    return newX, newE, new_y


if __name__ == "__main__":
    bs, n, dx, de, dy, n_head = 2, 16, 32, 16, 16, 4

    key = jax.random.PRNGKey(0)
    k1, k2, k3, kp = jax.random.split(key, 4)
    X = jax.random.normal(k1, (bs, n, dx), jnp.float32)
    E = jax.random.normal(k2, (bs, n, n, de), jnp.float32)
    y = jax.random.normal(k3, (bs, dy), jnp.float32)
    node_mask = jnp.concatenate(
        [jnp.concatenate([jnp.ones((1, 10)), jnp.zeros((1, 6))], axis=1),
         jnp.ones((1, n))], axis=0).astype(jnp.float32)
    params = init_params(kp, dx, de, dy)

    # row_tile=8 -> two row tiles per batch element: exercises the pl.when
    # init/finalize paths and the Etoy running accumulators.
    newX, newE, new_y = jax.block_until_ready(
        node_edge_block(X, E, y, node_mask, params, n_head, row_tile=8))

    # Reference with matmul operands rounded to bf16 exactly like the kernel.
    Xq = X.astype(jnp.bfloat16).astype(jnp.float32)
    Eq = E.astype(jnp.bfloat16).astype(jnp.float32)
    rX, rE, ry = reference_forward(Xq, Eq, y, node_mask, params, n_head,
                                   mm_dtype=jnp.bfloat16)

    assert newX.shape == (bs, n, dx)
    assert newE.shape == (bs, n, n, de)
    assert new_y.shape == (bs, dy)
    for got, ref in ((newX, rX), (newE, rE), (new_y, ry)):
        assert bool(jnp.all(jnp.isfinite(got)))
        err = float(jnp.max(jnp.abs(got - ref)))
        assert bool(jnp.allclose(got, ref, atol=2e-2, rtol=2e-2)), err

    print("KERNEL_OK")
</pallas_src>

<mosaic_0001>
module attributes {stable_mosaic.version = 11 : i64} {
  func.func @_node_edge_block_kernel(%arg0: i32, %arg1: i32, %arg2: memref<1x16x32xbf16, #tpu.memory_space<vmem>>, %arg3: memref<1x8x16x16xbf16, #tpu.memory_space<vmem>>, %arg4: memref<1x1x16xf32, #tpu.memory_space<vmem>>, %arg5: memref<1x1x16xf32, #tpu.memory_space<vmem>>, %arg6: memref<1x8x1xf32, #tpu.memory_space<vmem>>, %arg7: memref<32x96xbf16, #tpu.memory_space<vmem>>, %arg8: memref<1x96xf32, #tpu.memory_space<vmem>>, %arg9: memref<16x64xbf16, #tpu.memory_space<vmem>>, %arg10: memref<1x64xf32, #tpu.memory_space<vmem>>, %arg11: memref<16x128xf32, #tpu.memory_space<vmem>>, %arg12: memref<1x128xf32, #tpu.memory_space<vmem>>, %arg13: memref<16x16xf32, #tpu.memory_space<vmem>>, %arg14: memref<1x16xf32, #tpu.memory_space<vmem>>, %arg15: memref<128x16xf32, #tpu.memory_space<vmem>>, %arg16: memref<1x16xf32, #tpu.memory_space<vmem>>, %arg17: memref<64x16xf32, #tpu.memory_space<vmem>>, %arg18: memref<1x16xf32, #tpu.memory_space<vmem>>, %arg19: memref<32x32xf32, #tpu.memory_space<vmem>>, %arg20: memref<1x32xf32, #tpu.memory_space<vmem>>, %arg21: memref<32x16xbf16, #tpu.memory_space<vmem>>, %arg22: memref<1x16xf32, #tpu.memory_space<vmem>>, %arg23: memref<2x16x16xf32, #tpu.memory_space<vmem>>, %arg24: memref<2x1x16xf32, #tpu.memory_space<vmem>>, %arg25: memref<1x8x32xf32, #tpu.memory_space<vmem>>, %arg26: memref<1x8x16x16xf32, #tpu.memory_space<vmem>>, %arg27: memref<1x1x16xf32, #tpu.memory_space<vmem>>, %arg28: memref<16x96xf32, #tpu.memory_space<vmem>>, %arg29: memref<1x128xf32, #tpu.memory_space<vmem>>, %arg30: memref<1x16xf32, #tpu.memory_space<vmem>>, %arg31: memref<4x16xf32, #tpu.memory_space<vmem>>) attributes {dimension_semantics = [#tpu.dimension_semantics<parallel>, #tpu.dimension_semantics<arbitrary>], iteration_bounds = array<i64: 2, 2>, scalar_prefetch = 0 : i64, scratch_operands = 4 : i64, tpu.core_type = #tpu.core_type<tc>, window_params = [{transform_indices = @transform_0, window_bounds = array<i64: 1, 16, 32>}, {transform_indices = @transform_1, window_bounds = array<i64: 1, 8, 16, 16>}, {transform_indices = @transform_2, window_bounds = array<i64: 1, 1, 16>}, {transform_indices = @transform_3, window_bounds = array<i64: 1, 1, 16>}, {transform_indices = @transform_4, window_bounds = array<i64: 1, 8, 1>}, {pipeline_mode = #tpu.pipeline_mode<synchronous>, transform_indices = @transform_5, window_bounds = array<i64: 32, 96>}, {pipeline_mode = #tpu.pipeline_mode<synchronous>, transform_indices = @transform_6, window_bounds = array<i64: 1, 96>}, {pipeline_mode = #tpu.pipeline_mode<synchronous>, transform_indices = @transform_7, window_bounds = array<i64: 16, 64>}, {pipeline_mode = #tpu.pipeline_mode<synchronous>, transform_indices = @transform_8, window_bounds = array<i64: 1, 64>}, {pipeline_mode = #tpu.pipeline_mode<synchronous>, transform_indices = @transform_9, window_bounds = array<i64: 16, 128>}, {pipeline_mode = #tpu.pipeline_mode<synchronous>, transform_indices = @transform_10, window_bounds = array<i64: 1, 128>}, {pipeline_mode = #tpu.pipeline_mode<synchronous>, transform_indices = @transform_11, window_bounds = array<i64: 16, 16>}, {pipeline_mode = #tpu.pipeline_mode<synchronous>, transform_indices = @transform_12, window_bounds = array<i64: 1, 16>}, {pipeline_mode = #tpu.pipeline_mode<synchronous>, transform_indices = @transform_13, window_bounds = array<i64: 128, 16>}, {pipeline_mode = #tpu.pipeline_mode<synchronous>, transform_indices = @transform_14, window_bounds = array<i64: 1, 16>}, {pipeline_mode = #tpu.pipeline_mode<synchronous>, transform_indices = @transform_15, window_bounds = array<i64: 64, 16>}, {pipeline_mode = #tpu.pipeline_mode<synchronous>, transform_indices = @transform_16, window_bounds = array<i64: 1, 16>}, {pipeline_mode = #tpu.pipeline_mode<synchronous>, transform_indices = @transform_17, window_bounds = array<i64: 32, 32>}, {pipeline_mode = #tpu.pipeline_mode<synchronous>, transform_indices = @transform_18, window_bounds = array<i64: 1, 32>}, {pipeline_mode = #tpu.pipeline_mode<synchronous>, transform_indices = @transform_19, window_bounds = array<i64: 32, 16>}, {pipeline_mode = #tpu.pipeline_mode<synchronous>, transform_indices = @transform_20, window_bounds = array<i64: 1, 16>}, {pipeline_mode = #tpu.pipeline_mode<synchronous>, transform_indices = @transform_21, window_bounds = array<i64: 2, 16, 16>}, {pipeline_mode = #tpu.pipeline_mode<synchronous>, transform_indices = @transform_22, window_bounds = array<i64: 2, 1, 16>}, {transform_indices = @transform_23, window_bounds = array<i64: 1, 8, 32>}, {transform_indices = @transform_24, window_bounds = array<i64: 1, 8, 16, 16>}, {transform_indices = @transform_25, window_bounds = array<i64: 1, 1, 16>}]} {
    %c0 = arith.constant 0 : index
    %c0_0 = arith.constant 0 : index
    %c0_1 = arith.constant 0 : index
    %0 = vector.load %arg5[%c0, %c0_0, %c0_1] : memref<1x1x16xf32, #tpu.memory_space<vmem>>, vector<1x1x16xf32>
    %1 = vector.shape_cast %0 : vector<1x1x16xf32> to vector<1x16xf32>
    %c0_2 = arith.constant 0 : index
    %c0_3 = arith.constant 0 : index
    %c0_4 = arith.constant 0 : index
    %2 = vector.load %arg6[%c0_2, %c0_3, %c0_4] : memref<1x8x1xf32, #tpu.memory_space<vmem>>, vector<1x8x1xf32>
    %3 = vector.shape_cast %2 : vector<1x8x1xf32> to vector<8x1xf32>
    %c0_i32 = arith.constant 0 : i32
    %4 = arith.cmpi eq, %arg1, %c0_i32 : i32
    %5 = arith.extui %4 : i1 to i32
    %c0_i32_5 = arith.constant 0 : i32
    %6 = arith.cmpi ne, %5, %c0_i32_5 : i32
    scf.if %6 {
      %c0_63 = arith.constant 0 : index
      %c0_64 = arith.constant 0 : index
      %c0_65 = arith.constant 0 : index
      %131 = vector.load %arg2[%c0_63, %c0_64, %c0_65] : memref<1x16x32xbf16, #tpu.memory_space<vmem>>, vector<1x16x32xbf16>
      %132 = vector.shape_cast %131 : vector<1x16x32xbf16> to vector<16x32xbf16>
      %133 = vector.shape_cast %1 : vector<1x16xf32> to vector<16x1xf32>
      %c0_66 = arith.constant 0 : index
      %c0_67 = arith.constant 0 : index
      %134 = vector.load %arg7[%c0_66, %c0_67] : memref<32x96xbf16, #tpu.memory_space<vmem>>, vector<32x96xbf16>
      %cst_68 = arith.constant dense<0.000000e+00> : vector<16x96xf32>
      %135 = tpu.matmul %132, %134, %cst_68 {dimension_numbers = #tpu.dot_dimension_numbers<[1], [0], [0], [1], [0, 0, 1, 1], [], []>} : vector<16x32xbf16>, vector<32x96xbf16>, vector<16x96xf32> -> vector<16x96xf32>
      %c0_69 = arith.constant 0 : index
      %c0_70 = arith.constant 0 : index
      %136 = vector.load %arg8[%c0_69, %c0_70] : memref<1x96xf32, #tpu.memory_space<vmem>>, vector<1x96xf32>
      %137 = vector.broadcast %136 : vector<1x96xf32> to vector<16x96xf32>
      %138 = arith.addf %135, %137 : vector<16x96xf32>
      %139 = vector.broadcast %133 : vector<16x1xf32> to vector<16x96xf32>
      %140 = arith.mulf %138, %139 : vector<16x96xf32>
      %c0_71 = arith.constant 0 : index
      %c0_72 = arith.constant 0 : index
      %141 = vector.load %arg28[%c0_71, %c0_72] : memref<16x96xf32, #tpu.memory_space<vmem>>, vector<16x96xf32>
      tpu.vector_store %arg28[%c0_71, %c0_72], %140 {strides = array<i32>} : memref<16x96xf32, #tpu.memory_space<vmem>>, vector<16x96xf32>,
      %c0_73 = arith.constant 0 : index
      %c0_74 = arith.constant 0 : index
      %c0_75 = arith.constant 0 : index
      %142 = vector.load %arg4[%c0_73, %c0_74, %c0_75] : memref<1x1x16xf32, #tpu.memory_space<vmem>>, vector<1x1x16xf32>
      %143 = vector.shape_cast %142 : vector<1x1x16xf32> to vector<1x16xf32>
      %c0_76 = arith.constant 0 : index
      %c0_77 = arith.constant 0 : index
      %144 = vector.load %arg11[%c0_76, %c0_77] : memref<16x128xf32, #tpu.memory_space<vmem>>, vector<16x128xf32>
      %cst_78 = arith.constant dense<0.000000e+00> : vector<1x128xf32>
      %145 = tpu.matmul %143, %144, %cst_78 {dimension_numbers = #tpu.dot_dimension_numbers<[1], [0], [0], [1], [0, 0, 1, 1], [], []>} : vector<1x16xf32>, vector<16x128xf32>, vector<1x128xf32> -> vector<1x128xf32>
      %c0_79 = arith.constant 0 : index
      %c0_80 = arith.constant 0 : index
      %146 = vector.load %arg12[%c0_79, %c0_80] : memref<1x128xf32, #tpu.memory_space<vmem>>, vector<1x128xf32>
      %147 = arith.addf %145, %146 : vector<1x128xf32>
      %c0_81 = arith.constant 0 : index
      %c0_82 = arith.constant 0 : index
      %148 = vector.load %arg29[%c0_81, %c0_82] : memref<1x128xf32, #tpu.memory_space<vmem>>, vector<1x128xf32>
      tpu.vector_store %arg29[%c0_81, %c0_82], %147 {strides = array<i32>} : memref<1x128xf32, #tpu.memory_space<vmem>>, vector<1x128xf32>,
      %149 = arith.extf %132 : vector<16x32xbf16> to vector<16x32xf32>
      %c0_83 = arith.constant 0 : index
      %c0_84 = arith.constant 0 : index
      %150 = vector.load %arg13[%c0_83, %c0_84] : memref<16x16xf32, #tpu.memory_space<vmem>>, vector<16x16xf32>
      %cst_85 = arith.constant dense<0.000000e+00> : vector<1x16xf32>
      %151 = tpu.matmul %143, %150, %cst_85 {dimension_numbers = #tpu.dot_dimension_numbers<[1], [0], [0], [1], [0, 0, 1, 1], [], []>} : vector<1x16xf32>, vector<16x16xf32>, vector<1x16xf32> -> vector<1x16xf32>
      %c0_86 = arith.constant 0 : index
      %c0_87 = arith.constant 0 : index
      %152 = vector.load %arg14[%c0_86, %c0_87] : memref<1x16xf32, #tpu.memory_space<vmem>>, vector<1x16xf32>
      %153 = arith.addf %151, %152 : vector<1x16xf32>
      %cst_88 = arith.constant dense<0.000000e+00> : vector<32xf32>
      %154 = vector.multi_reduction <add>, %149, %cst_88 [0] : vector<16x32xf32> to vector<32xf32>
      %155 = vector.shape_cast %154 : vector<32xf32> to vector<1x32xf32>
      %cst_89 = arith.constant 1.600000e+01 : f32
      %156 = vector.broadcast %cst_89 : f32 to vector<1x32xf32>
      %157 = arith.divf %155, %156 : vector<1x32xf32>
      %cst_90 = arith.constant dense<0x7F800000> : vector<32xf32>
      %158 = vector.multi_reduction <minimumf>, %149, %cst_90 [0] : vector<16x32xf32> to vector<32xf32>
      %159 = vector.shape_cast %158 : vector<32xf32> to vector<1x32xf32>
      %cst_91 = arith.constant dense<0xFF800000> : vector<32xf32>
      %160 = vector.multi_reduction <maximumf>, %149, %cst_91 [0] : vector<16x32xf32> to vector<32xf32>
      %161 = vector.shape_cast %160 : vector<32xf32> to vector<1x32xf32>
      %162 = vector.broadcast %157 : vector<1x32xf32> to vector<16x32xf32>
      %163 = arith.subf %149, %162 : vector<16x32xf32>
      %164 = arith.mulf %163, %163 : vector<16x32xf32>
      %cst_92 = arith.constant dense<0.000000e+00> : vector<32xf32>
      %165 = vector.multi_reduction <add>, %164, %cst_92 [0] : vector<16x32xf32> to vector<32xf32>
      %166 = vector.shape_cast %165 : vector<32xf32> to vector<1x32xf32>
      %cst_93 = arith.constant 1.500000e+01 : f32
      %167 = vector.broadcast %cst_93 : f32 to vector<1x32xf32>
      %168 = arith.divf %166, %167 : vector<1x32xf32>
      %169 = math.sqrt %168 : vector<1x32xf32>
      %c0_94 = arith.constant 0 : index
      %c0_95 = arith.constant 0 : index
      %170 = vector.load %arg15[%c0_94, %c0_95] : memref<128x16xf32, #tpu.memory_space<vmem>>, vector<128x16xf32>
      %171 = vector.extract_strided_slice %170 {offsets = [0, 0], sizes = [32, 16], strides = [1, 1]} : vector<128x16xf32> to vector<32x16xf32>
      %cst_96 = arith.constant dense<0.000000e+00> : vector<1x16xf32>
      %172 = tpu.matmul %157, %171, %cst_96 {dimension_numbers = #tpu.dot_dimension_numbers<[1], [0], [0], [1], [0, 0, 1, 1], [], []>} : vector<1x32xf32>, vector<32x16xf32>, vector<1x16xf32> -> vector<1x16xf32>
      %173 = vector.extract_strided_slice %170 {offsets = [32, 0], sizes = [32, 16], strides = [1, 1]} : vector<128x16xf32> to vector<32x16xf32>
      %cst_97 = arith.constant dense<0.000000e+00> : vector<1x16xf32>
      %174 = tpu.matmul %159, %173, %cst_97 {dimension_numbers = #tpu.dot_dimension_numbers<[1], [0], [0], [1], [0, 0, 1, 1], [], []>} : vector<1x32xf32>, vector<32x16xf32>, vector<1x16xf32> -> vector<1x16xf32>
      %175 = arith.addf %172, %174 : vector<1x16xf32>
      %176 = vector.extract_strided_slice %170 {offsets = [64, 0], sizes = [32, 16], strides = [1, 1]} : vector<128x16xf32> to vector<32x16xf32>
      %cst_98 = arith.constant dense<0.000000e+00> : vector<1x16xf32>
      %177 = tpu.matmul %161, %176, %cst_98 {dimension_numbers = #tpu.dot_dimension_numbers<[1], [0], [0], [1], [0, 0, 1, 1], [], []>} : vector<1x32xf32>, vector<32x16xf32>, vector<1x16xf32> -> vector<1x16xf32>
      %178 = arith.addf %175, %177 : vector<1x16xf32>
      %179 = vector.extract_strided_slice %170 {offsets = [96, 0], sizes = [32, 16], strides = [1, 1]} : vector<128x16xf32> to vector<32x16xf32>
      %cst_99 = arith.constant dense<0.000000e+00> : vector<1x16xf32>
      %180 = tpu.matmul %169, %179, %cst_99 {dimension_numbers = #tpu.dot_dimension_numbers<[1], [0], [0], [1], [0, 0, 1, 1], [], []>} : vector<1x32xf32>, vector<32x16xf32>, vector<1x16xf32> -> vector<1x16xf32>
      %181 = arith.addf %178, %180 : vector<1x16xf32>
      %c0_100 = arith.constant 0 : index
      %c0_101 = arith.constant 0 : index
      %182 = vector.load %arg16[%c0_100, %c0_101] : memref<1x16xf32, #tpu.memory_space<vmem>>, vector<1x16xf32>
      %183 = arith.addf %181, %182 : vector<1x16xf32>
      %184 = arith.addf %153, %183 : vector<1x16xf32>
      %c0_102 = arith.constant 0 : index
      %c0_103 = arith.constant 0 : index
      %185 = vector.load %arg30[%c0_102, %c0_103] : memref<1x16xf32, #tpu.memory_space<vmem>>, vector<1x16xf32>
      tpu.vector_store %arg30[%c0_102, %c0_103], %184 {strides = array<i32>} : memref<1x16xf32, #tpu.memory_space<vmem>>, vector<1x16xf32>,
      %cst_104 = arith.constant 0.000000e+00 : f32
      %186 = vector.broadcast %cst_104 : f32 to vector<2x16xf32>
      %c0_105 = arith.constant 0 : index
      %c0_106 = arith.constant 0 : index
      %187 = vector.load %arg31[%c0_105, %c0_106] : memref<4x16xf32, #tpu.memory_space<vmem>>, vector<2x16xf32>
      tpu.vector_store %arg31[%c0_105, %c0_106], %186 {strides = array<i32>} : memref<4x16xf32, #tpu.memory_space<vmem>>, vector<2x16xf32>,
      %cst_107 = arith.constant 0x7F800000 : f32
      %188 = vector.broadcast %cst_107 : f32 to vector<1x16xf32>
      %c2_108 = arith.constant 2 : index
      %c0_109 = arith.constant 0 : index
      %189 = vector.load %arg31[%c2_108, %c0_109] : memref<4x16xf32, #tpu.memory_space<vmem>>, vector<1x16xf32>
      tpu.vector_store %arg31[%c2_108, %c0_109], %188 {strides = array<i32>} : memref<4x16xf32, #tpu.memory_space<vmem>>, vector<1x16xf32>,
      %cst_110 = arith.constant 0xFF800000 : f32
      %190 = vector.broadcast %cst_110 : f32 to vector<1x16xf32>
      %c3_111 = arith.constant 3 : index
      %c0_112 = arith.constant 0 : index
      %191 = vector.load %arg31[%c3_111, %c0_112] : memref<4x16xf32, #tpu.memory_space<vmem>>, vector<1x16xf32>
      tpu.vector_store %arg31[%c3_111, %c0_112], %190 {strides = array<i32>} : memref<4x16xf32, #tpu.memory_space<vmem>>, vector<1x16xf32>,
    } else {
    }
    %c8_i32 = arith.constant 8 : i32
    %7 = arith.muli %arg1, %c8_i32 : i32
    %8 = tpu.assume_multiple %7, 8 : i32
    %9 = arith.index_cast %8 : i32 to index
    %c0_6 = arith.constant 0 : index
    %10 = vector.load %arg28[%9, %c0_6] : memref<16x96xf32, #tpu.memory_space<vmem>>, vector<8x96xf32>
    %11 = vector.extract_strided_slice %10 {offsets = [0, 0], sizes = [8, 32], strides = [1, 1]} : vector<8x96xf32> to vector<8x32xf32>
    %cst = arith.constant 0.353553385 : f32
    %12 = vector.broadcast %cst : f32 to vector<8x32xf32>
    %13 = arith.mulf %11, %12 : vector<8x32xf32>
    %c0_7 = arith.constant 0 : index
    %c32 = arith.constant 32 : index
    %14 = vector.load %arg28[%c0_7, %c32] : memref<16x96xf32, #tpu.memory_space<vmem>>, vector<16x32xf32>
    %c0_8 = arith.constant 0 : index
    %c64 = arith.constant 64 : index
    %15 = vector.load %arg28[%c0_8, %c64] : memref<16x96xf32, #tpu.memory_space<vmem>>, vector<16x32xf32>
    %16 = vector.shape_cast %3 : vector<8x1xf32> to vector<8x1x1xf32>
    %17 = vector.shape_cast %1 : vector<1x16xf32> to vector<1x16x1xf32>
    %18 = vector.broadcast %16 : vector<8x1x1xf32> to vector<8x16x1xf32>
    %19 = vector.broadcast %17 : vector<1x16x1xf32> to vector<8x16x1xf32>
    %20 = arith.mulf %18, %19 : vector<8x16x1xf32>
    %c0_9 = arith.constant 0 : index
    %c0_10 = arith.constant 0 : index
    %c0_11 = arith.constant 0 : index
    %c0_12 = arith.constant 0 : index
    %21 = vector.load %arg3[%c0_9, %c0_10, %c0_11, %c0_12] : memref<1x8x16x16xbf16, #tpu.memory_space<vmem>>, vector<1x8x16x16xbf16>
    %22 = vector.shape_cast %21 : vector<1x8x16x16xbf16> to vector<8x16x16xbf16>
    %23 = vector.shape_cast %22 : vector<8x16x16xbf16> to vector<128x16xbf16>
    %24 = vector.shape_cast %13 : vector<8x32xf32> to vector<8x1x32xf32>
    %25 = vector.shape_cast %14 : vector<16x32xf32> to vector<1x16x32xf32>
    %26 = vector.broadcast %24 : vector<8x1x32xf32> to vector<8x16x32xf32>
    %27 = vector.broadcast %25 : vector<1x16x32xf32> to vector<8x16x32xf32>
    %28 = arith.mulf %26, %27 : vector<8x16x32xf32>
    %c0_13 = arith.constant 0 : index
    %c0_14 = arith.constant 0 : index
    %29 = vector.load %arg9[%c0_13, %c0_14] : memref<16x64xbf16, #tpu.memory_space<vmem>>, vector<16x64xbf16>
    %cst_15 = arith.constant dense<0.000000e+00> : vector<128x64xf32>
    %30 = tpu.matmul %23, %29, %cst_15 {dimension_numbers = #tpu.dot_dimension_numbers<[1], [0], [0], [1], [0, 0, 1, 1], [], []>} : vector<128x16xbf16>, vector<16x64xbf16>, vector<128x64xf32> -> vector<128x64xf32>
    %c0_16 = arith.constant 0 : index
    %c0_17 = arith.constant 0 : index
    %31 = vector.load %arg10[%c0_16, %c0_17] : memref<1x64xf32, #tpu.memory_space<vmem>>, vector<1x64xf32>
    %32 = vector.broadcast %31 : vector<1x64xf32> to vector<128x64xf32>
    %33 = arith.addf %30, %32 : vector<128x64xf32>
    %34 = vector.shape_cast %33 : vector<128x64xf32> to vector<8x16x64xf32>
    %35 = vector.broadcast %20 : vector<8x16x1xf32> to vector<8x16x64xf32>
    %36 = arith.mulf %34, %35 : vector<8x16x64xf32>
    %37 = vector.extract_strided_slice %36 {offsets = [0, 0, 0], sizes = [8, 16, 32], strides = [1, 1, 1]} : vector<8x16x64xf32> to vector<8x16x32xf32>
    %38 = vector.extract_strided_slice %36 {offsets = [0, 0, 32], sizes = [8, 16, 32], strides = [1, 1, 1]} : vector<8x16x64xf32> to vector<8x16x32xf32>
    %cst_18 = arith.constant 1.000000e+00 : f32
    %39 = vector.broadcast %cst_18 : f32 to vector<8x16x32xf32>
    %40 = arith.addf %37, %39 : vector<8x16x32xf32>
    %41 = arith.mulf %28, %40 : vector<8x16x32xf32>
    %42 = arith.addf %41, %38 : vector<8x16x32xf32>
    %c0_19 = arith.constant 0 : index
    %c0_20 = arith.constant 0 : index
    %43 = vector.load %arg29[%c0_19, %c0_20] : memref<1x128xf32, #tpu.memory_space<vmem>>, vector<1x128xf32>
    %44 = vector.extract_strided_slice %43 {offsets = [0, 0], sizes = [1, 32], strides = [1, 1]} : vector<1x128xf32> to vector<1x32xf32>
    %45 = vector.extract_strided_slice %43 {offsets = [0, 32], sizes = [1, 32], strides = [1, 1]} : vector<1x128xf32> to vector<1x32xf32>
    %46 = vector.shape_cast %44 : vector<1x32xf32> to vector<1x1x32xf32>
    %47 = vector.shape_cast %45 : vector<1x32xf32> to vector<1x1x32xf32>
    %cst_21 = arith.constant 1.000000e+00 : f32
    %48 = vector.broadcast %cst_21 : f32 to vector<1x1x32xf32>
    %49 = arith.addf %47, %48 : vector<1x1x32xf32>
    %50 = vector.broadcast %49 : vector<1x1x32xf32> to vector<8x16x32xf32>
    %51 = arith.mulf %50, %42 : vector<8x16x32xf32>
    %52 = vector.broadcast %46 : vector<1x1x32xf32> to vector<8x16x32xf32>
    %53 = arith.addf %52, %51 : vector<8x16x32xf32>
    %54 = vector.shape_cast %53 : vector<8x16x32xf32> to vector<128x32xf32>
    %55 = arith.truncf %54 : vector<128x32xf32> to vector<128x32xbf16>
    %c0_22 = arith.constant 0 : index
    %c0_23 = arith.constant 0 : index
    %56 = vector.load %arg21[%c0_22, %c0_23] : memref<32x16xbf16, #tpu.memory_space<vmem>>, vector<32x16xbf16>
    %cst_24 = arith.constant dense<0.000000e+00> : vector<128x16xf32>
    %57 = tpu.matmul %55, %56, %cst_24 {dimension_numbers = #tpu.dot_dimension_numbers<[1], [0], [0], [1], [0, 0, 1, 1], [], []>} : vector<128x32xbf16>, vector<32x16xbf16>, vector<128x16xf32> -> vector<128x16xf32>
    %c0_25 = arith.constant 0 : index
    %c0_26 = arith.constant 0 : index
    %58 = vector.load %arg22[%c0_25, %c0_26] : memref<1x16xf32, #tpu.memory_space<vmem>>, vector<1x16xf32>
    %59 = vector.broadcast %58 : vector<1x16xf32> to vector<128x16xf32>
    %60 = arith.addf %57, %59 : vector<128x16xf32>
    %61 = vector.shape_cast %60 : vector<128x16xf32> to vector<8x16x16xf32>
    %62 = vector.broadcast %20 : vector<8x16x1xf32> to vector<8x16x16xf32>
    %63 = arith.mulf %61, %62 : vector<8x16x16xf32>
    %c0_27 = arith.constant 0 : index
    %c0_28 = arith.constant 0 : index
    %c0_29 = arith.constant 0 : index
    %c0_30 = arith.constant 0 : index
    %64 = vector.load %arg26[%c0_27, %c0_28, %c0_29, %c0_30] : memref<1x8x16x16xf32, #tpu.memory_space<vmem>>, vector<1x8x16x16xf32>
    %65 = vector.shape_cast %64 : vector<1x8x16x16xf32> to vector<8x16x16xf32>
    %66 = vector.shape_cast %63 : vector<8x16x16xf32> to vector<1x8x16x16xf32>
    tpu.vector_store %arg26[%c0_27, %c0_28, %c0_29, %c0_30], %66 {strides = array<i32>} : memref<1x8x16x16xf32, #tpu.memory_space<vmem>>, vector<1x8x16x16xf32>,
    %67 = vector.shape_cast %1 : vector<1x16xf32> to vector<1x16x1xf32>
    %cst_31 = arith.constant 0.000000e+00 : f32
    %68 = vector.broadcast %cst_31 : f32 to vector<1x16x1xf32>
    %69 = arith.cmpf ogt, %67, %68 : vector<1x16x1xf32>
    %cst_32 = arith.constant -1.000000e+30 : f32
    %70 = vector.shape_cast %69 : vector<1x16x1xi1> to vector<1x16x1xi1>
    %71 = vector.broadcast %70 : vector<1x16x1xi1> to vector<8x16x32xi1>
    %72 = vector.broadcast %cst_32 : f32 to vector<8x16x32xf32>
    %73 = arith.select %71, %42, %72 : vector<8x16x32xi1>, vector<8x16x32xf32>
    %cst_33 = arith.constant dense<0xFF800000> : vector<8x32xf32>
    %74 = vector.multi_reduction <maximumf>, %73, %cst_33 [1] : vector<8x16x32xf32> to vector<8x32xf32>
    %75 = vector.shape_cast %74 : vector<8x32xf32> to vector<8x1x32xf32>
    %76 = vector.broadcast %75 : vector<8x1x32xf32> to vector<8x16x32xf32>
    %77 = arith.subf %73, %76 : vector<8x16x32xf32>
    %78 = math.exp %77 : vector<8x16x32xf32>
    %cst_34 = arith.constant dense<0.000000e+00> : vector<8x32xf32>
    %79 = vector.multi_reduction <add>, %78, %cst_34 [1] : vector<8x16x32xf32> to vector<8x32xf32>
    %80 = tpu.reciprocal %79 {approx = true} : vector<8x32xf32> -> vector<8x32xf32>
    %81 = vector.shape_cast %80 : vector<8x32xf32> to vector<8x1x32xf32>
    %82 = vector.broadcast %81 : vector<8x1x32xf32> to vector<8x16x32xf32>
    %83 = arith.mulf %78, %82 : vector<8x16x32xf32>
    %84 = vector.shape_cast %15 : vector<16x32xf32> to vector<1x16x32xf32>
    %85 = vector.broadcast %84 : vector<1x16x32xf32> to vector<8x16x32xf32>
    %86 = arith.mulf %83, %85 : vector<8x16x32xf32>
    %cst_35 = arith.constant dense<0.000000e+00> : vector<8x32xf32>
    %87 = vector.multi_reduction <add>, %86, %cst_35 [1] : vector<8x16x32xf32> to vector<8x32xf32>
    %88 = vector.extract_strided_slice %43 {offsets = [0, 64], sizes = [1, 32], strides = [1, 1]} : vector<1x128xf32> to vector<1x32xf32>
    %89 = vector.extract_strided_slice %43 {offsets = [0, 96], sizes = [1, 32], strides = [1, 1]} : vector<1x128xf32> to vector<1x32xf32>
    %cst_36 = arith.constant 1.000000e+00 : f32
    %90 = vector.broadcast %cst_36 : f32 to vector<1x32xf32>
    %91 = arith.addf %89, %90 : vector<1x32xf32>
    %92 = vector.broadcast %91 : vector<1x32xf32> to vector<8x32xf32>
    %93 = arith.mulf %92, %87 : vector<8x32xf32>
    %94 = vector.broadcast %88 : vector<1x32xf32> to vector<8x32xf32>
    %95 = arith.addf %94, %93 : vector<8x32xf32>
    %c0_37 = arith.constant 0 : index
    %c0_38 = arith.constant 0 : index
    %96 = vector.load %arg19[%c0_37, %c0_38] : memref<32x32xf32, #tpu.memory_space<vmem>>, vector<32x32xf32>
    %cst_39 = arith.constant dense<0.000000e+00> : vector<8x32xf32>
    %97 = tpu.matmul %95, %96, %cst_39 {dimension_numbers = #tpu.dot_dimension_numbers<[1], [0], [0], [1], [0, 0, 1, 1], [], []>} : vector<8x32xf32>, vector<32x32xf32>, vector<8x32xf32> -> vector<8x32xf32>
    %c0_40 = arith.constant 0 : index
    %c0_41 = arith.constant 0 : index
    %98 = vector.load %arg20[%c0_40, %c0_41] : memref<1x32xf32, #tpu.memory_space<vmem>>, vector<1x32xf32>
    %99 = vector.broadcast %98 : vector<1x32xf32> to vector<8x32xf32>
    %100 = arith.addf %97, %99 : vector<8x32xf32>
    %101 = vector.broadcast %3 : vector<8x1xf32> to vector<8x32xf32>
    %102 = arith.mulf %100, %101 : vector<8x32xf32>
    %c0_42 = arith.constant 0 : index
    %c0_43 = arith.constant 0 : index
    %c0_44 = arith.constant 0 : index
    %103 = vector.load %arg25[%c0_42, %c0_43, %c0_44] : memref<1x8x32xf32, #tpu.memory_space<vmem>>, vector<1x8x32xf32>
    %104 = vector.shape_cast %103 : vector<1x8x32xf32> to vector<8x32xf32>
    %105 = vector.shape_cast %102 : vector<8x32xf32> to vector<1x8x32xf32>
    tpu.vector_store %arg25[%c0_42, %c0_43, %c0_44], %105 {strides = array<i32>} : memref<1x8x32xf32, #tpu.memory_space<vmem>>, vector<1x8x32xf32>,
    %106 = arith.extf %23 : vector<128x16xbf16> to vector<128x16xf32>
    %c0_45 = arith.constant 0 : index
    %c0_46 = arith.constant 0 : index
    %107 = vector.load %arg31[%c0_45, %c0_46] : memref<4x16xf32, #tpu.memory_space<vmem>>, vector<1x16xf32>
    %cst_47 = arith.constant dense<0.000000e+00> : vector<16xf32>
    %108 = vector.multi_reduction <add>, %106, %cst_47 [0] : vector<128x16xf32> to vector<16xf32>
    %109 = vector.shape_cast %108 : vector<16xf32> to vector<1x16xf32>
    %110 = arith.addf %107, %109 : vector<1x16xf32>
    %c0_48 = arith.constant 0 : index
    %c0_49 = arith.constant 0 : index
    %111 = vector.load %arg31[%c0_48, %c0_49] : memref<4x16xf32, #tpu.memory_space<vmem>>, vector<1x16xf32>
    tpu.vector_store %arg31[%c0_48, %c0_49], %110 {strides = array<i32>} : memref<4x16xf32, #tpu.memory_space<vmem>>, vector<1x16xf32>,
    %c1 = arith.constant 1 : index
    %c0_50 = arith.constant 0 : index
    %112 = vector.load %arg31[%c1, %c0_50] : memref<4x16xf32, #tpu.memory_space<vmem>>, vector<1x16xf32>
    %113 = arith.mulf %106, %106 : vector<128x16xf32>
    %cst_51 = arith.constant dense<0.000000e+00> : vector<16xf32>
    %114 = vector.multi_reduction <add>, %113, %cst_51 [0] : vector<128x16xf32> to vector<16xf32>
    %115 = vector.shape_cast %114 : vector<16xf32> to vector<1x16xf32>
    %116 = arith.addf %112, %115 : vector<1x16xf32>
    %c1_52 = arith.constant 1 : index
    %c0_53 = arith.constant 0 : index
    %117 = vector.load %arg31[%c1_52, %c0_53] : memref<4x16xf32, #tpu.memory_space<vmem>>, vector<1x16xf32>
    tpu.vector_store %arg31[%c1_52, %c0_53], %116 {strides = array<i32>} : memref<4x16xf32, #tpu.memory_space<vmem>>, vector<1x16xf32>,
    %c2 = arith.constant 2 : index
    %c0_54 = arith.constant 0 : index
    %118 = vector.load %arg31[%c2, %c0_54] : memref<4x16xf32, #tpu.memory_space<vmem>>, vector<1x16xf32>
    %cst_55 = arith.constant dense<0x7F800000> : vector<16xf32>
    %119 = vector.multi_reduction <minimumf>, %106, %cst_55 [0] : vector<128x16xf32> to vector<16xf32>
    %120 = vector.shape_cast %119 : vector<16xf32> to vector<1x16xf32>
    %121 = arith.minimumf %118, %120 : vector<1x16xf32>
    %c2_56 = arith.constant 2 : index
    %c0_57 = arith.constant 0 : index
    %122 = vector.load %arg31[%c2_56, %c0_57] : memref<4x16xf32, #tpu.memory_space<vmem>>, vector<1x16xf32>
    tpu.vector_store %arg31[%c2_56, %c0_57], %121 {strides = array<i32>} : memref<4x16xf32, #tpu.memory_space<vmem>>, vector<1x16xf32>,
    %c3 = arith.constant 3 : index
    %c0_58 = arith.constant 0 : index
    %123 = vector.load %arg31[%c3, %c0_58] : memref<4x16xf32, #tpu.memory_space<vmem>>, vector<1x16xf32>
    %cst_59 = arith.constant dense<0xFF800000> : vector<16xf32>
    %124 = vector.multi_reduction <maximumf>, %106, %cst_59 [0] : vector<128x16xf32> to vector<16xf32>
    %125 = vector.shape_cast %124 : vector<16xf32> to vector<1x16xf32>
    %126 = arith.maximumf %123, %125 : vector<1x16xf32>
    %c3_60 = arith.constant 3 : index
    %c0_61 = arith.constant 0 : index
    %127 = vector.load %arg31[%c3_60, %c0_61] : memref<4x16xf32, #tpu.memory_space<vmem>>, vector<1x16xf32>
    tpu.vector_store %arg31[%c3_60, %c0_61], %126 {strides = array<i32>} : memref<4x16xf32, #tpu.memory_space<vmem>>, vector<1x16xf32>,
    %c1_i32 = arith.constant 1 : i32
    %128 = arith.cmpi eq, %arg1, %c1_i32 : i32
    %129 = arith.extui %128 : i1 to i32
    %c0_i32_62 = arith.constant 0 : i32
    %130 = arith.cmpi ne, %129, %c0_i32_62 : i32
    scf.if %130 {
      %c0_63 = arith.constant 0 : index
      %c0_64 = arith.constant 0 : index
      %131 = vector.load %arg31[%c0_63, %c0_64] : memref<4x16xf32, #tpu.memory_space<vmem>>, vector<1x16xf32>
      %cst_65 = arith.constant 3.906250e-03 : f32
      %132 = vector.broadcast %cst_65 : f32 to vector<1x16xf32>
      %133 = arith.mulf %131, %132 : vector<1x16xf32>
      %c1_66 = arith.constant 1 : index
      %c0_67 = arith.constant 0 : index
      %134 = vector.load %arg31[%c1_66, %c0_67] : memref<4x16xf32, #tpu.memory_space<vmem>>, vector<1x16xf32>
      %cst_68 = arith.constant 2.560000e+02 : f32
      %135 = vector.broadcast %cst_68 : f32 to vector<1x16xf32>
      %136 = arith.mulf %135, %133 : vector<1x16xf32>
      %137 = arith.mulf %136, %133 : vector<1x16xf32>
      %138 = arith.subf %134, %137 : vector<1x16xf32>
      %cst_69 = arith.constant 0.000000e+00 : f32
      %139 = vector.broadcast %cst_69 : f32 to vector<1x16xf32>
      %140 = arith.maximumf %138, %139 : vector<1x16xf32>
      %cst_70 = arith.constant 2.550000e+02 : f32
      %141 = vector.broadcast %cst_70 : f32 to vector<1x16xf32>
      %142 = arith.divf %140, %141 : vector<1x16xf32>
      %143 = math.sqrt %142 : vector<1x16xf32>
      %c2_71 = arith.constant 2 : index
      %c0_72 = arith.constant 0 : index
      %144 = vector.load %arg31[%c2_71, %c0_72] : memref<4x16xf32, #tpu.memory_space<vmem>>, vector<1x16xf32>
      %c3_73 = arith.constant 3 : index
      %c0_74 = arith.constant 0 : index
      %145 = vector.load %arg31[%c3_73, %c0_74] : memref<4x16xf32, #tpu.memory_space<vmem>>, vector<1x16xf32>
      %c0_75 = arith.constant 0 : index
      %c0_76 = arith.constant 0 : index
      %146 = vector.load %arg17[%c0_75, %c0_76] : memref<64x16xf32, #tpu.memory_space<vmem>>, vector<64x16xf32>
      %147 = vector.extract_strided_slice %146 {offsets = [0, 0], sizes = [16, 16], strides = [1, 1]} : vector<64x16xf32> to vector<16x16xf32>
      %cst_77 = arith.constant dense<0.000000e+00> : vector<1x16xf32>
      %148 = tpu.matmul %133, %147, %cst_77 {dimension_numbers = #tpu.dot_dimension_numbers<[1], [0], [0], [1], [0, 0, 1, 1], [], []>} : vector<1x16xf32>, vector<16x16xf32>, vector<1x16xf32> -> vector<1x16xf32>
      %149 = vector.extract_strided_slice %146 {offsets = [16, 0], sizes = [16, 16], strides = [1, 1]} : vector<64x16xf32> to vector<16x16xf32>
      %cst_78 = arith.constant dense<0.000000e+00> : vector<1x16xf32>
      %150 = tpu.matmul %144, %149, %cst_78 {dimension_numbers = #tpu.dot_dimension_numbers<[1], [0], [0], [1], [0, 0, 1, 1], [], []>} : vector<1x16xf32>, vector<16x16xf32>, vector<1x16xf32> -> vector<1x16xf32>
      %151 = arith.addf %148, %150 : vector<1x16xf32>
      %152 = vector.extract_strided_slice %146 {offsets = [32, 0], sizes = [16, 16], strides = [1, 1]} : vector<64x16xf32> to vector<16x16xf32>
      %cst_79 = arith.constant dense<0.000000e+00> : vector<1x16xf32>
      %153 = tpu.matmul %145, %152, %cst_79 {dimension_numbers = #tpu.dot_dimension_numbers<[1], [0], [0], [1], [0, 0, 1, 1], [], []>} : vector<1x16xf32>, vector<16x16xf32>, vector<1x16xf32> -> vector<1x16xf32>
      %154 = arith.addf %151, %153 : vector<1x16xf32>
      %155 = vector.extract_strided_slice %146 {offsets = [48, 0], sizes = [16, 16], strides = [1, 1]} : vector<64x16xf32> to vector<16x16xf32>
      %cst_80 = arith.constant dense<0.000000e+00> : vector<1x16xf32>
      %156 = tpu.matmul %143, %155, %cst_80 {dimension_numbers = #tpu.dot_dimension_numbers<[1], [0], [0], [1], [0, 0, 1, 1], [], []>} : vector<1x16xf32>, vector<16x16xf32>, vector<1x16xf32> -> vector<1x16xf32>
      %157 = arith.addf %154, %156 : vector<1x16xf32>
      %c0_81 = arith.constant 0 : index
      %c0_82 = arith.constant 0 : index
      %158 = vector.load %arg18[%c0_81, %c0_82] : memref<1x16xf32, #tpu.memory_space<vmem>>, vector<1x16xf32>
      %159 = arith.addf %157, %158 : vector<1x16xf32>
      %c0_83 = arith.constant 0 : index
      %c0_84 = arith.constant 0 : index
      %160 = vector.load %arg30[%c0_83, %c0_84] : memref<1x16xf32, #tpu.memory_space<vmem>>, vector<1x16xf32>
      %161 = arith.addf %160, %159 : vector<1x16xf32>
      %c0_85 = arith.constant 0 : index
      %c0_86 = arith.constant 0 : index
      %c0_87 = arith.constant 0 : index
      %162 = vector.load %arg23[%c0_85, %c0_86, %c0_87] : memref<2x16x16xf32, #tpu.memory_space<vmem>>, vector<1x16x16xf32>
      %163 = vector.shape_cast %162 : vector<1x16x16xf32> to vector<16x16xf32>
      %cst_88 = arith.constant dense<0.000000e+00> : vector<1x16xf32>
      %164 = tpu.matmul %161, %163, %cst_88 {dimension_numbers = #tpu.dot_dimension_numbers<[1], [0], [0], [1], [0, 0, 1, 1], [], []>} : vector<1x16xf32>, vector<16x16xf32>, vector<1x16xf32> -> vector<1x16xf32>
      %c0_89 = arith.constant 0 : index
      %c0_90 = arith.constant 0 : index
      %c0_91 = arith.constant 0 : index
      %165 = vector.load %arg24[%c0_89, %c0_90, %c0_91] : memref<2x1x16xf32, #tpu.memory_space<vmem>>, vector<1x1x16xf32>
      %166 = vector.shape_cast %165 : vector<1x1x16xf32> to vector<1x16xf32>
      %167 = arith.addf %164, %166 : vector<1x16xf32>
      %cst_92 = arith.constant 0.000000e+00 : f32
      %168 = vector.broadcast %cst_92 : f32 to vector<1x16xf32>
      %169 = arith.maximumf %167, %168 : vector<1x16xf32>
      %c1_93 = arith.constant 1 : index
      %c0_94 = arith.constant 0 : index
      %c0_95 = arith.constant 0 : index
      %170 = vector.load %arg23[%c1_93, %c0_94, %c0_95] : memref<2x16x16xf32, #tpu.memory_space<vmem>>, vector<1x16x16xf32>
      %171 = vector.shape_cast %170 : vector<1x16x16xf32> to vector<16x16xf32>
      %cst_96 = arith.constant dense<0.000000e+00> : vector<1x16xf32>
      %172 = tpu.matmul %169, %171, %cst_96 {dimension_numbers = #tpu.dot_dimension_numbers<[1], [0], [0], [1], [0, 0, 1, 1], [], []>} : vector<1x16xf32>, vector<16x16xf32>, vector<1x16xf32> -> vector<1x16xf32>
      %c1_97 = arith.constant 1 : index
      %c0_98 = arith.constant 0 : index
      %c0_99 = arith.constant 0 : index
      %173 = vector.load %arg24[%c1_97, %c0_98, %c0_99] : memref<2x1x16xf32, #tpu.memory_space<vmem>>, vector<1x1x16xf32>
      %174 = vector.shape_cast %173 : vector<1x1x16xf32> to vector<1x16xf32>
      %175 = arith.addf %172, %174 : vector<1x16xf32>
      %c0_100 = arith.constant 0 : index
      %c0_101 = arith.constant 0 : index
      %c0_102 = arith.constant 0 : index
      %176 = vector.load %arg27[%c0_100, %c0_101, %c0_102] : memref<1x1x16xf32, #tpu.memory_space<vmem>>, vector<1x1x16xf32>
      %177 = vector.shape_cast %176 : vector<1x1x16xf32> to vector<1x16xf32>
      %178 = vector.shape_cast %175 : vector<1x16xf32> to vector<1x1x16xf32>
      tpu.vector_store %arg27[%c0_100, %c0_101, %c0_102], %178 {strides = array<i32>} : memref<1x1x16xf32, #tpu.memory_space<vmem>>, vector<1x1x16xf32>,
    } else {
    }
    return
  }
  func.func @transform_0(%arg0: i32, %arg1: i32) -> (i32, i32, i32) {
    %c0_i32 = arith.constant 0 : i32
    %c0_i32_0 = arith.constant 0 : i32
    %c0_i32_1 = arith.constant 0 : i32
    return %arg0, %c0_i32, %c0_i32_0 : i32, i32, i32
  }
  func.func @transform_1(%arg0: i32, %arg1: i32) -> (i32, i32, i32, i32) {
    %c0_i32 = arith.constant 0 : i32
    %c0_i32_0 = arith.constant 0 : i32
    %c0_i32_1 = arith.constant 0 : i32
    return %arg0, %arg1, %c0_i32, %c0_i32_0 : i32, i32, i32, i32
  }
  func.func @transform_2(%arg0: i32, %arg1: i32) -> (i32, i32, i32) {
    %c0_i32 = arith.constant 0 : i32
    %c0_i32_0 = arith.constant 0 : i32
    %c0_i32_1 = arith.constant 0 : i32
    return %arg0, %c0_i32, %c0_i32_0 : i32, i32, i32
  }
  func.func @transform_3(%arg0: i32, %arg1: i32) -> (i32, i32, i32) {
    %c0_i32 = arith.constant 0 : i32
    %c0_i32_0 = arith.constant 0 : i32
    %c0_i32_1 = arith.constant 0 : i32
    return %arg0, %c0_i32, %c0_i32_0 : i32, i32, i32
  }
  func.func @transform_4(%arg0: i32, %arg1: i32) -> (i32, i32, i32) {
    %c0_i32 = arith.constant 0 : i32
    %c0_i32_0 = arith.constant 0 : i32
    return %arg0, %arg1, %c0_i32 : i32, i32, i32
  }
  func.func @transform_5(%arg0: i32, %arg1: i32) -> (i32, i32) {
    %c0_i32 = arith.constant 0 : i32
    %c0_i32_0 = arith.constant 0 : i32
    %c0_i32_1 = arith.constant 0 : i32
    return %c0_i32, %c0_i32_0 : i32, i32
  }
  func.func @transform_6(%arg0: i32, %arg1: i32) -> (i32, i32) {
    %c0_i32 = arith.constant 0 : i32
    %c0_i32_0 = arith.constant 0 : i32
    %c0_i32_1 = arith.constant 0 : i32
    return %c0_i32, %c0_i32_0 : i32, i32
  }
  func.func @transform_7(%arg0: i32, %arg1: i32) -> (i32, i32) {
    %c0_i32 = arith.constant 0 : i32
    %c0_i32_0 = arith.constant 0 : i32
    %c0_i32_1 = arith.constant 0 : i32
    return %c0_i32, %c0_i32_0 : i32, i32
  }
  func.func @transform_8(%arg0: i32, %arg1: i32) -> (i32, i32) {
    %c0_i32 = arith.constant 0 : i32
    %c0_i32_0 = arith.constant 0 : i32
    %c0_i32_1 = arith.constant 0 : i32
    return %c0_i32, %c0_i32_0 : i32, i32
  }
  func.func @transform_9(%arg0: i32, %arg1: i32) -> (i32, i32) {
    %c0_i32 = arith.constant 0 : i32
    %c0_i32_0 = arith.constant 0 : i32
    %c0_i32_1 = arith.constant 0 : i32
    return %c0_i32, %c0_i32_0 : i32, i32
  }
  func.func @transform_10(%arg0: i32, %arg1: i32) -> (i32, i32) {
    %c0_i32 = arith.constant 0 : i32
    %c0_i32_0 = arith.constant 0 : i32
    %c0_i32_1 = arith.constant 0 : i32
    return %c0_i32, %c0_i32_0 : i32, i32
  }
  func.func @transform_11(%arg0: i32, %arg1: i32) -> (i32, i32) {
    %c0_i32 = arith.constant 0 : i32
    %c0_i32_0 = arith.constant 0 : i32
    %c0_i32_1 = arith.constant 0 : i32
    return %c0_i32, %c0_i32_0 : i32, i32
  }
  func.func @transform_12(%arg0: i32, %arg1: i32) -> (i32, i32) {
    %c0_i32 = arith.constant 0 : i32
    %c0_i32_0 = arith.constant 0 : i32
    %c0_i32_1 = arith.constant 0 : i32
    return %c0_i32, %c0_i32_0 : i32, i32
  }
  func.func @transform_13(%arg0: i32, %arg1: i32) -> (i32, i32) {
    %c0_i32 = arith.constant 0 : i32
    %c0_i32_0 = arith.constant 0 : i32
    %c0_i32_1 = arith.constant 0 : i32
    return %c0_i32, %c0_i32_0 : i32, i32
  }
  func.func @transform_14(%arg0: i32, %arg1: i32) -> (i32, i32) {
    %c0_i32 = arith.constant 0 : i32
    %c0_i32_0 = arith.constant 0 : i32
    %c0_i32_1 = arith.constant 0 : i32
    return %c0_i32, %c0_i32_0 : i32, i32
  }
  func.func @transform_15(%arg0: i32, %arg1: i32) -> (i32, i32) {
    %c0_i32 = arith.constant 0 : i32
    %c0_i32_0 = arith.constant 0 : i32
    %c0_i32_1 = arith.constant 0 : i32
    return %c0_i32, %c0_i32_0 : i32, i32
  }
  func.func @transform_16(%arg0: i32, %arg1: i32) -> (i32, i32) {
    %c0_i32 = arith.constant 0 : i32
    %c0_i32_0 = arith.constant 0 : i32
    %c0_i32_1 = arith.constant 0 : i32
    return %c0_i32, %c0_i32_0 : i32, i32
  }
  func.func @transform_17(%arg0: i32, %arg1: i32) -> (i32, i32) {
    %c0_i32 = arith.constant 0 : i32
    %c0_i32_0 = arith.constant 0 : i32
    %c0_i32_1 = arith.constant 0 : i32
    return %c0_i32, %c0_i32_0 : i32, i32
  }
  func.func @transform_18(%arg0: i32, %arg1: i32) -> (i32, i32) {
    %c0_i32 = arith.constant 0 : i32
    %c0_i32_0 = arith.constant 0 : i32
    %c0_i32_1 = arith.constant 0 : i32
    return %c0_i32, %c0_i32_0 : i32, i32
  }
  func.func @transform_19(%arg0: i32, %arg1: i32) -> (i32, i32) {
    %c0_i32 = arith.constant 0 : i32
    %c0_i32_0 = arith.constant 0 : i32
    %c0_i32_1 = arith.constant 0 : i32
    return %c0_i32, %c0_i32_0 : i32, i32
  }
  func.func @transform_20(%arg0: i32, %arg1: i32) -> (i32, i32) {
    %c0_i32 = arith.constant 0 : i32
    %c0_i32_0 = arith.constant 0 : i32
    %c0_i32_1 = arith.constant 0 : i32
    return %c0_i32, %c0_i32_0 : i32, i32
  }
  func.func @transform_21(%arg0: i32, %arg1: i32) -> (i32, i32, i32) {
    %c0_i32 = arith.constant 0 : i32
    %c0_i32_0 = arith.constant 0 : i32
    %c0_i32_1 = arith.constant 0 : i32
    %c0_i32_2 = arith.constant 0 : i32
    return %c0_i32, %c0_i32_0, %c0_i32_1 : i32, i32, i32
  }
  func.func @transform_22(%arg0: i32, %arg1: i32) -> (i32, i32, i32) {
    %c0_i32 = arith.constant 0 : i32
    %c0_i32_0 = arith.constant 0 : i32
    %c0_i32_1 = arith.constant 0 : i32
    %c0_i32_2 = arith.constant 0 : i32
    return %c0_i32, %c0_i32_0, %c0_i32_1 : i32, i32, i32
  }
  func.func @transform_23(%arg0: i32, %arg1: i32) -> (i32, i32, i32) {
    %c0_i32 = arith.constant 0 : i32
    %c0_i32_0 = arith.constant 0 : i32
    return %arg0, %arg1, %c0_i32 : i32, i32, i32
  }
  func.func @transform_24(%arg0: i32, %arg1: i32) -> (i32, i32, i32, i32) {
    %c0_i32 = arith.constant 0 : i32
    %c0_i32_0 = arith.constant 0 : i32
    %c0_i32_1 = arith.constant 0 : i32
    return %arg0, %arg1, %c0_i32, %c0_i32_0 : i32, i32, i32, i32
  }
  func.func @transform_25(%arg0: i32, %arg1: i32) -> (i32, i32, i32) {
    %c0_i32 = arith.constant 0 : i32
    %c0_i32_0 = arith.constant 0 : i32
    %c0_i32_1 = arith.constant 0 : i32
    return %arg0, %c0_i32, %c0_i32_0 : i32, i32, i32
  }
}

</mosaic_0001>

<llo_original>
// kernel: tpu_custom_call.1
$region0: #{tpu_custom_call.1}
  #allocation0 [shape = 'u32[]', space=smem, size = 0x4, offset = 0x4, fixed_abs, tag = 'smem constant byte address 0x4 - core index']
  #allocation1 [shape = 'u32[144,128]{1,0:T(1,128)}', space=vmem, size = 0x12000, scoped, tag = 'internal scratch']
  #allocation2 [shape = 'f32[16,96]{1,0:T(8,128)}', space=vmem, size = 0x2000, scoped, tag = 'scratch operand']
  #allocation3 [shape = 'f32[1,128]{1,0:T(1,128)}', space=vmem, size = 0x200, scoped, tag = 'scratch operand']
  #allocation4 [shape = 'f32[1,16]{1,0:T(1,128)}', space=vmem, size = 0x200, scoped, tag = 'scratch operand']
  #allocation5 [shape = 'f32[4,16]{1,0:T(4,128)}', space=vmem, size = 0x800, scoped, tag = 'scratch operand']
  %s0 = inlined_call_operand.hbm [shape: bf16[2,16,32], index: 0, kind: input, shape index: {}]
  %s1 = inlined_call_operand.vmem [shape: bf16[2,16,16,16], index: 1, kind: input, shape index: {}]
  %s2 = inlined_call_operand.hbm [shape: f32[2,1,16], index: 2, kind: input, shape index: {}]
  %s3 = inlined_call_operand.hbm [shape: f32[2,1,16], index: 3, kind: input, shape index: {}]
  %s4 = inlined_call_operand.vmem [shape: f32[2,16,1], index: 4, kind: input, shape index: {}]
  %s5 = inlined_call_operand.hbm [shape: bf16[32,96], index: 5, kind: input, shape index: {}]
  %s6 = inlined_call_operand.hbm [shape: f32[1,96], index: 6, kind: input, shape index: {}]
  %s7 = inlined_call_operand.hbm [shape: bf16[16,64], index: 7, kind: input, shape index: {}]
  %s8 = inlined_call_operand.hbm [shape: f32[1,64], index: 8, kind: input, shape index: {}]
  %s9 = inlined_call_operand.hbm [shape: f32[16,128], index: 9, kind: input, shape index: {}]
  %s10 = inlined_call_operand.hbm [shape: f32[1,128], index: 10, kind: input, shape index: {}]
  %s11 = inlined_call_operand.hbm [shape: f32[16,16], index: 11, kind: input, shape index: {}]
  %s12 = inlined_call_operand.hbm [shape: f32[1,16], index: 12, kind: input, shape index: {}]
  %s13 = inlined_call_operand.vmem [shape: f32[128,16], index: 13, kind: input, shape index: {}]
  %s14 = inlined_call_operand.hbm [shape: f32[1,16], index: 14, kind: input, shape index: {}]
  %s15 = inlined_call_operand.vmem [shape: f32[64,16], index: 15, kind: input, shape index: {}]
  %s16 = inlined_call_operand.hbm [shape: f32[1,16], index: 16, kind: input, shape index: {}]
  %s17 = inlined_call_operand.vmem [shape: f32[32,32], index: 17, kind: input, shape index: {}]
  %s18 = inlined_call_operand.hbm [shape: f32[1,32], index: 18, kind: input, shape index: {}]
  %s19 = inlined_call_operand.vmem [shape: bf16[32,16], index: 19, kind: input, shape index: {}]
  %s20 = inlined_call_operand.vmem [shape: f32[1,16], index: 20, kind: input, shape index: {}]
  %s21 = inlined_call_operand.hbm [shape: f32[2,16,16], index: 21, kind: input, shape index: {}]
  %s22 = inlined_call_operand.vmem [shape: f32[2,1,16], index: 22, kind: input, shape index: {}]
  %s23 = inlined_call_operand.hbm [shape: f32[2,16,32], index: 23, kind: output, shape index: {0}]
  %s24 = inlined_call_operand.hbm [shape: f32[2,16,16,16], index: 24, kind: output, shape index: {1}]
  %s25 = inlined_call_operand.hbm [shape: f32[2,1,16], index: 25, kind: output, shape index: {2}]
  %26 = xla_tuple %s23, %s24, %s25
  %s27 = sld [smem:[#allocation0]]
  $region209: #{tpu_custom_call.1} parent=0
    _
  %s29 = ssub.s32 1, %s27
  %s30 = scalar_select 0, %s29, %s27
  $region1: #{tpu_custom_call.1} parent=0
    #allocation6 [shape = 'u8[8192]{0}', space=vmem, size = 0x2000, scoped, tag = 'input window, operand 0']
    #allocation7 [shape = 's32[2]{0}', space=sflag, size = 0x8, scoped, tag = 'scoped memory for tpu_custom_call.1']
    #allocation8 [shape = 's32[2]{0}', space=sflag, size = 0x8, scoped, tag = 'scoped memory for tpu_custom_call.1']
    #allocation9 [shape = 'u8[1024]{0}', space=vmem, size = 0x400, scoped, tag = 'input window, operand 2']
    #allocation10 [shape = 's32[2]{0}', space=sflag, size = 0x8, scoped, tag = 'scoped memory for tpu_custom_call.1']
    #allocation11 [shape = 'u8[1024]{0}', space=vmem, size = 0x400, scoped, tag = 'input window, operand 3']
    #allocation12 [shape = 'u8[8192]{0}', space=vmem, size = 0x2000, scoped, tag = 'input window, operand 5, single buffered']
    #allocation13 [shape = 's32[1]{0}', space=sflag, size = 0x4, scoped, tag = 'scoped memory for tpu_custom_call.1']
    #allocation14 [shape = 'u8[512]{0}', space=vmem, size = 0x400, scoped, tag = 'input window, operand 6, single buffered']
    #allocation15 [shape = 'u8[4096]{0}', space=vmem, size = 0x1000, scoped, tag = 'input window, operand 7, single buffered']
    #allocation16 [shape = 's32[1]{0}', space=sflag, size = 0x4, scoped, tag = 'scoped memory for tpu_custom_call.1']
    #allocation17 [shape = 'u8[512]{0}', space=vmem, size = 0x400, scoped, tag = 'input window, operand 8, single buffered']
    #allocation18 [shape = 'u8[8192]{0}', space=vmem, size = 0x2000, scoped, tag = 'input window, operand 9, single buffered']
    #allocation19 [shape = 's32[1]{0}', space=sflag, size = 0x4, scoped, tag = 'scoped memory for tpu_custom_call.1']
    #allocation20 [shape = 'u8[512]{0}', space=vmem, size = 0x400, scoped, tag = 'input window, operand 10, single buffered']
    #allocation21 [shape = 'u8[8192]{0}', space=vmem, size = 0x2000, scoped, tag = 'input window, operand 11, single buffered']
    #allocation22 [shape = 's32[1]{0}', space=sflag, size = 0x4, scoped, tag = 'scoped memory for tpu_custom_call.1']
    #allocation23 [shape = 'u8[512]{0}', space=vmem, size = 0x400, scoped, tag = 'input window, operand 12, single buffered']
    #allocation24 [shape = 'u8[512]{0}', space=vmem, size = 0x400, scoped, tag = 'input window, operand 14, single buffered']
    #allocation25 [shape = 's32[1]{0}', space=sflag, size = 0x4, scoped, tag = 'scoped memory for tpu_custom_call.1']
    #allocation26 [shape = 'u8[512]{0}', space=vmem, size = 0x400, scoped, tag = 'input window, operand 16, single buffered']
    #allocation27 [shape = 'u8[512]{0}', space=vmem, size = 0x400, scoped, tag = 'input window, operand 18, single buffered']
    #allocation28 [shape = 's32[1]{0}', space=sflag, size = 0x4, scoped, tag = 'scoped memory for tpu_custom_call.1']
    #allocation29 [shape = 'u8[16384]{0}', space=vmem, size = 0x4000, scoped, tag = 'input window, operand 21, single buffered']
    #allocation30 [shape = 'u8[8192]{0}', space=vmem, size = 0x2000, scoped, tag = 'output window, operand 0']
    #allocation31 [shape = 'u8[131072]{0}', space=vmem, size = 0x20000, scoped, tag = 'output window, operand 1']
    #allocation32 [shape = 's32[2]{0}', space=sflag, size = 0x8, scoped, tag = 'scoped memory for tpu_custom_call.1']
    #allocation33 [shape = 'u8[1024]{0}', space=vmem, size = 0x400, scoped, tag = 'output window, operand 2']
    %31 = vsyncpa [#allocation7], 0
    %s32 = scalar_lea.sflag [#allocation7], 1
    %33 = vsyncpa %s32, 0
    %34 = vsyncpa [#allocation10], 0
    %s35 = scalar_lea.sflag [#allocation10], 1
    %36 = vsyncpa %s35, 0
    %37 = vsyncpa [#allocation13], 0
    %38 = vsyncpa [#allocation16], 0
    %39 = vsyncpa [#allocation19], 0
    %40 = vsyncpa [#allocation22], 0
    %41 = vsyncpa [#allocation25], 0
    %42 = vsyncpa [#allocation28], 0
    %43 = vsyncpa [#allocation8], 0
    %s44 = scalar_lea.sflag [#allocation8], 1
    %45 = vsyncpa %s44, 0
    %46 = vsyncpa [#allocation32], 0
    %s47 = scalar_lea.sflag [#allocation32], 1
    %48 = vsyncpa %s47, 0
    loop: start=0, step=1, limit=6
    $region2: #{tpu_custom_call.1} parent=1 // loop_pre_header
      _
    $region3: #{tpu_custom_call.1} parent=1 // loop_header
      %s50 = sphi 0, %s54
      %p51 = scmp.ge.s32.totalorder %s50, 6
      %s57 = sphi 0, %s69
      %s58 = sphi 0, %s65
      %s59 = sphi 0, %s57
      %s60 = sphi 0, %s58
      %s61 = sphi 0, %s59
      %s62 = sphi 0, %s60
      %s72 = sphi 0, %s74
      %s75 = sphi 0, %s72
      %s76 = sphi 0, %s75
      %s92 = sphi 0, %s76
      %s100 = sphi 0, %s102
      %s103 = sphi 0, %s100
      %s104 = sphi 0, %s103
      %s120 = sphi 0, %s104
      %s126 = sphi 0, %s128
      %s129 = sphi 0, %s126
      %s130 = sphi 0, %s129
      %s146 = sphi 0, %s130
      %s152 = sphi 0, %s154
      %s155 = sphi 0, %s152
      %s156 = sphi 0, %s155
      %s172 = sphi 0, %s156
      %s180 = sphi 0, %s182
      %s183 = sphi 0, %s180
      %s184 = sphi 0, %s183
      %s200 = sphi 0, %s184
      %s204 = sphi 0, %s204
      %s206 = sphi 0, %s204
      %s207 = sphi 0, %s206
      %s221 = sphi 0, %s207
      %s225 = sphi 0, %s225
      %s227 = sphi 0, %s225
      %s228 = sphi 0, %s227
      %s242 = sphi 0, %s228
      %s246 = sphi 0, %s246
      %s248 = sphi 0, %s246
      %s249 = sphi 0, %s248
      %s263 = sphi 0, %s249
      %s267 = sphi 0, %s267
      %s269 = sphi 0, %s267
      %s270 = sphi 0, %s269
      %s284 = sphi 0, %s270
      %s288 = sphi 0, %s288
      %s290 = sphi 0, %s288
      %s291 = sphi 0, %s290
      %s305 = sphi 0, %s291
      %s309 = sphi 0, %s309
      %s311 = sphi 0, %s309
      %s312 = sphi 0, %s311
      %s326 = sphi 0, %s312
      %s330 = sphi 0, %s330
      %s332 = sphi 0, %s330
      %s333 = sphi 0, %s332
      %s347 = sphi 0, %s333
      %s351 = sphi 0, %s351
      %s353 = sphi 0, %s351
      %s354 = sphi 0, %s353
      %s368 = sphi 0, %s354
      %s372 = sphi 0, %s372
      %s374 = sphi 0, %s372
      %s375 = sphi 0, %s374
      %s389 = sphi 0, %s375
      %s393 = sphi 0, %s393
      %s395 = sphi 0, %s393
      %s396 = sphi 0, %s395
      %s410 = sphi 0, %s396
      %s414 = sphi 0, %s414
      %s416 = sphi 0, %s414
      %s417 = sphi 0, %s416
      %s431 = sphi 0, %s417
      %s435 = sphi 0, %s435
      %s437 = sphi 0, %s435
      %s438 = sphi 0, %s437
      %s452 = sphi 0, %s438
      %s456 = sphi 0, %s456
      %s458 = sphi 0, %s456
      %s459 = sphi 0, %s458
      %s473 = sphi 0, %s459
      %s477 = sphi 0, %s477
      %s479 = sphi 0, %s477
      %s480 = sphi 0, %s479
      %s494 = sphi 0, %s480
      %s498 = sphi 0, %s498
      %s500 = sphi 0, %s498
      %s501 = sphi 0, %s500
      %s515 = sphi 0, %s501
      %s519 = sphi 0, %s519
      %s521 = sphi 0, %s519
      %s522 = sphi 0, %s521
      %s536 = sphi 0, %s522
      %s540 = sphi 0, %s540
      %s542 = sphi 0, %s540
      %s543 = sphi 0, %s542
      %s557 = sphi 0, %s543
      %s561 = sphi 0, %s561
      %s563 = sphi 0, %s561
      %s564 = sphi 0, %s563
      %s578 = sphi 0, %s564
      %s586 = sphi 0, %s588
      %s589 = sphi 0, %s586
      %s590 = sphi 0, %s589
      %s606 = sphi 0, %s590
      %s614 = sphi 0, %s616
      %s617 = sphi 0, %s614
      %s618 = sphi 0, %s617
      %s634 = sphi 0, %s618
      %s640 = sphi 0, %s642
      %s643 = sphi 0, %s640
      %s644 = sphi 0, %s643
      %s660 = sphi 0, %s644
    $region4: #{tpu_custom_call.1} parent=1 // loop_header_branch
      %53 = sbr.rel (%p51) target = $region8
    $region5: #{tpu_custom_call.1} parent=1 // loop_body
      %s55 = ssub.s32 %s50, 1
      %s56 = ssub.s32 %s50, 2
      %s63 = sadd.s32 1, %s58
      %p64 = scmp.ge.s32.totalorder %s63, 2
      %s65 = scalar_select %p64, 0, %s63
      %s66 = sadd.s32 1, %s57
      %s67 = scalar_select %p64, %s66, %s57
      %p68 = scmp.ge.s32.totalorder %s67, 2
      %s69 = scalar_select %p68, 0, %s67
      %s70 = ssub.s32 %s57, %s69
      %p71 = scmp.eq.s32.totalorder %s70, 0
      %s73 = sadd.s32 %s72, 1
      %s74 = scalar_select %p71, %s72, %s73
      %p77 = pneg %p71
      %p78 = scmp.eq.s32.totalorder %s50, 3
      %p79 = por %p77, %p78
      %p80 = scmp.ne.s32.totalorder %s72, %s75
      %p81 = scmp.eq.s32.totalorder %s50, 0
      %p82 = por %p80, %p81
      %p83 = scmp.ne.s32.totalorder %s72, %s75
      %p84 = scmp.eq.s32.totalorder %s55, 3
      %p85 = por %p83, %p84
      %p86 = scmp.ne.s32.totalorder %s75, %s76
      %p87 = scmp.eq.s32.totalorder %s55, 0
      %p88 = por %p86, %p87
      %p89 = scmp.ne.s32.totalorder %s75, %s76
      %p90 = scmp.eq.s32.totalorder %s56, 3
      %p91 = por %p89, %p90
      %p93 = scmp.ne.s32.totalorder %s76, %s92
      %p94 = scmp.eq.s32.totalorder %s56, 0
      %p95 = por %p93, %p94
      %s96 = ssub.s32 %s57, %s69
      %s97 = ssub.s32 %s58, %s65
      %s98 = sor.u32 %s96, %s97
      %p99 = scmp.eq.s32.totalorder %s98, 0
      %s101 = sadd.s32 %s100, 1
      %s102 = scalar_select %p99, %s100, %s101
      %p105 = pneg %p99
      %p106 = scmp.eq.s32.totalorder %s50, 3
      %p107 = por %p105, %p106
      %p108 = scmp.ne.s32.totalorder %s100, %s103
      %p109 = scmp.eq.s32.totalorder %s50, 0
      %p110 = por %p108, %p109
      %p111 = scmp.ne.s32.totalorder %s100, %s103
      %p112 = scmp.eq.s32.totalorder %s55, 3
      %p113 = por %p111, %p112
      %p114 = scmp.ne.s32.totalorder %s103, %s104
      %p115 = scmp.eq.s32.totalorder %s55, 0
      %p116 = por %p114, %p115
      %p117 = scmp.ne.s32.totalorder %s103, %s104
      %p118 = scmp.eq.s32.totalorder %s56, 3
      %p119 = por %p117, %p118
      %p121 = scmp.ne.s32.totalorder %s104, %s120
      %p122 = scmp.eq.s32.totalorder %s56, 0
      %p123 = por %p121, %p122
      %s124 = ssub.s32 %s57, %s69
      %p125 = scmp.eq.s32.totalorder %s124, 0
      %s127 = sadd.s32 %s126, 1
      %s128 = scalar_select %p125, %s126, %s127
      %p131 = pneg %p125
      %p132 = scmp.eq.s32.totalorder %s50, 3
      %p133 = por %p131, %p132
      %p134 = scmp.ne.s32.totalorder %s126, %s129
      %p135 = scmp.eq.s32.totalorder %s50, 0
      %p136 = por %p134, %p135
      %p137 = scmp.ne.s32.totalorder %s126, %s129
      %p138 = scmp.eq.s32.totalorder %s55, 3
      %p139 = por %p137, %p138
      %p140 = scmp.ne.s32.totalorder %s129, %s130
      %p141 = scmp.eq.s32.totalorder %s55, 0
      %p142 = por %p140, %p141
      %p143 = scmp.ne.s32.totalorder %s129, %s130
      %p144 = scmp.eq.s32.totalorder %s56, 3
      %p145 = por %p143, %p144
      %p147 = scmp.ne.s32.totalorder %s130, %s146
      %p148 = scmp.eq.s32.totalorder %s56, 0
      %p149 = por %p147, %p148
      %s150 = ssub.s32 %s57, %s69
      %p151 = scmp.eq.s32.totalorder %s150, 0
      %s153 = sadd.s32 %s152, 1
      %s154 = scalar_select %p151, %s152, %s153
      %p157 = pneg %p151
      %p158 = scmp.eq.s32.totalorder %s50, 3
      %p159 = por %p157, %p158
      %p160 = scmp.ne.s32.totalorder %s152, %s155
      %p161 = scmp.eq.s32.totalorder %s50, 0
      %p162 = por %p160, %p161
      %p163 = scmp.ne.s32.totalorder %s152, %s155
      %p164 = scmp.eq.s32.totalorder %s55, 3
      %p165 = por %p163, %p164
      %p166 = scmp.ne.s32.totalorder %s155, %s156
      %p167 = scmp.eq.s32.totalorder %s55, 0
      %p168 = por %p166, %p167
      %p169 = scmp.ne.s32.totalorder %s155, %s156
      %p170 = scmp.eq.s32.totalorder %s56, 3
      %p171 = por %p169, %p170
      %p173 = scmp.ne.s32.totalorder %s156, %s172
      %p174 = scmp.eq.s32.totalorder %s56, 0
      %p175 = por %p173, %p174
      %s176 = ssub.s32 %s57, %s69
      %s177 = ssub.s32 %s58, %s65
      %s178 = sor.u32 %s176, %s177
      %p179 = scmp.eq.s32.totalorder %s178, 0
      %s181 = sadd.s32 %s180, 1
      %s182 = scalar_select %p179, %s180, %s181
      %p185 = pneg %p179
      %p186 = scmp.eq.s32.totalorder %s50, 3
      %p187 = por %p185, %p186
      %p188 = scmp.ne.s32.totalorder %s180, %s183
      %p189 = scmp.eq.s32.totalorder %s50, 0
      %p190 = por %p188, %p189
      %p191 = scmp.ne.s32.totalorder %s180, %s183
      %p192 = scmp.eq.s32.totalorder %s55, 3
      %p193 = por %p191, %p192
      %p194 = scmp.ne.s32.totalorder %s183, %s184
      %p195 = scmp.eq.s32.totalorder %s55, 0
      %p196 = por %p194, %p195
      %p197 = scmp.ne.s32.totalorder %s183, %s184
      %p198 = scmp.eq.s32.totalorder %s56, 3
      %p199 = por %p197, %p198
      %p201 = scmp.ne.s32.totalorder %s184, %s200
      %p202 = scmp.eq.s32.totalorder %s56, 0
      %p203 = por %p201, %p202
      %s205 = sadd.s32 %s204, 1
      %p208 = scmp.eq.s32.totalorder %s50, 3
      %p209 = scmp.ne.s32.totalorder %s204, %s206
      %p210 = scmp.eq.s32.totalorder %s50, 0
      %p211 = por %p209, %p210
      %p212 = scmp.ne.s32.totalorder %s204, %s206
      %p213 = scmp.eq.s32.totalorder %s55, 3
      %p214 = por %p212, %p213
      %p215 = scmp.ne.s32.totalorder %s206, %s207
      %p216 = scmp.eq.s32.totalorder %s55, 0
      %p217 = por %p215, %p216
      %p218 = scmp.ne.s32.totalorder %s206, %s207
      %p219 = scmp.eq.s32.totalorder %s56, 3
      %p220 = por %p218, %p219
      %p222 = scmp.ne.s32.totalorder %s207, %s221
      %p223 = scmp.eq.s32.totalorder %s56, 0
      %p224 = por %p222, %p223
      %s226 = sadd.s32 %s225, 1
      %p229 = scmp.eq.s32.totalorder %s50, 3
      %p230 = scmp.ne.s32.totalorder %s225, %s227
      %p231 = scmp.eq.s32.totalorder %s50, 0
      %p232 = por %p230, %p231
      %p233 = scmp.ne.s32.totalorder %s225, %s227
      %p234 = scmp.eq.s32.totalorder %s55, 3
      %p235 = por %p233, %p234
      %p236 = scmp.ne.s32.totalorder %s227, %s228
      %p237 = scmp.eq.s32.totalorder %s55, 0
      %p238 = por %p236, %p237
      %p239 = scmp.ne.s32.totalorder %s227, %s228
      %p240 = scmp.eq.s32.totalorder %s56, 3
      %p241 = por %p239, %p240
      %p243 = scmp.ne.s32.totalorder %s228, %s242
      %p244 = scmp.eq.s32.totalorder %s56, 0
      %p245 = por %p243, %p244
      %s247 = sadd.s32 %s246, 1
      %p250 = scmp.eq.s32.totalorder %s50, 3
      %p251 = scmp.ne.s32.totalorder %s246, %s248
      %p252 = scmp.eq.s32.totalorder %s50, 0
      %p253 = por %p251, %p252
      %p254 = scmp.ne.s32.totalorder %s246, %s248
      %p255 = scmp.eq.s32.totalorder %s55, 3
      %p256 = por %p254, %p255
      %p257 = scmp.ne.s32.totalorder %s248, %s249
      %p258 = scmp.eq.s32.totalorder %s55, 0
      %p259 = por %p257, %p258
      %p260 = scmp.ne.s32.totalorder %s248, %s249
      %p261 = scmp.eq.s32.totalorder %s56, 3
      %p262 = por %p260, %p261
      %p264 = scmp.ne.s32.totalorder %s249, %s263
      %p265 = scmp.eq.s32.totalorder %s56, 0
      %p266 = por %p264, %p265
      %s268 = sadd.s32 %s267, 1
      %p271 = scmp.eq.s32.totalorder %s50, 3
      %p272 = scmp.ne.s32.totalorder %s267, %s269
      %p273 = scmp.eq.s32.totalorder %s50, 0
      %p274 = por %p272, %p273
      %p275 = scmp.ne.s32.totalorder %s267, %s269
      %p276 = scmp.eq.s32.totalorder %s55, 3
      %p277 = por %p275, %p276
      %p278 = scmp.ne.s32.totalorder %s269, %s270
      %p279 = scmp.eq.s32.totalorder %s55, 0
      %p280 = por %p278, %p279
      %p281 = scmp.ne.s32.totalorder %s269, %s270
      %p282 = scmp.eq.s32.totalorder %s56, 3
      %p283 = por %p281, %p282
      %p285 = scmp.ne.s32.totalorder %s270, %s284
      %p286 = scmp.eq.s32.totalorder %s56, 0
      %p287 = por %p285, %p286
      %s289 = sadd.s32 %s288, 1
      %p292 = scmp.eq.s32.totalorder %s50, 3
      %p293 = scmp.ne.s32.totalorder %s288, %s290
      %p294 = scmp.eq.s32.totalorder %s50, 0
      %p295 = por %p293, %p294
      %p296 = scmp.ne.s32.totalorder %s288, %s290
      %p297 = scmp.eq.s32.totalorder %s55, 3
      %p298 = por %p296, %p297
      %p299 = scmp.ne.s32.totalorder %s290, %s291
      %p300 = scmp.eq.s32.totalorder %s55, 0
      %p301 = por %p299, %p300
      %p302 = scmp.ne.s32.totalorder %s290, %s291
      %p303 = scmp.eq.s32.totalorder %s56, 3
      %p304 = por %p302, %p303
      %p306 = scmp.ne.s32.totalorder %s291, %s305
      %p307 = scmp.eq.s32.totalorder %s56, 0
      %p308 = por %p306, %p307
      %s310 = sadd.s32 %s309, 1
      %p313 = scmp.eq.s32.totalorder %s50, 3
      %p314 = scmp.ne.s32.totalorder %s309, %s311
      %p315 = scmp.eq.s32.totalorder %s50, 0
      %p316 = por %p314, %p315
      %p317 = scmp.ne.s32.totalorder %s309, %s311
      %p318 = scmp.eq.s32.totalorder %s55, 3
      %p319 = por %p317, %p318
      %p320 = scmp.ne.s32.totalorder %s311, %s312
      %p321 = scmp.eq.s32.totalorder %s55, 0
      %p322 = por %p320, %p321
      %p323 = scmp.ne.s32.totalorder %s311, %s312
      %p324 = scmp.eq.s32.totalorder %s56, 3
      %p325 = por %p323, %p324
      %p327 = scmp.ne.s32.totalorder %s312, %s326
      %p328 = scmp.eq.s32.totalorder %s56, 0
      %p329 = por %p327, %p328
      %s331 = sadd.s32 %s330, 1
      %p334 = scmp.eq.s32.totalorder %s50, 3
      %p335 = scmp.ne.s32.totalorder %s330, %s332
      %p336 = scmp.eq.s32.totalorder %s50, 0
      %p337 = por %p335, %p336
      %p338 = scmp.ne.s32.totalorder %s330, %s332
      %p339 = scmp.eq.s32.totalorder %s55, 3
      %p340 = por %p338, %p339
      %p341 = scmp.ne.s32.totalorder %s332, %s333
      %p342 = scmp.eq.s32.totalorder %s55, 0
      %p343 = por %p341, %p342
      %p344 = scmp.ne.s32.totalorder %s332, %s333
      %p345 = scmp.eq.s32.totalorder %s56, 3
      %p346 = por %p344, %p345
      %p348 = scmp.ne.s32.totalorder %s333, %s347
      %p349 = scmp.eq.s32.totalorder %s56, 0
      %p350 = por %p348, %p349
      %s352 = sadd.s32 %s351, 1
      %p355 = scmp.eq.s32.totalorder %s50, 3
      %p356 = scmp.ne.s32.totalorder %s351, %s353
      %p357 = scmp.eq.s32.totalorder %s50, 0
      %p358 = por %p356, %p357
      %p359 = scmp.ne.s32.totalorder %s351, %s353
      %p360 = scmp.eq.s32.totalorder %s55, 3
      %p361 = por %p359, %p360
      %p362 = scmp.ne.s32.totalorder %s353, %s354
      %p363 = scmp.eq.s32.totalorder %s55, 0
      %p364 = por %p362, %p363
      %p365 = scmp.ne.s32.totalorder %s353, %s354
      %p366 = scmp.eq.s32.totalorder %s56, 3
      %p367 = por %p365, %p366
      %p369 = scmp.ne.s32.totalorder %s354, %s368
      %p370 = scmp.eq.s32.totalorder %s56, 0
      %p371 = por %p369, %p370
      %s373 = sadd.s32 %s372, 1
      %p376 = scmp.eq.s32.totalorder %s50, 3
      %p377 = scmp.ne.s32.totalorder %s372, %s374
      %p378 = scmp.eq.s32.totalorder %s50, 0
      %p379 = por %p377, %p378
      %p380 = scmp.ne.s32.totalorder %s372, %s374
      %p381 = scmp.eq.s32.totalorder %s55, 3
      %p382 = por %p380, %p381
      %p383 = scmp.ne.s32.totalorder %s374, %s375
      %p384 = scmp.eq.s32.totalorder %s55, 0
      %p385 = por %p383, %p384
      %p386 = scmp.ne.s32.totalorder %s374, %s375
      %p387 = scmp.eq.s32.totalorder %s56, 3
      %p388 = por %p386, %p387
      %p390 = scmp.ne.s32.totalorder %s375, %s389
      %p391 = scmp.eq.s32.totalorder %s56, 0
      %p392 = por %p390, %p391
      %s394 = sadd.s32 %s393, 1
      %p397 = scmp.eq.s32.totalorder %s50, 3
      %p398 = scmp.ne.s32.totalorder %s393, %s395
      %p399 = scmp.eq.s32.totalorder %s50, 0
      %p400 = por %p398, %p399
      %p401 = scmp.ne.s32.totalorder %s393, %s395
      %p402 = scmp.eq.s32.totalorder %s55, 3
      %p403 = por %p401, %p402
      %p404 = scmp.ne.s32.totalorder %s395, %s396
      %p405 = scmp.eq.s32.totalorder %s55, 0
      %p406 = por %p404, %p405
      %p407 = scmp.ne.s32.totalorder %s395, %s396
      %p408 = scmp.eq.s32.totalorder %s56, 3
      %p409 = por %p407, %p408
      %p411 = scmp.ne.s32.totalorder %s396, %s410
      %p412 = scmp.eq.s32.totalorder %s56, 0
      %p413 = por %p411, %p412
      %s415 = sadd.s32 %s414, 1
      %p418 = scmp.eq.s32.totalorder %s50, 3
      %p419 = scmp.ne.s32.totalorder %s414, %s416
      %p420 = scmp.eq.s32.totalorder %s50, 0
      %p421 = por %p419, %p420
      %p422 = scmp.ne.s32.totalorder %s414, %s416
      %p423 = scmp.eq.s32.totalorder %s55, 3
      %p424 = por %p422, %p423
      %p425 = scmp.ne.s32.totalorder %s416, %s417
      %p426 = scmp.eq.s32.totalorder %s55, 0
      %p427 = por %p425, %p426
      %p428 = scmp.ne.s32.totalorder %s416, %s417
      %p429 = scmp.eq.s32.totalorder %s56, 3
      %p430 = por %p428, %p429
      %p432 = scmp.ne.s32.totalorder %s417, %s431
      %p433 = scmp.eq.s32.totalorder %s56, 0
      %p434 = por %p432, %p433
      %s436 = sadd.s32 %s435, 1
      %p439 = scmp.eq.s32.totalorder %s50, 3
      %p440 = scmp.ne.s32.totalorder %s435, %s437
      %p441 = scmp.eq.s32.totalorder %s50, 0
      %p442 = por %p440, %p441
      %p443 = scmp.ne.s32.totalorder %s435, %s437
      %p444 = scmp.eq.s32.totalorder %s55, 3
      %p445 = por %p443, %p444
      %p446 = scmp.ne.s32.totalorder %s437, %s438
      %p447 = scmp.eq.s32.totalorder %s55, 0
      %p448 = por %p446, %p447
      %p449 = scmp.ne.s32.totalorder %s437, %s438
      %p450 = scmp.eq.s32.totalorder %s56, 3
      %p451 = por %p449, %p450
      %p453 = scmp.ne.s32.totalorder %s438, %s452
      %p454 = scmp.eq.s32.totalorder %s56, 0
      %p455 = por %p453, %p454
      %s457 = sadd.s32 %s456, 1
      %p460 = scmp.eq.s32.totalorder %s50, 3
      %p461 = scmp.ne.s32.totalorder %s456, %s458
      %p462 = scmp.eq.s32.totalorder %s50, 0
      %p463 = por %p461, %p462
      %p464 = scmp.ne.s32.totalorder %s456, %s458
      %p465 = scmp.eq.s32.totalorder %s55, 3
      %p466 = por %p464, %p465
      %p467 = scmp.ne.s32.totalorder %s458, %s459
      %p468 = scmp.eq.s32.totalorder %s55, 0
      %p469 = por %p467, %p468
      %p470 = scmp.ne.s32.totalorder %s458, %s459
      %p471 = scmp.eq.s32.totalorder %s56, 3
      %p472 = por %p470, %p471
      %p474 = scmp.ne.s32.totalorder %s459, %s473
      %p475 = scmp.eq.s32.totalorder %s56, 0
      %p476 = por %p474, %p475
      %s478 = sadd.s32 %s477, 1
      %p481 = scmp.eq.s32.totalorder %s50, 3
      %p482 = scmp.ne.s32.totalorder %s477, %s479
      %p483 = scmp.eq.s32.totalorder %s50, 0
      %p484 = por %p482, %p483
      %p485 = scmp.ne.s32.totalorder %s477, %s479
      %p486 = scmp.eq.s32.totalorder %s55, 3
      %p487 = por %p485, %p486
      %p488 = scmp.ne.s32.totalorder %s479, %s480
      %p489 = scmp.eq.s32.totalorder %s55, 0
      %p490 = por %p488, %p489
      %p491 = scmp.ne.s32.totalorder %s479, %s480
      %p492 = scmp.eq.s32.totalorder %s56, 3
      %p493 = por %p491, %p492
      %p495 = scmp.ne.s32.totalorder %s480, %s494
      %p496 = scmp.eq.s32.totalorder %s56, 0
      %p497 = por %p495, %p496
      %s499 = sadd.s32 %s498, 1
      %p502 = scmp.eq.s32.totalorder %s50, 3
      %p503 = scmp.ne.s32.totalorder %s498, %s500
      %p504 = scmp.eq.s32.totalorder %s50, 0
      %p505 = por %p503, %p504
      %p506 = scmp.ne.s32.totalorder %s498, %s500
      %p507 = scmp.eq.s32.totalorder %s55, 3
      %p508 = por %p506, %p507
      %p509 = scmp.ne.s32.totalorder %s500, %s501
      %p510 = scmp.eq.s32.totalorder %s55, 0
      %p511 = por %p509, %p510
      %p512 = scmp.ne.s32.totalorder %s500, %s501
      %p513 = scmp.eq.s32.totalorder %s56, 3
      %p514 = por %p512, %p513
      %p516 = scmp.ne.s32.totalorder %s501, %s515
      %p517 = scmp.eq.s32.totalorder %s56, 0
      %p518 = por %p516, %p517
      %s520 = sadd.s32 %s519, 1
      %p523 = scmp.eq.s32.totalorder %s50, 3
      %p524 = scmp.ne.s32.totalorder %s519, %s521
      %p525 = scmp.eq.s32.totalorder %s50, 0
      %p526 = por %p524, %p525
      %p527 = scmp.ne.s32.totalorder %s519, %s521
      %p528 = scmp.eq.s32.totalorder %s55, 3
      %p529 = por %p527, %p528
      %p530 = scmp.ne.s32.totalorder %s521, %s522
      %p531 = scmp.eq.s32.totalorder %s55, 0
      %p532 = por %p530, %p531
      %p533 = scmp.ne.s32.totalorder %s521, %s522
      %p534 = scmp.eq.s32.totalorder %s56, 3
      %p535 = por %p533, %p534
      %p537 = scmp.ne.s32.totalorder %s522, %s536
      %p538 = scmp.eq.s32.totalorder %s56, 0
      %p539 = por %p537, %p538
      %s541 = sadd.s32 %s540, 1
      %p544 = scmp.eq.s32.totalorder %s50, 3
      %p545 = scmp.ne.s32.totalorder %s540, %s542
      %p546 = scmp.eq.s32.totalorder %s50, 0
      %p547 = por %p545, %p546
      %p548 = scmp.ne.s32.totalorder %s540, %s542
      %p549 = scmp.eq.s32.totalorder %s55, 3
      %p550 = por %p548, %p549
      %p551 = scmp.ne.s32.totalorder %s542, %s543
      %p552 = scmp.eq.s32.totalorder %s55, 0
      %p553 = por %p551, %p552
      %p554 = scmp.ne.s32.totalorder %s542, %s543
      %p555 = scmp.eq.s32.totalorder %s56, 3
      %p556 = por %p554, %p555
      %p558 = scmp.ne.s32.totalorder %s543, %s557
      %p559 = scmp.eq.s32.totalorder %s56, 0
      %p560 = por %p558, %p559
      %s562 = sadd.s32 %s561, 1
      %p565 = scmp.eq.s32.totalorder %s50, 3
      %p566 = scmp.ne.s32.totalorder %s561, %s563
      %p567 = scmp.eq.s32.totalorder %s50, 0
      %p568 = por %p566, %p567
      %p569 = scmp.ne.s32.totalorder %s561, %s563
      %p570 = scmp.eq.s32.totalorder %s55, 3
      %p571 = por %p569, %p570
      %p572 = scmp.ne.s32.totalorder %s563, %s564
      %p573 = scmp.eq.s32.totalorder %s55, 0
      %p574 = por %p572, %p573
      %p575 = scmp.ne.s32.totalorder %s563, %s564
      %p576 = scmp.eq.s32.totalorder %s56, 3
      %p577 = por %p575, %p576
      %p579 = scmp.ne.s32.totalorder %s564, %s578
      %p580 = scmp.eq.s32.totalorder %s56, 0
      %p581 = por %p579, %p580
      %s582 = ssub.s32 %s57, %s69
      %s583 = ssub.s32 %s58, %s65
      %s584 = sor.u32 %s582, %s583
      %p585 = scmp.eq.s32.totalorder %s584, 0
      %s587 = sadd.s32 %s586, 1
      %s588 = scalar_select %p585, %s586, %s587
      %p591 = pneg %p585
      %p592 = scmp.eq.s32.totalorder %s50, 3
      %p593 = por %p591, %p592
      %p594 = scmp.ne.s32.totalorder %s586, %s589
      %p595 = scmp.eq.s32.totalorder %s50, 0
      %p596 = por %p594, %p595
      %p597 = scmp.ne.s32.totalorder %s586, %s589
      %p598 = scmp.eq.s32.totalorder %s55, 3
      %p599 = por %p597, %p598
      %p600 = scmp.ne.s32.totalorder %s589, %s590
      %p601 = scmp.eq.s32.totalorder %s55, 0
      %p602 = por %p600, %p601
      %p603 = scmp.ne.s32.totalorder %s589, %s590
      %p604 = scmp.eq.s32.totalorder %s56, 3
      %p605 = por %p603, %p604
      %p607 = scmp.ne.s32.totalorder %s590, %s606
      %p608 = scmp.eq.s32.totalorder %s56, 0
      %p609 = por %p607, %p608
      %s610 = ssub.s32 %s57, %s69
      %s611 = ssub.s32 %s58, %s65
      %s612 = sor.u32 %s610, %s611
      %p613 = scmp.eq.s32.totalorder %s612, 0
      %s615 = sadd.s32 %s614, 1
      %s616 = scalar_select %p613, %s614, %s615
      %p619 = pneg %p613
      %p620 = scmp.eq.s32.totalorder %s50, 3
      %p621 = por %p619, %p620
      %p622 = scmp.ne.s32.totalorder %s614, %s617
      %p623 = scmp.eq.s32.totalorder %s50, 0
      %p624 = por %p622, %p623
      %p625 = scmp.ne.s32.totalorder %s614, %s617
      %p626 = scmp.eq.s32.totalorder %s55, 3
      %p627 = por %p625, %p626
      %p628 = scmp.ne.s32.totalorder %s617, %s618
      %p629 = scmp.eq.s32.totalorder %s55, 0
      %p630 = por %p628, %p629
      %p631 = scmp.ne.s32.totalorder %s617, %s618
      %p632 = scmp.eq.s32.totalorder %s56, 3
      %p633 = por %p631, %p632
      %p635 = scmp.ne.s32.totalorder %s618, %s634
      %p636 = scmp.eq.s32.totalorder %s56, 0
      %p637 = por %p635, %p636
      %s638 = ssub.s32 %s57, %s69
      %p639 = scmp.eq.s32.totalorder %s638, 0
      %s641 = sadd.s32 %s640, 1
      %s642 = scalar_select %p639, %s640, %s641
      %p645 = pneg %p639
      %p646 = scmp.eq.s32.totalorder %s50, 3
      %p647 = por %p645, %p646
      %p648 = scmp.ne.s32.totalorder %s640, %s643
      %p649 = scmp.eq.s32.totalorder %s50, 0
      %p650 = por %p648, %p649
      %p651 = scmp.ne.s32.totalorder %s640, %s643
      %p652 = scmp.eq.s32.totalorder %s55, 3
      %p653 = por %p651, %p652
      %p654 = scmp.ne.s32.totalorder %s643, %s644
      %p655 = scmp.eq.s32.totalorder %s55, 0
      %p656 = por %p654, %p655
      %p657 = scmp.ne.s32.totalorder %s643, %s644
      %p658 = scmp.eq.s32.totalorder %s56, 3
      %p659 = por %p657, %p658
      %p661 = scmp.ne.s32.totalorder %s644, %s660
      %p662 = scmp.eq.s32.totalorder %s56, 0
      %p663 = por %p661, %p662
      %p664 = scmp.le.s32.totalorder 1, %s50
      %p665 = scmp.lt.s32.totalorder %s50, 5
      %p666 = pnand %p664, %p665
      %p667 = pneg %p666
      // Predicated region
      $region9: #{tpu_custom_call.1} parent=5 // pred_check
        _
      $region10: #{tpu_custom_call.1} parent=5 // pred_check_branch
        %669 = sbr.rel (%p666) target = $region12
      $region11: #{tpu_custom_call.1} parent=5 // pred_region
        %s670 = ssub.s32 %s50, 1
        // Predicated region
        $region13: #{tpu_custom_call.1} parent=11 // pred_check
          %p671 = pneg %p217
        $region14: #{tpu_custom_call.1} parent=11 // pred_check_branch
          %673 = sbr.rel (%p671) target = $region16
        $region15: #{tpu_custom_call.1} parent=11 // pred_region
          %s675 = ssub.s32 256, 256
          %676 = vsyncadd [#allocation13], %s675
          %s677 = sshll.u32 [#allocation12], 4
          %s678 = int_to_ptr.vmem [resolvable:$true] %s677
          %683 = dma.hbm_to_vmem [thread:$0]  %s5, 256, %s678, [#allocation13], 64, 64, 4
        $region16: #{tpu_custom_call.1} parent=11 // pred_fallthru
          _
        // Predicated region
        $region17: #{tpu_custom_call.1} parent=11 // pred_check
          %p684 = pneg %p238
        $region18: #{tpu_custom_call.1} parent=11 // pred_check_branch
          %686 = sbr.rel (%p684) target = $region20
        $region19: #{tpu_custom_call.1} parent=11 // pred_region
          %s688 = ssub.s32 16, 16
          %689 = vsyncadd [#allocation13], %s688
          %s691 = sshll.u32 [#allocation14], 4
          %s692 = int_to_ptr.vmem [resolvable:$true] %s691
          %694 = dma.hbm_to_vmem [thread:$0]  %s6, 16, %s692, [#allocation13]
        $region20: #{tpu_custom_call.1} parent=11 // pred_fallthru
          _
        // Predicated region
        $region21: #{tpu_custom_call.1} parent=11 // pred_check
          %p695 = pneg %p259
        $region22: #{tpu_custom_call.1} parent=11 // pred_check_branch
          %697 = sbr.rel (%p695) target = $region24
        $region23: #{tpu_custom_call.1} parent=11 // pred_region
          %s699 = ssub.s32 128, 128
          %700 = vsyncadd [#allocation16], %s699
          %s701 = sshll.u32 [#allocation15], 4
          %s702 = int_to_ptr.vmem [resolvable:$true] %s701
          %707 = dma.hbm_to_vmem [thread:$0]  %s7, 128, %s702, [#allocation16], 64, 64, 4
        $region24: #{tpu_custom_call.1} parent=11 // pred_fallthru
          _
        // Predicated region
        $region25: #{tpu_custom_call.1} parent=11 // pred_check
          %p708 = pneg %p280
        $region26: #{tpu_custom_call.1} parent=11 // pred_check_branch
          %710 = sbr.rel (%p708) target = $region28
        $region27: #{tpu_custom_call.1} parent=11 // pred_region
          %s712 = ssub.s32 16, 16
          %713 = vsyncadd [#allocation16], %s712
          %s715 = sshll.u32 [#allocation17], 4
          %s716 = int_to_ptr.vmem [resolvable:$true] %s715
          %718 = dma.hbm_to_vmem [thread:$0]  %s8, 16, %s716, [#allocation16]
        $region28: #{tpu_custom_call.1} parent=11 // pred_fallthru
          _
        // Predicated region
        $region29: #{tpu_custom_call.1} parent=11 // pred_check
          %p719 = pneg %p301
        $region30: #{tpu_custom_call.1} parent=11 // pred_check_branch
          %721 = sbr.rel (%p719) target = $region32
        $region31: #{tpu_custom_call.1} parent=11 // pred_region
          %s723 = ssub.s32 256, 256
          %724 = vsyncadd [#allocation19], %s723
          %s725 = sshll.u32 [#allocation18], 4
          %s726 = int_to_ptr.vmem [resolvable:$true] %s725
          %731 = dma.hbm_to_vmem [thread:$0]  %s9, 256, %s726, [#allocation19], 128, 128, 8
        $region32: #{tpu_custom_call.1} parent=11 // pred_fallthru
          _
        // Predicated region
        $region33: #{tpu_custom_call.1} parent=11 // pred_check
          %p732 = pneg %p322
        $region34: #{tpu_custom_call.1} parent=11 // pred_check_branch
          %734 = sbr.rel (%p732) target = $region36
        $region35: #{tpu_custom_call.1} parent=11 // pred_region
          %s736 = ssub.s32 16, 16
          %737 = vsyncadd [#allocation19], %s736
          %s739 = sshll.u32 [#allocation20], 4
          %s740 = int_to_ptr.vmem [resolvable:$true] %s739
          %742 = dma.hbm_to_vmem [thread:$0]  %s10, 16, %s740, [#allocation19]
        $region36: #{tpu_custom_call.1} parent=11 // pred_fallthru
          _
        // Predicated region
        $region37: #{tpu_custom_call.1} parent=11 // pred_check
          %p743 = pneg %p343
        $region38: #{tpu_custom_call.1} parent=11 // pred_check_branch
          %745 = sbr.rel (%p743) target = $region40
        $region39: #{tpu_custom_call.1} parent=11 // pred_region
          %s747 = ssub.s32 256, 256
          %748 = vsyncadd [#allocation22], %s747
          %s749 = sshll.u32 [#allocation21], 4
          %s750 = int_to_ptr.vmem [resolvable:$true] %s749
          %755 = dma.hbm_to_vmem [thread:$0]  %s11, 256, %s750, [#allocation22], 128, 128, 8
        $region40: #{tpu_custom_call.1} parent=11 // pred_fallthru
          _
        // Predicated region
        $region41: #{tpu_custom_call.1} parent=11 // pred_check
          %p756 = pneg %p364
        $region42: #{tpu_custom_call.1} parent=11 // pred_check_branch
          %758 = sbr.rel (%p756) target = $region44
        $region43: #{tpu_custom_call.1} parent=11 // pred_region
          %s760 = ssub.s32 16, 16
          %761 = vsyncadd [#allocation22], %s760
          %s763 = sshll.u32 [#allocation23], 4
          %s764 = int_to_ptr.vmem [resolvable:$true] %s763
          %766 = dma.hbm_to_vmem [thread:$0]  %s12, 16, %s764, [#allocation22]
        $region44: #{tpu_custom_call.1} parent=11 // pred_fallthru
          _
        // Predicated region
        $region45: #{tpu_custom_call.1} parent=11 // pred_check
          %p767 = pneg %p385
        $region46: #{tpu_custom_call.1} parent=11 // pred_check_branch
          %769 = sbr.rel (%p767) target = $region48
        $region47: #{tpu_custom_call.1} parent=11 // pred_region
          _
        $region48: #{tpu_custom_call.1} parent=11 // pred_fallthru
          _
        // Predicated region
        $region49: #{tpu_custom_call.1} parent=11 // pred_check
          %p770 = pneg %p406
        $region50: #{tpu_custom_call.1} parent=11 // pred_check_branch
          %772 = sbr.rel (%p770) target = $region52
        $region51: #{tpu_custom_call.1} parent=11 // pred_region
          %s774 = ssub.s32 16, 16
          %775 = vsyncadd [#allocation25], %s774
          %s777 = sshll.u32 [#allocation24], 4
          %s778 = int_to_ptr.vmem [resolvable:$true] %s777
          %780 = dma.hbm_to_vmem [thread:$0]  %s14, 16, %s778, [#allocation25]
        $region52: #{tpu_custom_call.1} parent=11 // pred_fallthru
          _
        // Predicated region
        $region53: #{tpu_custom_call.1} parent=11 // pred_check
          %p781 = pneg %p427
        $region54: #{tpu_custom_call.1} parent=11 // pred_check_branch
          %783 = sbr.rel (%p781) target = $region56
        $region55: #{tpu_custom_call.1} parent=11 // pred_region
          _
        $region56: #{tpu_custom_call.1} parent=11 // pred_fallthru
          _
        // Predicated region
        $region57: #{tpu_custom_call.1} parent=11 // pred_check
          %p784 = pneg %p448
        $region58: #{tpu_custom_call.1} parent=11 // pred_check_branch
          %786 = sbr.rel (%p784) target = $region60
        $region59: #{tpu_custom_call.1} parent=11 // pred_region
          %s788 = ssub.s32 16, 16
          %789 = vsyncadd [#allocation25], %s788
          %s791 = sshll.u32 [#allocation26], 4
          %s792 = int_to_ptr.vmem [resolvable:$true] %s791
          %794 = dma.hbm_to_vmem [thread:$0]  %s16, 16, %s792, [#allocation25]
        $region60: #{tpu_custom_call.1} parent=11 // pred_fallthru
          _
        // Predicated region
        $region61: #{tpu_custom_call.1} parent=11 // pred_check
          %p795 = pneg %p469
        $region62: #{tpu_custom_call.1} parent=11 // pred_check_branch
          %797 = sbr.rel (%p795) target = $region64
        $region63: #{tpu_custom_call.1} parent=11 // pred_region
          _
        $region64: #{tpu_custom_call.1} parent=11 // pred_fallthru
          _
        // Predicated region
        $region65: #{tpu_custom_call.1} parent=11 // pred_check
          %p798 = pneg %p490
        $region66: #{tpu_custom_call.1} parent=11 // pred_check_branch
          %800 = sbr.rel (%p798) target = $region68
        $region67: #{tpu_custom_call.1} parent=11 // pred_region
          %s802 = ssub.s32 16, 16
          %803 = vsyncadd [#allocation28], %s802
          %s805 = sshll.u32 [#allocation27], 4
          %s806 = int_to_ptr.vmem [resolvable:$true] %s805
          %808 = dma.hbm_to_vmem [thread:$0]  %s18, 16, %s806, [#allocation28]
        $region68: #{tpu_custom_call.1} parent=11 // pred_fallthru
          _
        // Predicated region
        $region69: #{tpu_custom_call.1} parent=11 // pred_check
          %p809 = pneg %p511
        $region70: #{tpu_custom_call.1} parent=11 // pred_check_branch
          %811 = sbr.rel (%p809) target = $region72
        $region71: #{tpu_custom_call.1} parent=11 // pred_region
          _
        $region72: #{tpu_custom_call.1} parent=11 // pred_fallthru
          _
        // Predicated region
        $region73: #{tpu_custom_call.1} parent=11 // pred_check
          %p812 = pneg %p532
        $region74: #{tpu_custom_call.1} parent=11 // pred_check_branch
          %814 = sbr.rel (%p812) target = $region76
        $region75: #{tpu_custom_call.1} parent=11 // pred_region
          _
        $region76: #{tpu_custom_call.1} parent=11 // pred_fallthru
          _
        // Predicated region
        $region77: #{tpu_custom_call.1} parent=11 // pred_check
          %p815 = pneg %p553
        $region78: #{tpu_custom_call.1} parent=11 // pred_check_branch
          %817 = sbr.rel (%p815) target = $region80
        $region79: #{tpu_custom_call.1} parent=11 // pred_region
          %s819 = ssub.s32 512, 512
          %820 = vsyncadd [#allocation28], %s819
          %s821 = sshll.u32 [#allocation29], 4
          %s822 = int_to_ptr.vmem [resolvable:$true] %s821
          %827 = dma.hbm_to_vmem [thread:$0]  %s21, 512, %s822, [#allocation28], 128, 128, 8
        $region80: #{tpu_custom_call.1} parent=11 // pred_fallthru
          _
        // Predicated region
        $region81: #{tpu_custom_call.1} parent=11 // pred_check
          %p828 = pneg %p574
        $region82: #{tpu_custom_call.1} parent=11 // pred_check_branch
          %830 = sbr.rel (%p828) target = $region84
        $region83: #{tpu_custom_call.1} parent=11 // pred_region
          _
        $region84: #{tpu_custom_call.1} parent=11 // pred_fallthru
          _
      $region12: #{tpu_custom_call.1} parent=5 // pred_fallthru
        _
      %p831 = scmp.lt.s32.totalorder %s50, 4
      // Predicated region
      $region85: #{tpu_custom_call.1} parent=5 // pred_check
        %p832 = pneg %p831
      $region86: #{tpu_custom_call.1} parent=5 // pred_check_branch
        %834 = sbr.rel (%p832) target = $region88
      $region87: #{tpu_custom_call.1} parent=5 // pred_region
        // Predicated region
        $region89: #{tpu_custom_call.1} parent=87 // pred_check
          %p835 = pneg %p82
        $region90: #{tpu_custom_call.1} parent=87 // pred_check_branch
          %837 = sbr.rel (%p835) target = $region92
        $region91: #{tpu_custom_call.1} parent=87 // pred_region
          %s838 = sand.u32 %s72, 1
          %s839 = scalar_lea.sflag [#allocation7], %s838
          %s840 = sand.u32 %s72, 1
          %s841 = smul.addr %s840, 8
          %s842 = scalar_lea.vmem [#allocation6], %s841
          %s844 = ssub.s32 128, 128
          %845 = vsyncadd %s839, %s844
          %s846 = smul.addr %s57, 2
          %s847 = smul.addr %s846, 64
          %s848 = scalar_lea.hbm %s0, %s847
          %s849 = sshll.u32 %s842, 4
          %s850 = int_to_ptr.vmem [resolvable:$true] %s849
          %855 = dma.hbm_to_vmem [thread:$0]  %s848, 128, %s850, %s839, 64, 64, 4
        $region92: #{tpu_custom_call.1} parent=87 // pred_fallthru
          _
        // Predicated region
        $region93: #{tpu_custom_call.1} parent=87 // pred_check
          %p856 = pneg %p110
        $region94: #{tpu_custom_call.1} parent=87 // pred_check_branch
          %858 = sbr.rel (%p856) target = $region96
        $region95: #{tpu_custom_call.1} parent=87 // pred_region
          %s859 = smul.u32 8, %s58
          %p860 = scmp.lt.s32.totalorder %s57, 1
          %s861 = scalar_select %p860, %s57, 1
          %p862 = scmp.lt.s32.totalorder %s859, 15
          %s863 = scalar_select %p862, %s859, 15
          %s864 = smul.addr %s863, 2
          %s865 = smul.addr %s861, 32
          %s866 = sadd.s32 %s864, %s865
          %s867 = smul.addr %s866, 4
          %s868 = scalar_lea.vmem %s1, %s867
          %s869 = smul.u32 8, %s58
        $region96: #{tpu_custom_call.1} parent=87 // pred_fallthru
          _
        // Predicated region
        $region97: #{tpu_custom_call.1} parent=87 // pred_check
          %p870 = pneg %p136
        $region98: #{tpu_custom_call.1} parent=87 // pred_check_branch
          %872 = sbr.rel (%p870) target = $region100
        $region99: #{tpu_custom_call.1} parent=87 // pred_region
          %s873 = sand.u32 %s50, 1
          %s874 = scalar_lea.sflag [#allocation10], %s873
          %s875 = sand.u32 %s126, 1
          %s876 = scalar_lea.vmem [#allocation9], %s875
          %s878 = ssub.s32 16, 16
          %879 = vsyncadd %s874, %s878
          %s880 = smul.addr %s57, 16
          %s881 = scalar_lea.hbm %s2, %s880
          %s883 = sshll.u32 %s876, 4
          %s884 = int_to_ptr.vmem [resolvable:$true] %s883
          %886 = dma.hbm_to_vmem [thread:$0]  %s881, 16, %s884, %s874
        $region100: #{tpu_custom_call.1} parent=87 // pred_fallthru
          _
        // Predicated region
        $region101: #{tpu_custom_call.1} parent=87 // pred_check
          %p887 = pneg %p162
        $region102: #{tpu_custom_call.1} parent=87 // pred_check_branch
          %889 = sbr.rel (%p887) target = $region104
        $region103: #{tpu_custom_call.1} parent=87 // pred_region
          %s890 = sand.u32 %s50, 1
          %s891 = scalar_lea.sflag [#allocation10], %s890
          %s892 = sand.u32 %s152, 1
          %s893 = scalar_lea.vmem [#allocation11], %s892
          %s895 = ssub.s32 16, 16
          %896 = vsyncadd %s891, %s895
          %s897 = smul.addr %s57, 16
          %s898 = scalar_lea.hbm %s3, %s897
          %s900 = sshll.u32 %s893, 4
          %s901 = int_to_ptr.vmem [resolvable:$true] %s900
          %903 = dma.hbm_to_vmem [thread:$0]  %s898, 16, %s901, %s891
        $region104: #{tpu_custom_call.1} parent=87 // pred_fallthru
          _
        // Predicated region
        $region105: #{tpu_custom_call.1} parent=87 // pred_check
          %p904 = pneg %p190
        $region106: #{tpu_custom_call.1} parent=87 // pred_check_branch
          %906 = sbr.rel (%p904) target = $region108
        $region107: #{tpu_custom_call.1} parent=87 // pred_region
          %p907 = scmp.lt.s32.totalorder %s57, 1
          %s908 = scalar_select %p907, %s57, 1
          %p909 = scmp.lt.s32.totalorder %s58, 1
          %s910 = scalar_select %p909, %s58, 1
          %s911 = smul.addr %s908, 2
          %s912 = sadd.s32 %s910, %s911
          %s913 = smul.addr %s912, 8
          %s914 = scalar_lea.vmem %s4, %s913
        $region108: #{tpu_custom_call.1} parent=87 // pred_fallthru
          _
      $region88: #{tpu_custom_call.1} parent=5 // pred_fallthru
        _
      %p915 = scmp.le.s32.totalorder 1, %s50
      %p916 = scmp.lt.s32.totalorder %s50, 5
      %p917 = pnand %p915, %p916
      %p918 = pneg %p917
      // Predicated region
      $region109: #{tpu_custom_call.1} parent=5 // pred_check
        _
      $region110: #{tpu_custom_call.1} parent=5 // pred_check_branch
        %920 = sbr.rel (%p917) target = $region112
      $region111: #{tpu_custom_call.1} parent=5 // pred_region
        %s921 = ssub.s32 %s50, 1
        %s922 = sand.u32 %s75, 1
        %s923 = scalar_lea.sflag [#allocation7], %s922
        %s924 = sand.u32 %s75, 1
        %s925 = smul.addr %s924, 8
        %s926 = scalar_lea.vmem [#allocation6], %s925
        // Predicated region
        $region113: #{tpu_custom_call.1} parent=111 // pred_check
          %p927 = pneg %p88
        $region114: #{tpu_custom_call.1} parent=111 // pred_check_branch
          %929 = sbr.rel (%p927) target = $region116
        $region115: #{tpu_custom_call.1} parent=111 // pred_region
          %930 = dma.done %s923, 128
        $region116: #{tpu_custom_call.1} parent=111 // pred_fallthru
          _
        %s931 = sand.u32 %s55, 1
        %s932 = scalar_lea.sflag [#allocation10], %s931
        %s933 = sand.u32 %s129, 1
        %s934 = scalar_lea.vmem [#allocation9], %s933
        // Predicated region
        $region117: #{tpu_custom_call.1} parent=111 // pred_check
          %p935 = pneg %p142
        $region118: #{tpu_custom_call.1} parent=111 // pred_check_branch
          %937 = sbr.rel (%p935) target = $region120
        $region119: #{tpu_custom_call.1} parent=111 // pred_region
          %938 = dma.done %s932, 16
        $region120: #{tpu_custom_call.1} parent=111 // pred_fallthru
          _
        %s939 = sand.u32 %s55, 1
        %s940 = scalar_lea.sflag [#allocation10], %s939
        %s941 = sand.u32 %s155, 1
        %s942 = scalar_lea.vmem [#allocation11], %s941
        // Predicated region
        $region121: #{tpu_custom_call.1} parent=111 // pred_check
          %p943 = pneg %p168
        $region122: #{tpu_custom_call.1} parent=111 // pred_check_branch
          %945 = sbr.rel (%p943) target = $region124
        $region123: #{tpu_custom_call.1} parent=111 // pred_region
          %946 = dma.done %s940, 16
        $region124: #{tpu_custom_call.1} parent=111 // pred_fallthru
          _
        // Predicated region
        $region125: #{tpu_custom_call.1} parent=111 // pred_check
          %p947 = pneg %p217
        $region126: #{tpu_custom_call.1} parent=111 // pred_check_branch
          %949 = sbr.rel (%p947) target = $region128
        $region127: #{tpu_custom_call.1} parent=111 // pred_region
          %950 = dma.done [#allocation13], 256
        $region128: #{tpu_custom_call.1} parent=111 // pred_fallthru
          _
        // Predicated region
        $region129: #{tpu_custom_call.1} parent=111 // pred_check
          %p951 = pneg %p238
        $region130: #{tpu_custom_call.1} parent=111 // pred_check_branch
          %953 = sbr.rel (%p951) target = $region132
        $region131: #{tpu_custom_call.1} parent=111 // pred_region
          %954 = dma.done [#allocation13], 16
        $region132: #{tpu_custom_call.1} parent=111 // pred_fallthru
          _
        // Predicated region
        $region133: #{tpu_custom_call.1} parent=111 // pred_check
          %p955 = pneg %p259
        $region134: #{tpu_custom_call.1} parent=111 // pred_check_branch
          %957 = sbr.rel (%p955) target = $region136
        $region135: #{tpu_custom_call.1} parent=111 // pred_region
          %958 = dma.done [#allocation16], 128
        $region136: #{tpu_custom_call.1} parent=111 // pred_fallthru
          _
        // Predicated region
        $region137: #{tpu_custom_call.1} parent=111 // pred_check
          %p959 = pneg %p280
        $region138: #{tpu_custom_call.1} parent=111 // pred_check_branch
          %961 = sbr.rel (%p959) target = $region140
        $region139: #{tpu_custom_call.1} parent=111 // pred_region
          %962 = dma.done [#allocation16], 16
        $region140: #{tpu_custom_call.1} parent=111 // pred_fallthru
          _
        // Predicated region
        $region141: #{tpu_custom_call.1} parent=111 // pred_check
          %p963 = pneg %p301
        $region142: #{tpu_custom_call.1} parent=111 // pred_check_branch
          %965 = sbr.rel (%p963) target = $region144
        $region143: #{tpu_custom_call.1} parent=111 // pred_region
          %966 = dma.done [#allocation19], 256
        $region144: #{tpu_custom_call.1} parent=111 // pred_fallthru
          _
        // Predicated region
        $region145: #{tpu_custom_call.1} parent=111 // pred_check
          %p967 = pneg %p322
        $region146: #{tpu_custom_call.1} parent=111 // pred_check_branch
          %969 = sbr.rel (%p967) target = $region148
        $region147: #{tpu_custom_call.1} parent=111 // pred_region
          %970 = dma.done [#allocation19], 16
        $region148: #{tpu_custom_call.1} parent=111 // pred_fallthru
          _
        // Predicated region
        $region149: #{tpu_custom_call.1} parent=111 // pred_check
          %p971 = pneg %p343
        $region150: #{tpu_custom_call.1} parent=111 // pred_check_branch
          %973 = sbr.rel (%p971) target = $region152
        $region151: #{tpu_custom_call.1} parent=111 // pred_region
          %974 = dma.done [#allocation22], 256
        $region152: #{tpu_custom_call.1} parent=111 // pred_fallthru
          _
        // Predicated region
        $region153: #{tpu_custom_call.1} parent=111 // pred_check
          %p975 = pneg %p364
        $region154: #{tpu_custom_call.1} parent=111 // pred_check_branch
          %977 = sbr.rel (%p975) target = $region156
        $region155: #{tpu_custom_call.1} parent=111 // pred_region
          %978 = dma.done [#allocation22], 16
        $region156: #{tpu_custom_call.1} parent=111 // pred_fallthru
          _
        // Predicated region
        $region157: #{tpu_custom_call.1} parent=111 // pred_check
          %p979 = pneg %p406
        $region158: #{tpu_custom_call.1} parent=111 // pred_check_branch
          %981 = sbr.rel (%p979) target = $region160
        $region159: #{tpu_custom_call.1} parent=111 // pred_region
          %982 = dma.done [#allocation25], 16
        $region160: #{tpu_custom_call.1} parent=111 // pred_fallthru
          _
        // Predicated region
        $region161: #{tpu_custom_call.1} parent=111 // pred_check
          %p983 = pneg %p448
        $region162: #{tpu_custom_call.1} parent=111 // pred_check_branch
          %985 = sbr.rel (%p983) target = $region164
        $region163: #{tpu_custom_call.1} parent=111 // pred_region
          %986 = dma.done [#allocation25], 16
        $region164: #{tpu_custom_call.1} parent=111 // pred_fallthru
          _
        // Predicated region
        $region165: #{tpu_custom_call.1} parent=111 // pred_check
          %p987 = pneg %p490
        $region166: #{tpu_custom_call.1} parent=111 // pred_check_branch
          %989 = sbr.rel (%p987) target = $region168
        $region167: #{tpu_custom_call.1} parent=111 // pred_region
          %990 = dma.done [#allocation28], 16
        $region168: #{tpu_custom_call.1} parent=111 // pred_fallthru
          _
        // Predicated region
        $region169: #{tpu_custom_call.1} parent=111 // pred_check
          %p991 = pneg %p553
        $region170: #{tpu_custom_call.1} parent=111 // pred_check_branch
          %993 = sbr.rel (%p991) target = $region172
        $region171: #{tpu_custom_call.1} parent=111 // pred_region
          %994 = dma.done [#allocation28], 512
        $region172: #{tpu_custom_call.1} parent=111 // pred_fallthru
          _
        %s995 = sand.u32 %s75, 1
        %s996 = scalar_lea.sflag [#allocation7], %s995
        %s997 = sand.u32 %s75, 1
        %s998 = smul.addr %s997, 8
        %s999 = scalar_lea.vmem [#allocation6], %s998
        %p1000 = pneg %p88
        %p1001 = pneg %p85
        %s1002 = smul.u32 8, %s60
        %p1003 = scmp.lt.s32.totalorder %s59, 1
        %s1004 = scalar_select %p1003, %s59, 1
        %p1005 = scmp.lt.s32.totalorder %s1002, 15
        %s1006 = scalar_select %p1005, %s1002, 15
        %s1007 = smul.addr %s1006, 2
        %s1008 = smul.addr %s1004, 32
        %s1009 = sadd.s32 %s1007, %s1008
        %s1010 = smul.addr %s1009, 4
        %s1011 = scalar_lea.vmem %s1, %s1010
        %p1012 = pneg %p116
        %p1013 = pneg %p113
        %s1014 = sand.u32 %s55, 1
        %s1015 = scalar_lea.sflag [#allocation10], %s1014
        %s1016 = sand.u32 %s129, 1
        %s1017 = scalar_lea.vmem [#allocation9], %s1016
        %p1018 = pneg %p142
        %p1019 = pneg %p139
        %s1020 = sand.u32 %s55, 1
        %s1021 = scalar_lea.sflag [#allocation10], %s1020
        %s1022 = sand.u32 %s155, 1
        %s1023 = scalar_lea.vmem [#allocation11], %s1022
        %p1024 = pneg %p168
        %p1025 = pneg %p165
        %p1026 = scmp.lt.s32.totalorder %s59, 1
        %s1027 = scalar_select %p1026, %s59, 1
        %p1028 = scmp.lt.s32.totalorder %s60, 1
        %s1029 = scalar_select %p1028, %s60, 1
        %s1030 = smul.addr %s1027, 2
        %s1031 = sadd.s32 %s1029, %s1030
        %s1032 = smul.addr %s1031, 8
        %s1033 = scalar_lea.vmem %s4, %s1032
        %p1034 = pneg %p196
        %p1035 = pneg %p193
        %p1036 = pneg %p217
        %p1037 = pneg %p214
        %p1038 = pneg %p238
        %p1039 = pneg %p235
        %p1040 = pneg %p259
        %p1041 = pneg %p256
        %p1042 = pneg %p280
        %p1043 = pneg %p277
        %p1044 = pneg %p301
        %p1045 = pneg %p298
        %p1046 = pneg %p322
        %p1047 = pneg %p319
        %p1048 = pneg %p343
        %p1049 = pneg %p340
        %p1050 = pneg %p364
        %p1051 = pneg %p361
        %p1052 = pneg %p385
        %p1053 = pneg %p382
        %p1054 = pneg %p406
        %p1055 = pneg %p403
        %p1056 = pneg %p427
        %p1057 = pneg %p424
        %p1058 = pneg %p448
        %p1059 = pneg %p445
        %p1060 = pneg %p469
        %p1061 = pneg %p466
        %p1062 = pneg %p490
        %p1063 = pneg %p487
        %p1064 = pneg %p511
        %p1065 = pneg %p508
        %p1066 = pneg %p532
        %p1067 = pneg %p529
        %p1068 = pneg %p553
        %p1069 = pneg %p550
        %p1070 = pneg %p574
        %p1071 = pneg %p571
        %p1072 = pneg %p602
        %p1073 = pneg %p599
        %s1074 = sand.u32 %s589, 1
        %s1075 = scalar_lea.sflag [#allocation8], %s1074
        %s1076 = sand.u32 %s589, 1
        %s1077 = smul.addr %s1076, 8
        %s1078 = scalar_lea.vmem [#allocation30], %s1077
        %p1079 = pneg %p630
        %p1080 = pneg %p627
        %s1081 = sand.u32 %s55, 1
        %s1082 = scalar_lea.sflag [#allocation32], %s1081
        %s1083 = sand.u32 %s617, 1
        %s1084 = smul.addr %s1083, 128
        %s1085 = scalar_lea.vmem [#allocation31], %s1084
        %p1086 = pneg %p656
        %p1087 = pneg %p653
        %s1088 = sand.u32 %s55, 1
        %s1089 = scalar_lea.sflag [#allocation32], %s1088
        %s1090 = sand.u32 %s643, 1
        %s1091 = scalar_lea.vmem [#allocation33], %s1090
        %s1092 = smul.u32 8, %s60
        %p1093 = scmp.lt.s32.totalorder %s59, 1
        %s1094 = scalar_select %p1093, %s59, 1
        %p1095 = scmp.lt.s32.totalorder %s1092, 15
        %s1096 = scalar_select %p1095, %s1092, 15
        %s1097 = smul.addr %s1096, 2
        %s1098 = smul.addr %s1094, 32
        %s1099 = sadd.s32 %s1097, %s1098
        %s1100 = smul.addr %s1099, 4
        %s1101 = scalar_lea.vmem %s1, %s1100
        %s1102 = smul.u32 8, %s60
        %p1103 = scmp.lt.s32.totalorder %s59, 1
        %s1104 = scalar_select %p1103, %s59, 1
        %p1105 = scmp.lt.s32.totalorder %s60, 1
        %s1106 = scalar_select %p1105, %s60, 1
        %s1107 = smul.addr %s1104, 2
        %s1108 = sadd.s32 %s1106, %s1107
        %s1109 = smul.addr %s1108, 8
        %s1110 = scalar_lea.vmem %s4, %s1109
        %s1111 = smul.u32 8, %s60
        %v1113 = vld [vmem:[%s942] sm:$0x1]
        %v1114 = vld [vmem:[%s1110] sm:$0xff]
        %p1115 = scmp.eq.s32.totalorder %s60, 0
        // Predicated region
        $region173: #{tpu_custom_call.1} parent=111 // pred_check
          %p1116 = pneg %p1115
        $region174: #{tpu_custom_call.1} parent=111 // pred_check_branch
          %1118 = sbr.rel (%p1116) target = $region176
        $region175: #{tpu_custom_call.1} parent=111 // pred_region
          %v1119 = vld [vmem:[%s926] sm:$0xf]
          %v1120 = vld [vmem:[%s926 + $0x4] sm:$0xf]
          %v1121 = vlaneseq
          %v1122 = vshrl.u32 %v1121, 7
          %v1123 = vsub.s32 0, %v1122
          %v1124 = vrot.slane %v1113, %v1123
          %1126 = vbcast.lane.b32.xlu0 %v1124, 256
          %v1127 = vpop.permute.xlu0 %1126
          %s1129 = sor.u32 256, 8
          %1130 = vbcast.lane.b32.xlu0 %v1124, %s1129
          %v1131 = vpop.permute.xlu0 %1130
          %v1132 = vld [vmem:[#allocation12] sm:$0xf]
          %v1133 = vld [vmem:[#allocation12 + $0x4] sm:$0xf]
          %v1134 = vld [vmem:[#allocation12 + $0x8] sm:$0xf]
          %v1135 = vld [vmem:[#allocation12 + $0xc] sm:$0xf]
          %v1136 = vld [vmem:[#allocation14] sm:$0x1]
          %v1138 = vlaneseq
          %v1139 = vshrl.u32 %v1138, 7
          %v1140 = vsub.s32 0, %v1139
          %v1141 = vrot.slane %v1136, %v1140
          %v1145 = vunpack.c.l.b16 %v1119
          %v1146 = vunpack.c.l.b16 %v1120
          %v1147 = vpack.c.b16 %v1146, %v1145
          %v1152 = vunpack.c.l.b16 %v1132
          %v1153 = vunpack.c.l.b16 %v1133
          %v1154 = vunpack.c.l.b16 %v1134
          %v1155 = vunpack.c.l.b16 %v1135
          %v1156 = vpack.c.b16 %v1153, %v1152
          %v1157 = vpack.c.b16 %v1155, %v1154
          %vm1160 = vcmask 261120
          %v1162 = vsel %vm1160, %v1147, 0
          %1164 = vmatprep.subr.bf16.mxu0 0
          %1165 = vmatpush1.bf16.msra.mxu0 0
          %1166 = vmatprep.subr.bf16.mxu0 0
          %1167 = vmatpush1.bf16.msra.mxu0 0
          %1168 = vmatprep.subr.bf16.mxu0 0
          %1169 = vmatpush1.bf16.msra.mxu0 0
          %1170 = vmatprep.subr.bf16.mxu0 0
          %1171 = vmatpush1.bf16.msra.mxu0 0
          %1172 = vmatprep.subr.bf16.mxu0 0
          %1173 = vmatpush1.bf16.msra.mxu0 0
          %1174 = vmatprep.subr.bf16.mxu0 0
          %1175 = vmatpush1.bf16.msra.mxu0 0
          %1176 = vmatprep.subr.bf16.mxu0 0
          %1177 = vmatpush1.bf16.msra.mxu0 %v1157
          %1178 = vmatprep.subr.bf16.mxu0 0
          %1179 = vmatpush1.bf16.msra.mxu0 %v1156
          %1180 = vmatprep.subr.bf16.mxu0 0
          %1181 = vmatpush2.bf16.msra.mxu0 0
          %1182 = vmatprep.subr.bf16.mxu0 0
          %1183 = vmatpush2.bf16.msra.mxu0 0
          %1184 = vmatprep.subr.bf16.mxu0 0
          %1185 = vmatpush2.bf16.msra.mxu0 0
          %1186 = vmatprep.subr.bf16.mxu0 0
          %1187 = vmatpush2.bf16.msra.mxu0 0
          %1188 = vmatprep.subr.bf16.mxu0 0
          %1189 = vmatpush2.bf16.msra.mxu0 0
          %1190 = vmatprep.subr.bf16.mxu0 0
          %1191 = vmatpush2.bf16.msra.mxu0 0
          %1192 = vmatprep.subr.bf16.mxu0 0
          %1193 = vmatpush2.bf16.msra.mxu0 0
          %1194 = vmatprep.subr.bf16.mxu0 0
          %1195 = vmatpush2.bf16.msra.mxu0 0
          %1196 = vmatprep.mubr.bf16.mxu0 0
          %1197 = vmatmul.mubr.bf16.gmra.mxu0 %v1162
          %v1198 = vpop.f32.mrf.mxu0
          %v1199 = vadd.f32 %v1141, %v1198
          %v1200 = vpop.f32.mrf.mxu0
          %v1201 = vpop.f32.mrf.mxu0
          %v1202 = vadd.f32 %v1141, %v1201
          %v1203 = vpop.f32.mrf.mxu0
          %1204 = vdwg.mxu0
          %v1205 = vmul.f32 %v1199, %v1127
          %v1206 = vmul.f32 %v1202, %v1131
          %vm1207 = vcmask 785408
          %1208 = vst.msk [vmem:[#allocation2] sm:$0xff] %vm1207, %v1205
          %1209 = vst.msk [vmem:[#allocation2 + $0x8] sm:$0xff] %vm1207, %v1206
          %v1210 = vld [vmem:[%s934] sm:$0x1]
          %v1211 = vld [vmem:[#allocation18] sm:$0xff]
          %v1212 = vld [vmem:[#allocation18 + $0x8] sm:$0xff]
          %v1213 = vld [vmem:[#allocation20] sm:$0x1]
          %vm1214 = vcmask 130048
          %v1216 = vsel %vm1214, %v1210, 0
          %1218 = vmatprep.subr.mxu0 0.0
          %1219 = vmatpush1.msra.mxu0 0.0
          %1220 = vmatprep.subr.mxu0 0.0
          %1221 = vmatpush1.msra.mxu0 0.0
          %1222 = vmatprep.subr.mxu0 0.0
          %1223 = vmatpush1.msra.mxu0 0.0
          %1224 = vmatprep.subr.mxu0 0.0
          %1225 = vmatpush1.msra.mxu0 0.0
          %1226 = vmatprep.subr.mxu0 0.0
          %1227 = vmatpush1.msra.mxu0 0.0
          %1228 = vmatprep.subr.mxu0 0.0
          %1229 = vmatpush1.msra.mxu0 0.0
          %1230 = vmatprep.subr.mxu0 0.0
          %1231 = vmatpush1.msra.mxu0 0.0
          %1232 = vmatprep.subr.mxu0 0.0
          %1233 = vmatpush1.msra.mxu0 0.0
          %1234 = vmatprep.subr.mxu0 0.0
          %1235 = vmatpush1.msra.mxu0 0.0
          %1236 = vmatprep.subr.mxu0 0.0
          %1237 = vmatpush1.msra.mxu0 0.0
          %1238 = vmatprep.subr.mxu0 0.0
          %1239 = vmatpush1.msra.mxu0 0.0
          %1240 = vmatprep.subr.mxu0 0.0
          %1241 = vmatpush1.msra.mxu0 0.0
          %1242 = vmatprep.subr.mxu0 0.0
          %1243 = vmatpush1.msra.mxu0 0.0
          %1244 = vmatprep.subr.mxu0 0.0
          %1245 = vmatpush1.msra.mxu0 0.0
          %1246 = vmatprep.subr.mxu0 0.0
          %1247 = vmatpush1.msra.mxu0 %v1212
          %1248 = vmatprep.subr.mxu0 0.0
          %1249 = vmatpush1.msra.mxu0 %v1211
          %1250 = vmatprep.subr.mxu0 0.0
          %1251 = vmatpush2.msra.mxu0 0.0
          %1252 = vmatprep.subr.mxu0 0.0
          %1253 = vmatpush2.msra.mxu0 0.0
          %1254 = vmatprep.subr.mxu0 0.0
          %1255 = vmatpush2.msra.mxu0 0.0
          %1256 = vmatprep.subr.mxu0 0.0
          %1257 = vmatpush2.msra.mxu0 0.0
          %1258 = vmatprep.subr.mxu0 0.0
          %1259 = vmatpush2.msra.mxu0 0.0
          %1260 = vmatprep.subr.mxu0 0.0
          %1261 = vmatpush2.msra.mxu0 0.0
          %1262 = vmatprep.subr.mxu0 0.0
          %1263 = vmatpush2.msra.mxu0 0.0
          %1264 = vmatprep.subr.mxu0 0.0
          %1265 = vmatpush2.msra.mxu0 0.0
          %1266 = vmatprep.subr.mxu0 0.0
          %1267 = vmatpush2.msra.mxu0 0.0
          %1268 = vmatprep.subr.mxu0 0.0
          %1269 = vmatpush2.msra.mxu0 0.0
          %1270 = vmatprep.subr.mxu0 0.0
          %1271 = vmatpush2.msra.mxu0 0.0
          %1272 = vmatprep.subr.mxu0 0.0
          %1273 = vmatpush2.msra.mxu0 0.0
          %1274 = vmatprep.subr.mxu0 0.0
          %1275 = vmatpush2.msra.mxu0 0.0
          %1276 = vmatprep.subr.mxu0 0.0
          %1277 = vmatpush2.msra.mxu0 0.0
          %1278 = vmatprep.subr.mxu0 0.0
          %1279 = vmatpush2.msra.mxu0 0.0
          %1280 = vmatprep.subr.mxu0 0.0
          %1281 = vmatpush2.msra.mxu0 0.0
          %1282 = vmatprep.mubr.f32.mxu0 0.0
          %1283 = vmatmul.mubr.f32.gmra.mxu0 %v1216
          %v1284 = vpop.f32.mrf.mxu0
          %v1285 = vadd.f32 %v1213, %v1284
          %v1286 = vpop.f32.mrf.mxu0
          %1287 = vdwg.mxu0
          %1288 = vst [vmem:[#allocation3] sm:$0x1] %v1285
          %v1289 = vunpack.c.l.bf16 %v1119
          %v1290 = vunpack.c.l.bf16 %v1120
          %v1291 = vld [vmem:[#allocation21] sm:$0xff]
          %v1292 = vld [vmem:[#allocation21 + $0x8] sm:$0xff]
          %v1293 = vld [vmem:[#allocation23] sm:$0x1]
          %1294 = vmatprep.subr.mxu0 0.0
          %1295 = vmatpush1.msra.mxu0 0.0
          %1296 = vmatprep.subr.mxu0 0.0
          %1297 = vmatpush1.msra.mxu0 0.0
          %1298 = vmatprep.subr.mxu0 0.0
          %1299 = vmatpush1.msra.mxu0 0.0
          %1300 = vmatprep.subr.mxu0 0.0
          %1301 = vmatpush1.msra.mxu0 0.0
          %1302 = vmatprep.subr.mxu0 0.0
          %1303 = vmatpush1.msra.mxu0 0.0
          %1304 = vmatprep.subr.mxu0 0.0
          %1305 = vmatpush1.msra.mxu0 0.0
          %1306 = vmatprep.subr.mxu0 0.0
          %1307 = vmatpush1.msra.mxu0 0.0
          %1308 = vmatprep.subr.mxu0 0.0
          %1309 = vmatpush1.msra.mxu0 0.0
          %1310 = vmatprep.subr.mxu0 0.0
          %1311 = vmatpush1.msra.mxu0 0.0
          %1312 = vmatprep.subr.mxu0 0.0
          %1313 = vmatpush1.msra.mxu0 0.0
          %1314 = vmatprep.subr.mxu0 0.0
          %1315 = vmatpush1.msra.mxu0 0.0
          %1316 = vmatprep.subr.mxu0 0.0
          %1317 = vmatpush1.msra.mxu0 0.0
          %1318 = vmatprep.subr.mxu0 0.0
          %1319 = vmatpush1.msra.mxu0 0.0
          %1320 = vmatprep.subr.mxu0 0.0
          %1321 = vmatpush1.msra.mxu0 0.0
          %1322 = vmatprep.subr.mxu0 0.0
          %1323 = vmatpush1.msra.mxu0 %v1292
          %1324 = vmatprep.subr.mxu0 0.0
          %1325 = vmatpush1.msra.mxu0 %v1291
          %1326 = vmatprep.subr.mxu0 0.0
          %1327 = vmatpush2.msra.mxu0 0.0
          %1328 = vmatprep.subr.mxu0 0.0
          %1329 = vmatpush2.msra.mxu0 0.0
          %1330 = vmatprep.subr.mxu0 0.0
          %1331 = vmatpush2.msra.mxu0 0.0
          %1332 = vmatprep.subr.mxu0 0.0
          %1333 = vmatpush2.msra.mxu0 0.0
          %1334 = vmatprep.subr.mxu0 0.0
          %1335 = vmatpush2.msra.mxu0 0.0
          %1336 = vmatprep.subr.mxu0 0.0
          %1337 = vmatpush2.msra.mxu0 0.0
          %1338 = vmatprep.subr.mxu0 0.0
          %1339 = vmatpush2.msra.mxu0 0.0
          %1340 = vmatprep.subr.mxu0 0.0
          %1341 = vmatpush2.msra.mxu0 0.0
          %1342 = vmatprep.subr.mxu0 0.0
          %1343 = vmatpush2.msra.mxu0 0.0
          %1344 = vmatprep.subr.mxu0 0.0
          %1345 = vmatpush2.msra.mxu0 0.0
          %1346 = vmatprep.subr.mxu0 0.0
          %1347 = vmatpush2.msra.mxu0 0.0
          %1348 = vmatprep.subr.mxu0 0.0
          %1349 = vmatpush2.msra.mxu0 0.0
          %1350 = vmatprep.subr.mxu0 0.0
          %1351 = vmatpush2.msra.mxu0 0.0
          %1352 = vmatprep.subr.mxu0 0.0
          %1353 = vmatpush2.msra.mxu0 0.0
          %1354 = vmatprep.subr.mxu0 0.0
          %1355 = vmatpush2.msra.mxu0 0.0
          %1356 = vmatprep.subr.mxu0 0.0
          %1357 = vmatpush2.msra.mxu0 0.0
          %1358 = vmatprep.mubr.f32.mxu0 0.0
          %1359 = vmatmul.mubr.f32.gmra.mxu0 %v1216
          %v1360 = vpop.f32.mrf.mxu0
          %v1361 = vadd.f32 %v1293, %v1360
          %v1362 = vpop.f32.mrf.mxu0
          %1363 = vdwg.mxu0
          %v1364 = vsel %vm1160, %v1289, 0.0
          %v1365 = vsel %vm1160, %v1290, 0.0
          %v1366 = vadd.f32 %v1364, %v1365
          %v1367 = vrot.slane %v1366, 4
          %v1368 = vadd.f32 %v1366, %v1367
          %v1369 = vrot.slane %v1368, 2
          %v1370 = vadd.f32 %v1368, %v1369
          %v1371 = vrot.slane %v1370, 1
          %v1372 = vadd.f32 %v1370, %v1371
          %v1373 = vrcp.pop 16.0
          %v1374 = vmul.f32 %v1372, %v1373
          %v1375 = vsel %vm1160, %v1289, inf
          %v1376 = vsel %vm1160, %v1290, inf
          %v1377 = vmin.f32 %v1375, %v1376
          %v1378 = vrot.slane %v1377, 4
          %v1379 = vmin.f32 %v1377, %v1378
          %v1380 = vrot.slane %v1379, 2
          %v1381 = vmin.f32 %v1379, %v1380
          %v1382 = vrot.slane %v1381, 1
          %v1383 = vmin.f32 %v1381, %v1382
          %v1384 = vsel %vm1160, %v1289, -inf
          %v1385 = vsel %vm1160, %v1290, -inf
          %v1386 = vmax.f32 %v1384, %v1385
          %v1387 = vrot.slane %v1386, 4
          %v1388 = vmax.f32 %v1386, %v1387
          %v1389 = vrot.slane %v1388, 2
          %v1390 = vmax.f32 %v1388, %v1389
          %v1391 = vrot.slane %v1390, 1
          %v1392 = vmax.f32 %v1390, %v1391
          %v1393 = vsub.f32 %v1289, %v1374
          %v1394 = vsub.f32 %v1290, %v1374
          %v1395 = vmul.f32 %v1393, %v1393
          %v1396 = vmul.f32 %v1394, %v1394
          %v1397 = vsel %vm1160, %v1395, 0.0
          %v1398 = vsel %vm1160, %v1396, 0.0
          %v1399 = vadd.f32 %v1397, %v1398
          %v1400 = vrot.slane %v1399, 4
          %v1401 = vadd.f32 %v1399, %v1400
          %v1402 = vrot.slane %v1401, 2
          %v1403 = vadd.f32 %v1401, %v1402
          %v1404 = vrot.slane %v1403, 1
          %v1405 = vadd.f32 %v1403, %v1404
          %v1406 = vrcp.pop 15.0
          %v1407 = vmul.f32 %v1405, %v1406
          %v1408 = vrsqrt.pop %v1407
          %v1409 = vmul.f32 %v1407, %v1408
          %vm1410 = vcmp.eq.f32.partialorder %v1407, inf
          %v1411 = vsel %vm1410, %v1407, %v1409
          %vm1412 = vcmp.eq.f32.partialorder %v1407, 0.0
          %v1413 = vand.u32 %v1407, 2147483648
          %v1414 = vsel %vm1412, %v1413, %v1411
          %v1415 = vld [vmem:[%s13] sm:$0xff]
          %v1416 = vld [vmem:[%s13 + $0x8] sm:$0xff]
          %v1417 = vld [vmem:[%s13 + $0x10] sm:$0xff]
          %v1418 = vld [vmem:[%s13 + $0x18] sm:$0xff]
          %v1419 = vld [vmem:[%s13 + $0x20] sm:$0xff]
          %v1420 = vld [vmem:[%s13 + $0x28] sm:$0xff]
          %v1421 = vld [vmem:[%s13 + $0x30] sm:$0xff]
          %v1422 = vld [vmem:[%s13 + $0x38] sm:$0xff]
          %v1423 = vld [vmem:[%s13 + $0x40] sm:$0xff]
          %v1424 = vld [vmem:[%s13 + $0x48] sm:$0xff]
          %v1425 = vld [vmem:[%s13 + $0x50] sm:$0xff]
          %v1426 = vld [vmem:[%s13 + $0x58] sm:$0xff]
          %v1427 = vld [vmem:[%s13 + $0x60] sm:$0xff]
          %v1428 = vld [vmem:[%s13 + $0x68] sm:$0xff]
          %v1429 = vld [vmem:[%s13 + $0x70] sm:$0xff]
          %v1430 = vld [vmem:[%s13 + $0x78] sm:$0xff]
          %v1432 = vsel %vm1160, %v1383, 0
          %1434 = vmatprep.subr.mxu0 0.0
          %1435 = vmatpush1.msra.mxu0 0.0
          %1436 = vmatprep.subr.mxu0 0.0
          %1437 = vmatpush1.msra.mxu0 0.0
          %1438 = vmatprep.subr.mxu0 0.0
          %1439 = vmatpush1.msra.mxu0 0.0
          %1440 = vmatprep.subr.mxu0 0.0
          %1441 = vmatpush1.msra.mxu0 0.0
          %1442 = vmatprep.subr.mxu0 0.0
          %1443 = vmatpush1.msra.mxu0 0.0
          %1444 = vmatprep.subr.mxu0 0.0
          %1445 = vmatpush1.msra.mxu0 0.0
          %1446 = vmatprep.subr.mxu0 0.0
          %1447 = vmatpush1.msra.mxu0 0.0
          %1448 = vmatprep.subr.mxu0 0.0
          %1449 = vmatpush1.msra.mxu0 0.0
          %1450 = vmatprep.subr.mxu0 0.0
          %1451 = vmatpush1.msra.mxu0 0.0
          %1452 = vmatprep.subr.mxu0 0.0
          %1453 = vmatpush1.msra.mxu0 0.0
          %1454 = vmatprep.subr.mxu0 0.0
          %1455 = vmatpush1.msra.mxu0 0.0
          %1456 = vmatprep.subr.mxu0 0.0
          %1457 = vmatpush1.msra.mxu0 0.0
          %1458 = vmatprep.subr.mxu0 0.0
          %1459 = vmatpush1.msra.mxu0 %v1422
          %1460 = vmatprep.subr.mxu0 0.0
          %1461 = vmatpush1.msra.mxu0 %v1421
          %1462 = vmatprep.subr.mxu0 0.0
          %1463 = vmatpush1.msra.mxu0 %v1420
          %1464 = vmatprep.subr.mxu0 0.0
          %1465 = vmatpush1.msra.mxu0 %v1419
          %1466 = vmatprep.subr.mxu0 0.0
          %1467 = vmatpush2.msra.mxu0 0.0
          %1468 = vmatprep.subr.mxu0 0.0
          %1469 = vmatpush2.msra.mxu0 0.0
          %1470 = vmatprep.subr.mxu0 0.0
          %1471 = vmatpush2.msra.mxu0 0.0
          %1472 = vmatprep.subr.mxu0 0.0
          %1473 = vmatpush2.msra.mxu0 0.0
          %1474 = vmatprep.subr.mxu0 0.0
          %1475 = vmatpush2.msra.mxu0 0.0
          %1476 = vmatprep.subr.mxu0 0.0
          %1477 = vmatpush2.msra.mxu0 0.0
          %1478 = vmatprep.subr.mxu0 0.0
          %1479 = vmatpush2.msra.mxu0 0.0
          %1480 = vmatprep.subr.mxu0 0.0
          %1481 = vmatpush2.msra.mxu0 0.0
          %1482 = vmatprep.subr.mxu0 0.0
          %1483 = vmatpush2.msra.mxu0 0.0
          %1484 = vmatprep.subr.mxu0 0.0
          %1485 = vmatpush2.msra.mxu0 0.0
          %1486 = vmatprep.subr.mxu0 0.0
          %1487 = vmatpush2.msra.mxu0 0.0
          %1488 = vmatprep.subr.mxu0 0.0
          %1489 = vmatpush2.msra.mxu0 0.0
          %1490 = vmatprep.subr.mxu0 0.0
          %1491 = vmatpush2.msra.mxu0 0.0
          %1492 = vmatprep.subr.mxu0 0.0
          %1493 = vmatpush2.msra.mxu0 0.0
          %1494 = vmatprep.subr.mxu0 0.0
          %1495 = vmatpush2.msra.mxu0 0.0
          %1496 = vmatprep.subr.mxu0 0.0
          %1497 = vmatpush2.msra.mxu0 0.0
          %1498 = vmatprep.mubr.f32.mxu0 0.0
          %1499 = vmatmul.mubr.f32.gmra.mxu0 %v1432
          %v1500 = vpop.f32.mrf.mxu0
          %v1501 = vadd.f32 0.0, %v1500
          %v1502 = vpop.f32.mrf.mxu0
          %1503 = vdwg.mxu0
          %v1505 = vsel %vm1160, %v1374, 0
          %1507 = vmatprep.subr.mxu0 0.0
          %1508 = vmatpush1.msra.mxu0 0.0
          %1509 = vmatprep.subr.mxu0 0.0
          %1510 = vmatpush1.msra.mxu0 0.0
          %1511 = vmatprep.subr.mxu0 0.0
          %1512 = vmatpush1.msra.mxu0 0.0
          %1513 = vmatprep.subr.mxu0 0.0
          %1514 = vmatpush1.msra.mxu0 0.0
          %1515 = vmatprep.subr.mxu0 0.0
          %1516 = vmatpush1.msra.mxu0 0.0
          %1517 = vmatprep.subr.mxu0 0.0
          %1518 = vmatpush1.msra.mxu0 0.0
          %1519 = vmatprep.subr.mxu0 0.0
          %1520 = vmatpush1.msra.mxu0 0.0
          %1521 = vmatprep.subr.mxu0 0.0
          %1522 = vmatpush1.msra.mxu0 0.0
          %1523 = vmatprep.subr.mxu0 0.0
          %1524 = vmatpush1.msra.mxu0 0.0
          %1525 = vmatprep.subr.mxu0 0.0
          %1526 = vmatpush1.msra.mxu0 0.0
          %1527 = vmatprep.subr.mxu0 0.0
          %1528 = vmatpush1.msra.mxu0 0.0
          %1529 = vmatprep.subr.mxu0 0.0
          %1530 = vmatpush1.msra.mxu0 0.0
          %1531 = vmatprep.subr.mxu0 0.0
          %1532 = vmatpush1.msra.mxu0 %v1418
          %1533 = vmatprep.subr.mxu0 0.0
          %1534 = vmatpush1.msra.mxu0 %v1417
          %1535 = vmatprep.subr.mxu0 0.0
          %1536 = vmatpush1.msra.mxu0 %v1416
          %1537 = vmatprep.subr.mxu0 0.0
          %1538 = vmatpush1.msra.mxu0 %v1415
          %1539 = vmatprep.subr.mxu0 0.0
          %1540 = vmatpush2.msra.mxu0 0.0
          %1541 = vmatprep.subr.mxu0 0.0
          %1542 = vmatpush2.msra.mxu0 0.0
          %1543 = vmatprep.subr.mxu0 0.0
          %1544 = vmatpush2.msra.mxu0 0.0
          %1545 = vmatprep.subr.mxu0 0.0
          %1546 = vmatpush2.msra.mxu0 0.0
          %1547 = vmatprep.subr.mxu0 0.0
          %1548 = vmatpush2.msra.mxu0 0.0
          %1549 = vmatprep.subr.mxu0 0.0
          %1550 = vmatpush2.msra.mxu0 0.0
          %1551 = vmatprep.subr.mxu0 0.0
          %1552 = vmatpush2.msra.mxu0 0.0
          %1553 = vmatprep.subr.mxu0 0.0
          %1554 = vmatpush2.msra.mxu0 0.0
          %1555 = vmatprep.subr.mxu0 0.0
          %1556 = vmatpush2.msra.mxu0 0.0
          %1557 = vmatprep.subr.mxu0 0.0
          %1558 = vmatpush2.msra.mxu0 0.0
          %1559 = vmatprep.subr.mxu0 0.0
          %1560 = vmatpush2.msra.mxu0 0.0
          %1561 = vmatprep.subr.mxu0 0.0
          %1562 = vmatpush2.msra.mxu0 0.0
          %1563 = vmatprep.subr.mxu0 0.0
          %1564 = vmatpush2.msra.mxu0 0.0
          %1565 = vmatprep.subr.mxu0 0.0
          %1566 = vmatpush2.msra.mxu0 0.0
          %1567 = vmatprep.subr.mxu0 0.0
          %1568 = vmatpush2.msra.mxu0 0.0
          %1569 = vmatprep.subr.mxu0 0.0
          %1570 = vmatpush2.msra.mxu0 0.0
          %1571 = vmatprep.mubr.f32.mxu0 0.0
          %1572 = vmatmul.mubr.f32.gmra.mxu0 %v1505
          %v1573 = vpop.f32.mrf.mxu0
          %v1574 = vadd.f32 %v1501, %v1573
          %v1575 = vpop.f32.mrf.mxu0
          %1576 = vdwg.mxu0
          %v1578 = vsel %vm1160, %v1392, 0
          %1580 = vmatprep.subr.mxu0 0.0
          %1581 = vmatpush1.msra.mxu0 0.0
          %1582 = vmatprep.subr.mxu0 0.0
          %1583 = vmatpush1.msra.mxu0 0.0
          %1584 = vmatprep.subr.mxu0 0.0
          %1585 = vmatpush1.msra.mxu0 0.0
          %1586 = vmatprep.subr.mxu0 0.0
          %1587 = vmatpush1.msra.mxu0 0.0
          %1588 = vmatprep.subr.mxu0 0.0
          %1589 = vmatpush1.msra.mxu0 0.0
          %1590 = vmatprep.subr.mxu0 0.0
          %1591 = vmatpush1.msra.mxu0 0.0
          %1592 = vmatprep.subr.mxu0 0.0
          %1593 = vmatpush1.msra.mxu0 0.0
          %1594 = vmatprep.subr.mxu0 0.0
          %1595 = vmatpush1.msra.mxu0 0.0
          %1596 = vmatprep.subr.mxu0 0.0
          %1597 = vmatpush1.msra.mxu0 0.0
          %1598 = vmatprep.subr.mxu0 0.0
          %1599 = vmatpush1.msra.mxu0 0.0
          %1600 = vmatprep.subr.mxu0 0.0
          %1601 = vmatpush1.msra.mxu0 0.0
          %1602 = vmatprep.subr.mxu0 0.0
          %1603 = vmatpush1.msra.mxu0 0.0
          %1604 = vmatprep.subr.mxu0 0.0
          %1605 = vmatpush1.msra.mxu0 %v1426
          %1606 = vmatprep.subr.mxu0 0.0
          %1607 = vmatpush1.msra.mxu0 %v1425
          %1608 = vmatprep.subr.mxu0 0.0
          %1609 = vmatpush1.msra.mxu0 %v1424
          %1610 = vmatprep.subr.mxu0 0.0
          %1611 = vmatpush1.msra.mxu0 %v1423
          %1612 = vmatprep.subr.mxu0 0.0
          %1613 = vmatpush2.msra.mxu0 0.0
          %1614 = vmatprep.subr.mxu0 0.0
          %1615 = vmatpush2.msra.mxu0 0.0
          %1616 = vmatprep.subr.mxu0 0.0
          %1617 = vmatpush2.msra.mxu0 0.0
          %1618 = vmatprep.subr.mxu0 0.0
          %1619 = vmatpush2.msra.mxu0 0.0
          %1620 = vmatprep.subr.mxu0 0.0
          %1621 = vmatpush2.msra.mxu0 0.0
          %1622 = vmatprep.subr.mxu0 0.0
          %1623 = vmatpush2.msra.mxu0 0.0
          %1624 = vmatprep.subr.mxu0 0.0
          %1625 = vmatpush2.msra.mxu0 0.0
          %1626 = vmatprep.subr.mxu0 0.0
          %1627 = vmatpush2.msra.mxu0 0.0
          %1628 = vmatprep.subr.mxu0 0.0
          %1629 = vmatpush2.msra.mxu0 0.0
          %1630 = vmatprep.subr.mxu0 0.0
          %1631 = vmatpush2.msra.mxu0 0.0
          %1632 = vmatprep.subr.mxu0 0.0
          %1633 = vmatpush2.msra.mxu0 0.0
          %1634 = vmatprep.subr.mxu0 0.0
          %1635 = vmatpush2.msra.mxu0 0.0
          %1636 = vmatprep.subr.mxu0 0.0
          %1637 = vmatpush2.msra.mxu0 0.0
          %1638 = vmatprep.subr.mxu0 0.0
          %1639 = vmatpush2.msra.mxu0 0.0
          %1640 = vmatprep.subr.mxu0 0.0
          %1641 = vmatpush2.msra.mxu0 0.0
          %1642 = vmatprep.subr.mxu0 0.0
          %1643 = vmatpush2.msra.mxu0 0.0
          %1644 = vmatprep.mubr.f32.mxu0 0.0
          %1645 = vmatmul.mubr.f32.gmra.mxu0 %v1578
          %v1646 = vpop.f32.mrf.mxu0
          %v1647 = vadd.f32 0.0, %v1646
          %v1648 = vpop.f32.mrf.mxu0
          %1649 = vdwg.mxu0
          %v1650 = vadd.f32 %v1574, %v1647
          %v1652 = vsel %vm1160, %v1414, 0
          %1654 = vmatprep.subr.mxu0 0.0
          %1655 = vmatpush1.msra.mxu0 0.0
          %1656 = vmatprep.subr.mxu0 0.0
          %1657 = vmatpush1.msra.mxu0 0.0
          %1658 = vmatprep.subr.mxu0 0.0
          %1659 = vmatpush1.msra.mxu0 0.0
          %1660 = vmatprep.subr.mxu0 0.0
          %1661 = vmatpush1.msra.mxu0 0.0
          %1662 = vmatprep.subr.mxu0 0.0
          %1663 = vmatpush1.msra.mxu0 0.0
          %1664 = vmatprep.subr.mxu0 0.0
          %1665 = vmatpush1.msra.mxu0 0.0
          %1666 = vmatprep.subr.mxu0 0.0
          %1667 = vmatpush1.msra.mxu0 0.0
          %1668 = vmatprep.subr.mxu0 0.0
          %1669 = vmatpush1.msra.mxu0 0.0
          %1670 = vmatprep.subr.mxu0 0.0
          %1671 = vmatpush1.msra.mxu0 0.0
          %1672 = vmatprep.subr.mxu0 0.0
          %1673 = vmatpush1.msra.mxu0 0.0
          %1674 = vmatprep.subr.mxu0 0.0
          %1675 = vmatpush1.msra.mxu0 0.0
          %1676 = vmatprep.subr.mxu0 0.0
          %1677 = vmatpush1.msra.mxu0 0.0
          %1678 = vmatprep.subr.mxu0 0.0
          %1679 = vmatpush1.msra.mxu0 %v1430
          %1680 = vmatprep.subr.mxu0 0.0
          %1681 = vmatpush1.msra.mxu0 %v1429
          %1682 = vmatprep.subr.mxu0 0.0
          %1683 = vmatpush1.msra.mxu0 %v1428
          %1684 = vmatprep.subr.mxu0 0.0
          %1685 = vmatpush1.msra.mxu0 %v1427
          %1686 = vmatprep.subr.mxu0 0.0
          %1687 = vmatpush2.msra.mxu0 0.0
          %1688 = vmatprep.subr.mxu0 0.0
          %1689 = vmatpush2.msra.mxu0 0.0
          %1690 = vmatprep.subr.mxu0 0.0
          %1691 = vmatpush2.msra.mxu0 0.0
          %1692 = vmatprep.subr.mxu0 0.0
          %1693 = vmatpush2.msra.mxu0 0.0
          %1694 = vmatprep.subr.mxu0 0.0
          %1695 = vmatpush2.msra.mxu0 0.0
          %1696 = vmatprep.subr.mxu0 0.0
          %1697 = vmatpush2.msra.mxu0 0.0
          %1698 = vmatprep.subr.mxu0 0.0
          %1699 = vmatpush2.msra.mxu0 0.0
          %1700 = vmatprep.subr.mxu0 0.0
          %1701 = vmatpush2.msra.mxu0 0.0
          %1702 = vmatprep.subr.mxu0 0.0
          %1703 = vmatpush2.msra.mxu0 0.0
          %1704 = vmatprep.subr.mxu0 0.0
          %1705 = vmatpush2.msra.mxu0 0.0
          %1706 = vmatprep.subr.mxu0 0.0
          %1707 = vmatpush2.msra.mxu0 0.0
          %1708 = vmatprep.subr.mxu0 0.0
          %1709 = vmatpush2.msra.mxu0 0.0
          %1710 = vmatprep.subr.mxu0 0.0
          %1711 = vmatpush2.msra.mxu0 0.0
          %1712 = vmatprep.subr.mxu0 0.0
          %1713 = vmatpush2.msra.mxu0 0.0
          %1714 = vmatprep.subr.mxu0 0.0
          %1715 = vmatpush2.msra.mxu0 0.0
          %1716 = vmatprep.subr.mxu0 0.0
          %1717 = vmatpush2.msra.mxu0 0.0
          %1718 = vmatprep.mubr.f32.mxu0 0.0
          %1719 = vmatmul.mubr.f32.gmra.mxu0 %v1652
          %v1720 = vpop.f32.mrf.mxu0
          %v1721 = vadd.f32 0.0, %v1720
          %v1722 = vpop.f32.mrf.mxu0
          %1723 = vdwg.mxu0
          %v1724 = vadd.f32 %v1650, %v1721
          %v1725 = vld [vmem:[#allocation24] sm:$0x1]
          %v1726 = vadd.f32 %v1724, %v1725
          %v1727 = vadd.f32 %v1361, %v1726
          %vm1728 = vcmask 122880
          %1729 = vst.msk [vmem:[#allocation4] sm:$0x1] %vm1728, %v1727
          %vm1730 = vcmask 123904
          %1731 = vst.msk [vmem:[#allocation5] sm:$0x3] %vm1730, 0.0
          %1732 = vst.msk [vmem:[#allocation5 + $0x2] sm:$0x1] %vm1728, inf
          %1733 = vst.msk [vmem:[#allocation5 + $0x3] sm:$0x1] %vm1728, -inf
        $region176: #{tpu_custom_call.1} parent=111 // pred_fallthru
          _
        %s1734 = smul.u32 %s60, 8
        %s1735 = scalar_lea.vmem [#allocation2], %s1734
        %v1736 = vld [vmem:[%s1735] sm:$0xff]
        %v1737 = vmul.f32 %v1736, 0.35355338
        %v1738 = vld [vmem:[#allocation2] sm:$0xff]
        %v1739 = vld [vmem:[#allocation2 + $0x8] sm:$0xff]
        %v1741 = vcombine.high %v1114, %v1114
        %v1743 = vunpack.c.l.s4 1966171168
        %v1744 = vunpack.c.0.s8 %v1743
        %v1745 = vlaneseq
        %v1746 = vshrl.u32 %v1745, 7
        %v1747 = vsub.s32 %v1744, %v1746
        %v1748 = vrot.slane %v1114, %v1747
        %v1750 = vunpack.c.l.s4 1966171168
        %v1751 = vunpack.c.0.s8 %v1750
        %v1752 = vlaneseq
        %v1753 = vshrl.u32 %v1752, 7
        %v1754 = vsub.s32 %v1751, %v1753
        %v1755 = vrot.slane %v1741, %v1754
        %v1756 = vcombine.high %v1748, %v1748
        %v1757 = vcombine.high %v1755, %v1755
        %v1759 = vunpack.c.l.s4 1966171168
        %v1760 = vunpack.c.0.s8 %v1759
        %v1761 = vlaneseq
        %v1762 = vshrl.u32 %v1761, 7
        %v1763 = vsub.s32 %v1760, %v1762
        %v1764 = vrot.slane %v1748, %v1763
        %v1766 = vunpack.c.l.s4 1966171168
        %v1767 = vunpack.c.0.s8 %v1766
        %v1768 = vlaneseq
        %v1769 = vshrl.u32 %v1768, 7
        %v1770 = vsub.s32 %v1767, %v1769
        %v1771 = vrot.slane %v1755, %v1770
        %v1773 = vunpack.c.l.s4 1966171168
        %v1774 = vunpack.c.0.s8 %v1773
        %v1775 = vlaneseq
        %v1776 = vshrl.u32 %v1775, 7
        %v1777 = vsub.s32 %v1774, %v1776
        %v1778 = vrot.slane %v1756, %v1777
        %v1780 = vunpack.c.l.s4 1966171168
        %v1781 = vunpack.c.0.s8 %v1780
        %v1782 = vlaneseq
        %v1783 = vshrl.u32 %v1782, 7
        %v1784 = vsub.s32 %v1781, %v1783
        %v1785 = vrot.slane %v1757, %v1784
        %v1786 = vcombine.high %v1764, %v1764
        %v1787 = vcombine.high %v1771, %v1771
        %v1788 = vcombine.high %v1778, %v1778
        %v1789 = vcombine.high %v1785, %v1785
        %v1790 = vlaneseq
        %v1791 = vshrl.u32 %v1790, 7
        %v1792 = vsub.s32 0, %v1791
        %v1793 = vrot.slane %v1113, %v1792
        %1795 = vbcast.lane.b32.xlu0 %v1793, 256
        %v1796 = vpop.permute.xlu0 %1795
        %s1798 = sor.u32 256, 8
        %1799 = vbcast.lane.b32.xlu0 %v1793, %s1798
        %v1800 = vpop.permute.xlu0 %1799
        %v1801 = vlaneseq
        %v1802 = vshrl.u32 %v1801, 7
        %v1803 = vsub.s32 0, %v1802
        %v1804 = vrot.slane %v1764, %v1803
        %v1805 = vlaneseq
        %v1806 = vshrl.u32 %v1805, 7
        %v1807 = vsub.s32 0, %v1806
        %v1808 = vrot.slane %v1778, %v1807
        %v1809 = vlaneseq
        %v1810 = vshrl.u32 %v1809, 7
        %v1811 = vsub.s32 0, %v1810
        %v1812 = vrot.slane %v1786, %v1811
        %v1813 = vlaneseq
        %v1814 = vshrl.u32 %v1813, 7
        %v1815 = vsub.s32 0, %v1814
        %v1816 = vrot.slane %v1788, %v1815
        %v1817 = vlaneseq
        %v1818 = vshrl.u32 %v1817, 7
        %v1819 = vsub.s32 0, %v1818
        %v1820 = vrot.slane %v1771, %v1819
        %v1821 = vlaneseq
        %v1822 = vshrl.u32 %v1821, 7
        %v1823 = vsub.s32 0, %v1822
        %v1824 = vrot.slane %v1785, %v1823
        %v1825 = vlaneseq
        %v1826 = vshrl.u32 %v1825, 7
        %v1827 = vsub.s32 0, %v1826
        %v1828 = vrot.slane %v1787, %v1827
        %v1829 = vlaneseq
        %v1830 = vshrl.u32 %v1829, 7
        %v1831 = vsub.s32 0, %v1830
        %v1832 = vrot.slane %v1789, %v1831
        %v1841 = vmul.f32 %v1804, %v1796
        %v1842 = vmul.f32 %v1804, %v1800
        %v1843 = vmul.f32 %v1808, %v1796
        %v1844 = vmul.f32 %v1808, %v1800
        %v1845 = vmul.f32 %v1812, %v1796
        %v1846 = vmul.f32 %v1812, %v1800
        %v1847 = vmul.f32 %v1816, %v1796
        %v1848 = vmul.f32 %v1816, %v1800
        %v1849 = vmul.f32 %v1820, %v1796
        %v1850 = vmul.f32 %v1820, %v1800
        %v1851 = vmul.f32 %v1824, %v1796
        %v1852 = vmul.f32 %v1824, %v1800
        %v1853 = vmul.f32 %v1828, %v1796
        %v1854 = vmul.f32 %v1828, %v1800
        %v1855 = vmul.f32 %v1832, %v1796
        %v1856 = vmul.f32 %v1832, %v1800
        %v1857 = vld [vmem:[%s1101] sm:$0xf]
        %v1858 = vld [vmem:[%s1101 + $0x4] sm:$0xf]
        %v1859 = vld [vmem:[%s1101 + $0x8] sm:$0xf]
        %v1860 = vld [vmem:[%s1101 + $0xc] sm:$0xf]
        %v1861 = vld [vmem:[%s1101 + $0x10] sm:$0xf]
        %v1862 = vld [vmem:[%s1101 + $0x14] sm:$0xf]
        %v1863 = vld [vmem:[%s1101 + $0x18] sm:$0xf]
        %v1864 = vld [vmem:[%s1101 + $0x1c] sm:$0xf]
        %v1865 = vld [vmem:[%s1101 + $0x20] sm:$0xf]
        %v1866 = vld [vmem:[%s1101 + $0x24] sm:$0xf]
        %v1867 = vld [vmem:[%s1101 + $0x28] sm:$0xf]
        %v1868 = vld [vmem:[%s1101 + $0x2c] sm:$0xf]
        %v1869 = vld [vmem:[%s1101 + $0x30] sm:$0xf]
        %v1870 = vld [vmem:[%s1101 + $0x34] sm:$0xf]
        %v1871 = vld [vmem:[%s1101 + $0x38] sm:$0xf]
        %v1872 = vld [vmem:[%s1101 + $0x3c] sm:$0xf]
        %v1874 = vcombine.high %v1737, %v1737
        %v1876 = vunpack.c.l.s4 1966171168
        %v1877 = vunpack.c.0.s8 %v1876
        %v1878 = vlaneseq
        %v1879 = vshrl.u32 %v1878, 7
        %v1880 = vsub.s32 %v1877, %v1879
        %v1881 = vrot.slane %v1737, %v1880
        %v1883 = vunpack.c.l.s4 1966171168
        %v1884 = vunpack.c.0.s8 %v1883
        %v1885 = vlaneseq
        %v1886 = vshrl.u32 %v1885, 7
        %v1887 = vsub.s32 %v1884, %v1886
        %v1888 = vrot.slane %v1874, %v1887
        %v1889 = vcombine.high %v1881, %v1881
        %v1890 = vcombine.high %v1888, %v1888
        %v1892 = vunpack.c.l.s4 1966171168
        %v1893 = vunpack.c.0.s8 %v1892
        %v1894 = vlaneseq
        %v1895 = vshrl.u32 %v1894, 7
        %v1896 = vsub.s32 %v1893, %v1895
        %v1897 = vrot.slane %v1881, %v1896
        %v1899 = vunpack.c.l.s4 1966171168
        %v1900 = vunpack.c.0.s8 %v1899
        %v1901 = vlaneseq
        %v1902 = vshrl.u32 %v1901, 7
        %v1903 = vsub.s32 %v1900, %v1902
        %v1904 = vrot.slane %v1888, %v1903
        %v1906 = vunpack.c.l.s4 1966171168
        %v1907 = vunpack.c.0.s8 %v1906
        %v1908 = vlaneseq
        %v1909 = vshrl.u32 %v1908, 7
        %v1910 = vsub.s32 %v1907, %v1909
        %v1911 = vrot.slane %v1889, %v1910
        %v1913 = vunpack.c.l.s4 1966171168
        %v1914 = vunpack.c.0.s8 %v1913
        %v1915 = vlaneseq
        %v1916 = vshrl.u32 %v1915, 7
        %v1917 = vsub.s32 %v1914, %v1916
        %v1918 = vrot.slane %v1890, %v1917
        %v1919 = vcombine.high %v1897, %v1897
        %v1920 = vcombine.high %v1904, %v1904
        %v1921 = vcombine.high %v1911, %v1911
        %v1922 = vcombine.high %v1918, %v1918
        %v1923 = vlaneseq
        %v1924 = vshrl.u32 %v1923, 7
        %v1925 = vsub.s32 0, %v1924
        %v1926 = vrot.slane %v1897, %v1925
        %v1927 = vlaneseq
        %v1928 = vshrl.u32 %v1927, 7
        %v1929 = vsub.s32 0, %v1928
        %v1930 = vrot.slane %v1911, %v1929
        %v1931 = vlaneseq
        %v1932 = vshrl.u32 %v1931, 7
        %v1933 = vsub.s32 0, %v1932
        %v1934 = vrot.slane %v1919, %v1933
        %v1935 = vlaneseq
        %v1936 = vshrl.u32 %v1935, 7
        %v1937 = vsub.s32 0, %v1936
        %v1938 = vrot.slane %v1921, %v1937
        %v1939 = vlaneseq
        %v1940 = vshrl.u32 %v1939, 7
        %v1941 = vsub.s32 0, %v1940
        %v1942 = vrot.slane %v1904, %v1941
        %v1943 = vlaneseq
        %v1944 = vshrl.u32 %v1943, 7
        %v1945 = vsub.s32 0, %v1944
        %v1946 = vrot.slane %v1918, %v1945
        %v1947 = vlaneseq
        %v1948 = vshrl.u32 %v1947, 7
        %v1949 = vsub.s32 0, %v1948
        %v1950 = vrot.slane %v1920, %v1949
        %v1951 = vlaneseq
        %v1952 = vshrl.u32 %v1951, 7
        %v1953 = vsub.s32 0, %v1952
        %v1954 = vrot.slane %v1922, %v1953
        %1965 = vrot.lane.b32.xlu0 %v1738, 96
        %v1966 = vpop.permute.xlu0 %1965
        %1967 = vrot.lane.b32.xlu0 %v1739, 96
        %v1968 = vpop.permute.xlu0 %1967
        %v1971 = vmul.f32 %v1926, %v1966
        %v1972 = vmul.f32 %v1926, %v1968
        %v1973 = vmul.f32 %v1930, %v1966
        %v1974 = vmul.f32 %v1930, %v1968
        %v1975 = vmul.f32 %v1934, %v1966
        %v1976 = vmul.f32 %v1934, %v1968
        %v1977 = vmul.f32 %v1938, %v1966
        %v1978 = vmul.f32 %v1938, %v1968
        %v1979 = vmul.f32 %v1942, %v1966
        %v1980 = vmul.f32 %v1942, %v1968
        %v1981 = vmul.f32 %v1946, %v1966
        %v1982 = vmul.f32 %v1946, %v1968
        %v1983 = vmul.f32 %v1950, %v1966
        %v1984 = vmul.f32 %v1950, %v1968
        %v1985 = vmul.f32 %v1954, %v1966
        %v1986 = vmul.f32 %v1954, %v1968
        %v1987 = vld [vmem:[#allocation15] sm:$0xf]
        %v1988 = vld [vmem:[#allocation15 + $0x4] sm:$0xf]
        %v1989 = vld [vmem:[#allocation17] sm:$0x1]
        %v1991 = vlaneseq
        %v1992 = vshrl.u32 %v1991, 7
        %v1993 = vsub.s32 0, %v1992
        %v1994 = vrot.slane %v1989, %v1993
        %v2012 = vunpack.c.l.b16 %v1857
        %v2013 = vunpack.c.l.b16 %v1858
        %v2014 = vunpack.c.l.b16 %v1859
        %v2015 = vunpack.c.l.b16 %v1860
        %v2016 = vunpack.c.l.b16 %v1861
        %v2017 = vunpack.c.l.b16 %v1862
        %v2018 = vunpack.c.l.b16 %v1863
        %v2019 = vunpack.c.l.b16 %v1864
        %v2020 = vunpack.c.l.b16 %v1865
        %v2021 = vunpack.c.l.b16 %v1866
        %v2022 = vunpack.c.l.b16 %v1867
        %v2023 = vunpack.c.l.b16 %v1868
        %v2024 = vunpack.c.l.b16 %v1869
        %v2025 = vunpack.c.l.b16 %v1870
        %v2026 = vunpack.c.l.b16 %v1871
        %v2027 = vunpack.c.l.b16 %v1872
        %v2028 = vpack.c.b16 %v2013, %v2012
        %v2029 = vpack.c.b16 %v2015, %v2014
        %v2030 = vpack.c.b16 %v2017, %v2016
        %v2031 = vpack.c.b16 %v2019, %v2018
        %v2032 = vpack.c.b16 %v2021, %v2020
        %v2033 = vpack.c.b16 %v2023, %v2022
        %v2034 = vpack.c.b16 %v2025, %v2024
        %v2035 = vpack.c.b16 %v2027, %v2026
        %v2038 = vunpack.c.l.b16 %v1987
        %v2039 = vunpack.c.l.b16 %v1988
        %v2040 = vpack.c.b16 %v2039, %v2038
        %vm2042 = vcmask 130048
        %v2044 = vsel %vm2042, %v2028, 0
        %v2047 = vsel %vm2042, %v2029, 0
        %v2050 = vsel %vm2042, %v2030, 0
        %v2053 = vsel %vm2042, %v2031, 0
        %v2056 = vsel %vm2042, %v2032, 0
        %v2059 = vsel %vm2042, %v2033, 0
        %v2062 = vsel %vm2042, %v2034, 0
        %v2065 = vsel %vm2042, %v2035, 0
        %2067 = vmatprep.subr.bf16.mxu0 0
        %2068 = vmatpush1.bf16.msra.mxu0 0
        %2069 = vmatprep.subr.bf16.mxu0 0
        %2070 = vmatpush1.bf16.msra.mxu0 0
        %2071 = vmatprep.subr.bf16.mxu0 0
        %2072 = vmatpush1.bf16.msra.mxu0 0
        %2073 = vmatprep.subr.bf16.mxu0 0
        %2074 = vmatpush1.bf16.msra.mxu0 0
        %2075 = vmatprep.subr.bf16.mxu0 0
        %2076 = vmatpush1.bf16.msra.mxu0 0
        %2077 = vmatprep.subr.bf16.mxu0 0
        %2078 = vmatpush1.bf16.msra.mxu0 0
        %2079 = vmatprep.subr.bf16.mxu0 0
        %2080 = vmatpush1.bf16.msra.mxu0 0
        %2081 = vmatprep.subr.bf16.mxu0 0
        %2082 = vmatpush1.bf16.msra.mxu0 %v2040
        %2083 = vmatprep.subr.bf16.mxu0 0
        %2084 = vmatpush2.bf16.msra.mxu0 0
        %2085 = vmatprep.subr.bf16.mxu0 0
        %2086 = vmatpush2.bf16.msra.mxu0 0
        %2087 = vmatprep.subr.bf16.mxu0 0
        %2088 = vmatpush2.bf16.msra.mxu0 0
        %2089 = vmatprep.subr.bf16.mxu0 0
        %2090 = vmatpush2.bf16.msra.mxu0 0
        %2091 = vmatprep.subr.bf16.mxu0 0
        %2092 = vmatpush2.bf16.msra.mxu0 0
        %2093 = vmatprep.subr.bf16.mxu0 0
        %2094 = vmatpush2.bf16.msra.mxu0 0
        %2095 = vmatprep.subr.bf16.mxu0 0
        %2096 = vmatpush2.bf16.msra.mxu0 0
        %2097 = vmatprep.subr.bf16.mxu0 0
        %2098 = vmatpush2.bf16.msra.mxu0 0
        %2099 = vmatprep.mubr.bf16.mxu0 0
        %2100 = vmatmul.mubr.bf16.gmra.mxu0 %v2044
        %v2101 = vpop.f32.mrf.mxu0
        %v2102 = vadd.f32 %v1994, %v2101
        %v2103 = vpop.f32.mrf.mxu0
        %v2104 = vpop.f32.mrf.mxu0
        %v2105 = vadd.f32 %v1994, %v2104
        %v2106 = vpop.f32.mrf.mxu0
        %2107 = vmatprep.mubr.bf16.mxu0 0
        %2108 = vmatmul.mubr.bf16.gmra.mxu0 %v2047
        %v2109 = vpop.f32.mrf.mxu0
        %v2110 = vadd.f32 %v1994, %v2109
        %v2111 = vpop.f32.mrf.mxu0
        %v2112 = vpop.f32.mrf.mxu0
        %v2113 = vadd.f32 %v1994, %v2112
        %v2114 = vpop.f32.mrf.mxu0
        %2115 = vmatprep.mubr.bf16.mxu0 0
        %2116 = vmatmul.mubr.bf16.gmra.mxu0 %v2050
        %v2117 = vpop.f32.mrf.mxu0
        %v2118 = vadd.f32 %v1994, %v2117
        %v2119 = vpop.f32.mrf.mxu0
        %v2120 = vpop.f32.mrf.mxu0
        %v2121 = vadd.f32 %v1994, %v2120
        %v2122 = vpop.f32.mrf.mxu0
        %2123 = vmatprep.mubr.bf16.mxu0 0
        %2124 = vmatmul.mubr.bf16.gmra.mxu0 %v2053
        %v2125 = vpop.f32.mrf.mxu0
        %v2126 = vadd.f32 %v1994, %v2125
        %v2127 = vpop.f32.mrf.mxu0
        %v2128 = vpop.f32.mrf.mxu0
        %v2129 = vadd.f32 %v1994, %v2128
        %v2130 = vpop.f32.mrf.mxu0
        %2131 = vmatprep.mubr.bf16.mxu0 0
        %2132 = vmatmul.mubr.bf16.gmra.mxu0 %v2056
        %v2133 = vpop.f32.mrf.mxu0
        %v2134 = vadd.f32 %v1994, %v2133
        %v2135 = vpop.f32.mrf.mxu0
        %v2136 = vpop.f32.mrf.mxu0
        %v2137 = vadd.f32 %v1994, %v2136
        %v2138 = vpop.f32.mrf.mxu0
        %2139 = vmatprep.mubr.bf16.mxu0 0
        %2140 = vmatmul.mubr.bf16.gmra.mxu0 %v2059
        %v2141 = vpop.f32.mrf.mxu0
        %v2142 = vadd.f32 %v1994, %v2141
        %v2143 = vpop.f32.mrf.mxu0
        %v2144 = vpop.f32.mrf.mxu0
        %v2145 = vadd.f32 %v1994, %v2144
        %v2146 = vpop.f32.mrf.mxu0
        %2147 = vmatprep.mubr.bf16.mxu0 0
        %2148 = vmatmul.mubr.bf16.gmra.mxu0 %v2062
        %v2149 = vpop.f32.mrf.mxu0
        %v2150 = vadd.f32 %v1994, %v2149
        %v2151 = vpop.f32.mrf.mxu0
        %v2152 = vpop.f32.mrf.mxu0
        %v2153 = vadd.f32 %v1994, %v2152
        %v2154 = vpop.f32.mrf.mxu0
        %2155 = vmatprep.mubr.bf16.mxu0 0
        %2156 = vmatmul.mubr.bf16.gmra.mxu0 %v2065
        %v2157 = vpop.f32.mrf.mxu0
        %v2158 = vadd.f32 %v1994, %v2157
        %v2159 = vpop.f32.mrf.mxu0
        %v2160 = vpop.f32.mrf.mxu0
        %v2161 = vadd.f32 %v1994, %v2160
        %v2162 = vpop.f32.mrf.mxu0
        %2163 = vdwg.mxu0
        %2165 = vset.pattern.permute.xlu0 0
        %2166 = vperm.xlu0 %2165, %v1841
        %v2167 = vpop.permute.xlu0 %2166
        %2170 = vset.pattern.permute.xlu0 0
        %2171 = vperm.xlu0 %2170, %v1842
        %v2172 = vpop.permute.xlu0 %2171
        %2175 = vset.pattern.permute.xlu0 0
        %2176 = vperm.xlu0 %2175, %v1843
        %v2177 = vpop.permute.xlu0 %2176
        %2180 = vset.pattern.permute.xlu0 0
        %2181 = vperm.xlu0 %2180, %v1844
        %v2182 = vpop.permute.xlu0 %2181
        %2185 = vset.pattern.permute.xlu0 0
        %2186 = vperm.xlu0 %2185, %v1845
        %v2187 = vpop.permute.xlu0 %2186
        %2190 = vset.pattern.permute.xlu0 0
        %2191 = vperm.xlu0 %2190, %v1846
        %v2192 = vpop.permute.xlu0 %2191
        %2195 = vset.pattern.permute.xlu0 0
        %2196 = vperm.xlu0 %2195, %v1847
        %v2197 = vpop.permute.xlu0 %2196
        %2200 = vset.pattern.permute.xlu0 0
        %2201 = vperm.xlu0 %2200, %v1848
        %v2202 = vpop.permute.xlu0 %2201
        %2205 = vset.pattern.permute.xlu0 0
        %2206 = vperm.xlu0 %2205, %v1849
        %v2207 = vpop.permute.xlu0 %2206
        %2210 = vset.pattern.permute.xlu0 0
        %2211 = vperm.xlu0 %2210, %v1850
        %v2212 = vpop.permute.xlu0 %2211
        %2215 = vset.pattern.permute.xlu0 0
        %2216 = vperm.xlu0 %2215, %v1851
        %v2217 = vpop.permute.xlu0 %2216
        %2220 = vset.pattern.permute.xlu0 0
        %2221 = vperm.xlu0 %2220, %v1852
        %v2222 = vpop.permute.xlu0 %2221
        %2225 = vset.pattern.permute.xlu0 0
        %2226 = vperm.xlu0 %2225, %v1853
        %v2227 = vpop.permute.xlu0 %2226
        %2230 = vset.pattern.permute.xlu0 0
        %2231 = vperm.xlu0 %2230, %v1854
        %v2232 = vpop.permute.xlu0 %2231
        %2235 = vset.pattern.permute.xlu0 0
        %2236 = vperm.xlu0 %2235, %v1855
        %v2237 = vpop.permute.xlu0 %2236
        %2240 = vset.pattern.permute.xlu0 0
        %2241 = vperm.xlu0 %2240, %v1856
        %v2242 = vpop.permute.xlu0 %2241
        %v2244 = vmul.f32 %v2102, %v2167
        %v2245 = vmul.f32 %v2105, %v2172
        %v2246 = vmul.f32 %v2110, %v2177
        %v2247 = vmul.f32 %v2113, %v2182
        %v2248 = vmul.f32 %v2118, %v2187
        %v2249 = vmul.f32 %v2121, %v2192
        %v2250 = vmul.f32 %v2126, %v2197
        %v2251 = vmul.f32 %v2129, %v2202
        %v2252 = vmul.f32 %v2134, %v2207
        %v2253 = vmul.f32 %v2137, %v2212
        %v2254 = vmul.f32 %v2142, %v2217
        %v2255 = vmul.f32 %v2145, %v2222
        %v2256 = vmul.f32 %v2150, %v2227
        %v2257 = vmul.f32 %v2153, %v2232
        %v2258 = vmul.f32 %v2158, %v2237
        %v2259 = vmul.f32 %v2161, %v2242
        %v2260 = vadd.f32 %v2244, 1.0
        %v2261 = vadd.f32 %v2245, 1.0
        %v2262 = vadd.f32 %v2246, 1.0
        %v2263 = vadd.f32 %v2247, 1.0
        %v2264 = vadd.f32 %v2248, 1.0
        %v2265 = vadd.f32 %v2249, 1.0
        %v2266 = vadd.f32 %v2250, 1.0
        %v2267 = vadd.f32 %v2251, 1.0
        %v2268 = vadd.f32 %v2252, 1.0
        %v2269 = vadd.f32 %v2253, 1.0
        %v2270 = vadd.f32 %v2254, 1.0
        %v2271 = vadd.f32 %v2255, 1.0
        %v2272 = vadd.f32 %v2256, 1.0
        %v2273 = vadd.f32 %v2257, 1.0
        %v2274 = vadd.f32 %v2258, 1.0
        %v2275 = vadd.f32 %v2259, 1.0
        %v2276 = vmul.f32 %v1971, %v2260
        %v2277 = vmul.f32 %v1972, %v2261
        %v2278 = vmul.f32 %v1973, %v2262
        %v2279 = vmul.f32 %v1974, %v2263
        %v2280 = vmul.f32 %v1975, %v2264
        %v2281 = vmul.f32 %v1976, %v2265
        %v2282 = vmul.f32 %v1977, %v2266
        %v2283 = vmul.f32 %v1978, %v2267
        %v2284 = vmul.f32 %v1979, %v2268
        %v2285 = vmul.f32 %v1980, %v2269
        %v2286 = vmul.f32 %v1981, %v2270
        %v2287 = vmul.f32 %v1982, %v2271
        %v2288 = vmul.f32 %v1983, %v2272
        %v2289 = vmul.f32 %v1984, %v2273
        %v2290 = vmul.f32 %v1985, %v2274
        %v2291 = vmul.f32 %v1986, %v2275
        %2308 = vrot.lane.b32.xlu0 %v2244, 96
        %v2309 = vpop.permute.xlu0 %2308
        %2310 = vrot.lane.b32.xlu0 %v2245, 96
        %v2311 = vpop.permute.xlu0 %2310
        %2312 = vrot.lane.b32.xlu0 %v2246, 96
        %v2313 = vpop.permute.xlu0 %2312
        %2314 = vrot.lane.b32.xlu0 %v2247, 96
        %v2315 = vpop.permute.xlu0 %2314
        %2316 = vrot.lane.b32.xlu0 %v2248, 96
        %v2317 = vpop.permute.xlu0 %2316
        %2318 = vrot.lane.b32.xlu0 %v2249, 96
        %v2319 = vpop.permute.xlu0 %2318
        %2320 = vrot.lane.b32.xlu0 %v2250, 96
        %v2321 = vpop.permute.xlu0 %2320
        %2322 = vrot.lane.b32.xlu0 %v2251, 96
        %v2323 = vpop.permute.xlu0 %2322
        %2324 = vrot.lane.b32.xlu0 %v2252, 96
        %v2325 = vpop.permute.xlu0 %2324
        %2326 = vrot.lane.b32.xlu0 %v2253, 96
        %v2327 = vpop.permute.xlu0 %2326
        %2328 = vrot.lane.b32.xlu0 %v2254, 96
        %v2329 = vpop.permute.xlu0 %2328
        %2330 = vrot.lane.b32.xlu0 %v2255, 96
        %v2331 = vpop.permute.xlu0 %2330
        %2332 = vrot.lane.b32.xlu0 %v2256, 96
        %v2333 = vpop.permute.xlu0 %2332
        %2334 = vrot.lane.b32.xlu0 %v2257, 96
        %v2335 = vpop.permute.xlu0 %2334
        %2336 = vrot.lane.b32.xlu0 %v2258, 96
        %v2337 = vpop.permute.xlu0 %2336
        %2338 = vrot.lane.b32.xlu0 %v2259, 96
        %v2339 = vpop.permute.xlu0 %2338
        %v2356 = vadd.f32 %v2276, %v2309
        %v2357 = vadd.f32 %v2277, %v2311
        %v2358 = vadd.f32 %v2278, %v2313
        %v2359 = vadd.f32 %v2279, %v2315
        %v2360 = vadd.f32 %v2280, %v2317
        %v2361 = vadd.f32 %v2281, %v2319
        %v2362 = vadd.f32 %v2282, %v2321
        %v2363 = vadd.f32 %v2283, %v2323
        %v2364 = vadd.f32 %v2284, %v2325
        %v2365 = vadd.f32 %v2285, %v2327
        %v2366 = vadd.f32 %v2286, %v2329
        %v2367 = vadd.f32 %v2287, %v2331
        %v2368 = vadd.f32 %v2288, %v2333
        %v2369 = vadd.f32 %v2289, %v2335
        %v2370 = vadd.f32 %v2290, %v2337
        %v2371 = vadd.f32 %v2291, %v2339
        %v2372 = vld [vmem:[#allocation3] sm:$0x1]
        %v2373 = vadd.f32 %v2372, 1.0
        %v2375 = vlaneseq
        %v2376 = vshrl.u32 %v2375, 7
        %v2377 = vsub.s32 0, %v2376
        %v2378 = vrot.slane %v2373, %v2377
        %2396 = vrot.lane.b32.xlu0 %v2356, 32
        %v2397 = vpop.permute.xlu0 %2396
        %2398 = vrot.lane.b32.xlu0 %v2357, 32
        %v2399 = vpop.permute.xlu0 %2398
        %2400 = vrot.lane.b32.xlu0 %v2358, 32
        %v2401 = vpop.permute.xlu0 %2400
        %2402 = vrot.lane.b32.xlu0 %v2359, 32
        %v2403 = vpop.permute.xlu0 %2402
        %2404 = vrot.lane.b32.xlu0 %v2360, 32
        %v2405 = vpop.permute.xlu0 %2404
        %2406 = vrot.lane.b32.xlu0 %v2361, 32
        %v2407 = vpop.permute.xlu0 %2406
        %2408 = vrot.lane.b32.xlu0 %v2362, 32
        %v2409 = vpop.permute.xlu0 %2408
        %2410 = vrot.lane.b32.xlu0 %v2363, 32
        %v2411 = vpop.permute.xlu0 %2410
        %2412 = vrot.lane.b32.xlu0 %v2364, 32
        %v2413 = vpop.permute.xlu0 %2412
        %2414 = vrot.lane.b32.xlu0 %v2365, 32
        %v2415 = vpop.permute.xlu0 %2414
        %2416 = vrot.lane.b32.xlu0 %v2366, 32
        %v2417 = vpop.permute.xlu0 %2416
        %2418 = vrot.lane.b32.xlu0 %v2367, 32
        %v2419 = vpop.permute.xlu0 %2418
        %2420 = vrot.lane.b32.xlu0 %v2368, 32
        %v2421 = vpop.permute.xlu0 %2420
        %2422 = vrot.lane.b32.xlu0 %v2369, 32
        %v2423 = vpop.permute.xlu0 %2422
        %2424 = vrot.lane.b32.xlu0 %v2370, 32
        %v2425 = vpop.permute.xlu0 %2424
        %2426 = vrot.lane.b32.xlu0 %v2371, 32
        %v2427 = vpop.permute.xlu0 %2426
        %v2444 = vmul.f32 %v2378, %v2397
        %v2445 = vmul.f32 %v2378, %v2399
        %v2446 = vmul.f32 %v2378, %v2401
        %v2447 = vmul.f32 %v2378, %v2403
        %v2448 = vmul.f32 %v2378, %v2405
        %v2449 = vmul.f32 %v2378, %v2407
        %v2450 = vmul.f32 %v2378, %v2409
        %v2451 = vmul.f32 %v2378, %v2411
        %v2452 = vmul.f32 %v2378, %v2413
        %v2453 = vmul.f32 %v2378, %v2415
        %v2454 = vmul.f32 %v2378, %v2417
        %v2455 = vmul.f32 %v2378, %v2419
        %v2456 = vmul.f32 %v2378, %v2421
        %v2457 = vmul.f32 %v2378, %v2423
        %v2458 = vmul.f32 %v2378, %v2425
        %v2459 = vmul.f32 %v2378, %v2427
        %v2461 = vlaneseq
        %v2462 = vshrl.u32 %v2461, 7
        %v2463 = vsub.s32 0, %v2462
        %v2464 = vrot.slane %v2372, %v2463
        %2482 = vrot.lane.b32.xlu0 %v2444, 96
        %v2483 = vpop.permute.xlu0 %2482
        %2484 = vrot.lane.b32.xlu0 %v2445, 96
        %v2485 = vpop.permute.xlu0 %2484
        %2486 = vrot.lane.b32.xlu0 %v2446, 96
        %v2487 = vpop.permute.xlu0 %2486
        %2488 = vrot.lane.b32.xlu0 %v2447, 96
        %v2489 = vpop.permute.xlu0 %2488
        %2490 = vrot.lane.b32.xlu0 %v2448, 96
        %v2491 = vpop.permute.xlu0 %2490
        %2492 = vrot.lane.b32.xlu0 %v2449, 96
        %v2493 = vpop.permute.xlu0 %2492
        %2494 = vrot.lane.b32.xlu0 %v2450, 96
        %v2495 = vpop.permute.xlu0 %2494
        %2496 = vrot.lane.b32.xlu0 %v2451, 96
        %v2497 = vpop.permute.xlu0 %2496
        %2498 = vrot.lane.b32.xlu0 %v2452, 96
        %v2499 = vpop.permute.xlu0 %2498
        %2500 = vrot.lane.b32.xlu0 %v2453, 96
        %v2501 = vpop.permute.xlu0 %2500
        %2502 = vrot.lane.b32.xlu0 %v2454, 96
        %v2503 = vpop.permute.xlu0 %2502
        %2504 = vrot.lane.b32.xlu0 %v2455, 96
        %v2505 = vpop.permute.xlu0 %2504
        %2506 = vrot.lane.b32.xlu0 %v2456, 96
        %v2507 = vpop.permute.xlu0 %2506
        %2508 = vrot.lane.b32.xlu0 %v2457, 96
        %v2509 = vpop.permute.xlu0 %2508
        %2510 = vrot.lane.b32.xlu0 %v2458, 96
        %v2511 = vpop.permute.xlu0 %2510
        %2512 = vrot.lane.b32.xlu0 %v2459, 96
        %v2513 = vpop.permute.xlu0 %2512
        %v2530 = vadd.f32 %v2464, %v2483
        %v2531 = vadd.f32 %v2464, %v2485
        %v2532 = vadd.f32 %v2464, %v2487
        %v2533 = vadd.f32 %v2464, %v2489
        %v2534 = vadd.f32 %v2464, %v2491
        %v2535 = vadd.f32 %v2464, %v2493
        %v2536 = vadd.f32 %v2464, %v2495
        %v2537 = vadd.f32 %v2464, %v2497
        %v2538 = vadd.f32 %v2464, %v2499
        %v2539 = vadd.f32 %v2464, %v2501
        %v2540 = vadd.f32 %v2464, %v2503
        %v2541 = vadd.f32 %v2464, %v2505
        %v2542 = vadd.f32 %v2464, %v2507
        %v2543 = vadd.f32 %v2464, %v2509
        %v2544 = vadd.f32 %v2464, %v2511
        %v2545 = vadd.f32 %v2464, %v2513
        %v2546 = vpack.c.bf16 %v2531, %v2530
        %v2547 = vpack.c.bf16 %v2533, %v2532
        %v2548 = vpack.c.bf16 %v2535, %v2534
        %v2549 = vpack.c.bf16 %v2537, %v2536
        %v2550 = vpack.c.bf16 %v2539, %v2538
        %v2551 = vpack.c.bf16 %v2541, %v2540
        %v2552 = vpack.c.bf16 %v2543, %v2542
        %v2553 = vpack.c.bf16 %v2545, %v2544
        %v2554 = vld [vmem:[%s19] sm:$0xf]
        %v2555 = vld [vmem:[%s19 + $0x4] sm:$0xf]
        %v2556 = vld [vmem:[%s19 + $0x8] sm:$0xf]
        %v2557 = vld [vmem:[%s19 + $0xc] sm:$0xf]
        %v2558 = vld [vmem:[%s20] sm:$0x1]
        %v2560 = vlaneseq
        %v2561 = vshrl.u32 %v2560, 7
        %v2562 = vsub.s32 0, %v2561
        %v2563 = vrot.slane %v2558, %v2562
        %v2569 = vunpack.c.l.b16 %v2554
        %v2570 = vunpack.c.l.b16 %v2555
        %v2571 = vunpack.c.l.b16 %v2556
        %v2572 = vunpack.c.l.b16 %v2557
        %v2573 = vpack.c.b16 %v2570, %v2569
        %v2574 = vpack.c.b16 %v2572, %v2571
        %vm2577 = vcmask 261120
        %v2579 = vsel %vm2577, %v2546, 0
        %v2582 = vsel %vm2577, %v2547, 0
        %v2585 = vsel %vm2577, %v2548, 0
        %v2588 = vsel %vm2577, %v2549, 0
        %v2591 = vsel %vm2577, %v2550, 0
        %v2594 = vsel %vm2577, %v2551, 0
        %v2597 = vsel %vm2577, %v2552, 0
        %v2600 = vsel %vm2577, %v2553, 0
        %2602 = vmatprep.subr.bf16.mxu0 0
        %2603 = vmatpush1.bf16.msra.mxu0 0
        %2604 = vmatprep.subr.bf16.mxu0 0
        %2605 = vmatpush1.bf16.msra.mxu0 0
        %2606 = vmatprep.subr.bf16.mxu0 0
        %2607 = vmatpush1.bf16.msra.mxu0 0
        %2608 = vmatprep.subr.bf16.mxu0 0
        %2609 = vmatpush1.bf16.msra.mxu0 0
        %2610 = vmatprep.subr.bf16.mxu0 0
        %2611 = vmatpush1.bf16.msra.mxu0 0
        %2612 = vmatprep.subr.bf16.mxu0 0
        %2613 = vmatpush1.bf16.msra.mxu0 0
        %2614 = vmatprep.subr.bf16.mxu0 0
        %2615 = vmatpush1.bf16.msra.mxu0 %v2574
        %2616 = vmatprep.subr.bf16.mxu0 0
        %2617 = vmatpush1.bf16.msra.mxu0 %v2573
        %2618 = vmatprep.subr.bf16.mxu0 0
        %2619 = vmatpush2.bf16.msra.mxu0 0
        %2620 = vmatprep.subr.bf16.mxu0 0
        %2621 = vmatpush2.bf16.msra.mxu0 0
        %2622 = vmatprep.subr.bf16.mxu0 0
        %2623 = vmatpush2.bf16.msra.mxu0 0
        %2624 = vmatprep.subr.bf16.mxu0 0
        %2625 = vmatpush2.bf16.msra.mxu0 0
        %2626 = vmatprep.subr.bf16.mxu0 0
        %2627 = vmatpush2.bf16.msra.mxu0 0
        %2628 = vmatprep.subr.bf16.mxu0 0
        %2629 = vmatpush2.bf16.msra.mxu0 0
        %2630 = vmatprep.subr.bf16.mxu0 0
        %2631 = vmatpush2.bf16.msra.mxu0 0
        %2632 = vmatprep.subr.bf16.mxu0 0
        %2633 = vmatpush2.bf16.msra.mxu0 0
        %2634 = vmatprep.mubr.bf16.mxu0 0
        %2635 = vmatmul.mubr.bf16.gmra.mxu0 %v2579
        %v2636 = vpop.f32.mrf.mxu0
        %v2637 = vadd.f32 %v2563, %v2636
        %v2638 = vpop.f32.mrf.mxu0
        %v2639 = vpop.f32.mrf.mxu0
        %v2640 = vadd.f32 %v2563, %v2639
        %v2641 = vpop.f32.mrf.mxu0
        %2642 = vmatprep.mubr.bf16.mxu0 0
        %2643 = vmatmul.mubr.bf16.gmra.mxu0 %v2582
        %v2644 = vpop.f32.mrf.mxu0
        %v2645 = vadd.f32 %v2563, %v2644
        %v2646 = vpop.f32.mrf.mxu0
        %v2647 = vpop.f32.mrf.mxu0
        %v2648 = vadd.f32 %v2563, %v2647
        %v2649 = vpop.f32.mrf.mxu0
        %2650 = vmatprep.mubr.bf16.mxu0 0
        %2651 = vmatmul.mubr.bf16.gmra.mxu0 %v2585
        %v2652 = vpop.f32.mrf.mxu0
        %v2653 = vadd.f32 %v2563, %v2652
        %v2654 = vpop.f32.mrf.mxu0
        %v2655 = vpop.f32.mrf.mxu0
        %v2656 = vadd.f32 %v2563, %v2655
        %v2657 = vpop.f32.mrf.mxu0
        %2658 = vmatprep.mubr.bf16.mxu0 0
        %2659 = vmatmul.mubr.bf16.gmra.mxu0 %v2588
        %v2660 = vpop.f32.mrf.mxu0
        %v2661 = vadd.f32 %v2563, %v2660
        %v2662 = vpop.f32.mrf.mxu0
        %v2663 = vpop.f32.mrf.mxu0
        %v2664 = vadd.f32 %v2563, %v2663
        %v2665 = vpop.f32.mrf.mxu0
        %2666 = vmatprep.mubr.bf16.mxu0 0
        %2667 = vmatmul.mubr.bf16.gmra.mxu0 %v2591
        %v2668 = vpop.f32.mrf.mxu0
        %v2669 = vadd.f32 %v2563, %v2668
        %v2670 = vpop.f32.mrf.mxu0
        %v2671 = vpop.f32.mrf.mxu0
        %v2672 = vadd.f32 %v2563, %v2671
        %v2673 = vpop.f32.mrf.mxu0
        %2674 = vmatprep.mubr.bf16.mxu0 0
        %2675 = vmatmul.mubr.bf16.gmra.mxu0 %v2594
        %v2676 = vpop.f32.mrf.mxu0
        %v2677 = vadd.f32 %v2563, %v2676
        %v2678 = vpop.f32.mrf.mxu0
        %v2679 = vpop.f32.mrf.mxu0
        %v2680 = vadd.f32 %v2563, %v2679
        %v2681 = vpop.f32.mrf.mxu0
        %2682 = vmatprep.mubr.bf16.mxu0 0
        %2683 = vmatmul.mubr.bf16.gmra.mxu0 %v2597
        %v2684 = vpop.f32.mrf.mxu0
        %v2685 = vadd.f32 %v2563, %v2684
        %v2686 = vpop.f32.mrf.mxu0
        %v2687 = vpop.f32.mrf.mxu0
        %v2688 = vadd.f32 %v2563, %v2687
        %v2689 = vpop.f32.mrf.mxu0
        %2690 = vmatprep.mubr.bf16.mxu0 0
        %2691 = vmatmul.mubr.bf16.gmra.mxu0 %v2600
        %v2692 = vpop.f32.mrf.mxu0
        %v2693 = vadd.f32 %v2563, %v2692
        %v2694 = vpop.f32.mrf.mxu0
        %v2695 = vpop.f32.mrf.mxu0
        %v2696 = vadd.f32 %v2563, %v2695
        %v2697 = vpop.f32.mrf.mxu0
        %2698 = vdwg.mxu0
        %v2699 = vmul.f32 %v2637, %v2167
        %v2700 = vmul.f32 %v2640, %v2172
        %v2701 = vmul.f32 %v2645, %v2177
        %v2702 = vmul.f32 %v2648, %v2182
        %v2703 = vmul.f32 %v2653, %v2187
        %v2704 = vmul.f32 %v2656, %v2192
        %v2705 = vmul.f32 %v2661, %v2197
        %v2706 = vmul.f32 %v2664, %v2202
        %v2707 = vmul.f32 %v2669, %v2207
        %v2708 = vmul.f32 %v2672, %v2212
        %v2709 = vmul.f32 %v2677, %v2217
        %v2710 = vmul.f32 %v2680, %v2222
        %v2711 = vmul.f32 %v2685, %v2227
        %v2712 = vmul.f32 %v2688, %v2232
        %v2713 = vmul.f32 %v2693, %v2237
        %v2714 = vmul.f32 %v2696, %v2242
        %2715 = vst.msk [vmem:[%s1085] sm:$0xff] %vm2042, %v2699
        %2716 = vst.msk [vmem:[%s1085 + $0x8] sm:$0xff] %vm2042, %v2700
        %2717 = vst.msk [vmem:[%s1085 + $0x10] sm:$0xff] %vm2042, %v2701
        %2718 = vst.msk [vmem:[%s1085 + $0x18] sm:$0xff] %vm2042, %v2702
        %2719 = vst.msk [vmem:[%s1085 + $0x20] sm:$0xff] %vm2042, %v2703
        %2720 = vst.msk [vmem:[%s1085 + $0x28] sm:$0xff] %vm2042, %v2704
        %2721 = vst.msk [vmem:[%s1085 + $0x30] sm:$0xff] %vm2042, %v2705
        %2722 = vst.msk [vmem:[%s1085 + $0x38] sm:$0xff] %vm2042, %v2706
        %2723 = vst.msk [vmem:[%s1085 + $0x40] sm:$0xff] %vm2042, %v2707
        %2724 = vst.msk [vmem:[%s1085 + $0x48] sm:$0xff] %vm2042, %v2708
        %2725 = vst.msk [vmem:[%s1085 + $0x50] sm:$0xff] %vm2042, %v2709
        %2726 = vst.msk [vmem:[%s1085 + $0x58] sm:$0xff] %vm2042, %v2710
        %2727 = vst.msk [vmem:[%s1085 + $0x60] sm:$0xff] %vm2042, %v2711
        %2728 = vst.msk [vmem:[%s1085 + $0x68] sm:$0xff] %vm2042, %v2712
        %2729 = vst.msk [vmem:[%s1085 + $0x70] sm:$0xff] %vm2042, %v2713
        %2730 = vst.msk [vmem:[%s1085 + $0x78] sm:$0xff] %vm2042, %v2714
        %vm2731 = vcmp.gt.f32.partialorder %v1796, 0.0
        %vm2732 = vcmp.gt.f32.partialorder %v1800, 0.0
        %v2733 = vsel %vm2731, 1, 0
        %v2734 = vsel %vm2732, 1, 0
        %vm2735 = vcmp.eq.s32.totalorder %v2733, 1
        %vm2736 = vcmp.eq.s32.totalorder %v2734, 1
        %v2737 = vsel %vm2735, %v2356, -1e+30
        %v2738 = vsel %vm2736, %v2357, -1e+30
        %v2739 = vsel %vm2735, %v2358, -1e+30
        %v2740 = vsel %vm2736, %v2359, -1e+30
        %v2741 = vsel %vm2735, %v2360, -1e+30
        %v2742 = vsel %vm2736, %v2361, -1e+30
        %v2743 = vsel %vm2735, %v2362, -1e+30
        %v2744 = vsel %vm2736, %v2363, -1e+30
        %v2745 = vsel %vm2735, %v2364, -1e+30
        %v2746 = vsel %vm2736, %v2365, -1e+30
        %v2747 = vsel %vm2735, %v2366, -1e+30
        %v2748 = vsel %vm2736, %v2367, -1e+30
        %v2749 = vsel %vm2735, %v2368, -1e+30
        %v2750 = vsel %vm2736, %v2369, -1e+30
        %v2751 = vsel %vm2735, %v2370, -1e+30
        %v2752 = vsel %vm2736, %v2371, -1e+30
        %v2753 = vsel %vm2577, %v2737, -inf
        %v2754 = vsel %vm2577, %v2738, -inf
        %v2755 = vmax.f32 %v2753, %v2754
        %v2756 = vrot.slane %v2755, 4
        %v2757 = vmax.f32 %v2755, %v2756
        %v2758 = vrot.slane %v2757, 2
        %v2759 = vmax.f32 %v2757, %v2758
        %v2760 = vrot.slane %v2759, 1
        %v2761 = vmax.f32 %v2759, %v2760
        %v2762 = vsel %vm2577, %v2739, -inf
        %v2763 = vsel %vm2577, %v2740, -inf
        %v2764 = vmax.f32 %v2762, %v2763
        %v2765 = vrot.slane %v2764, 4
        %v2766 = vmax.f32 %v2764, %v2765
        %v2767 = vrot.slane %v2766, 2
        %v2768 = vmax.f32 %v2766, %v2767
        %v2769 = vrot.slane %v2768, 1
        %v2770 = vmax.f32 %v2768, %v2769
        %v2771 = vsel %vm2577, %v2741, -inf
        %v2772 = vsel %vm2577, %v2742, -inf
        %v2773 = vmax.f32 %v2771, %v2772
        %v2774 = vrot.slane %v2773, 4
        %v2775 = vmax.f32 %v2773, %v2774
        %v2776 = vrot.slane %v2775, 2
        %v2777 = vmax.f32 %v2775, %v2776
        %v2778 = vrot.slane %v2777, 1
        %v2779 = vmax.f32 %v2777, %v2778
        %v2780 = vsel %vm2577, %v2743, -inf
        %v2781 = vsel %vm2577, %v2744, -inf
        %v2782 = vmax.f32 %v2780, %v2781
        %v2783 = vrot.slane %v2782, 4
        %v2784 = vmax.f32 %v2782, %v2783
        %v2785 = vrot.slane %v2784, 2
        %v2786 = vmax.f32 %v2784, %v2785
        %v2787 = vrot.slane %v2786, 1
        %v2788 = vmax.f32 %v2786, %v2787
        %v2789 = vsel %vm2577, %v2745, -inf
        %v2790 = vsel %vm2577, %v2746, -inf
        %v2791 = vmax.f32 %v2789, %v2790
        %v2792 = vrot.slane %v2791, 4
        %v2793 = vmax.f32 %v2791, %v2792
        %v2794 = vrot.slane %v2793, 2
        %v2795 = vmax.f32 %v2793, %v2794
        %v2796 = vrot.slane %v2795, 1
        %v2797 = vmax.f32 %v2795, %v2796
        %v2798 = vsel %vm2577, %v2747, -inf
        %v2799 = vsel %vm2577, %v2748, -inf
        %v2800 = vmax.f32 %v2798, %v2799
        %v2801 = vrot.slane %v2800, 4
        %v2802 = vmax.f32 %v2800, %v2801
        %v2803 = vrot.slane %v2802, 2
        %v2804 = vmax.f32 %v2802, %v2803
        %v2805 = vrot.slane %v2804, 1
        %v2806 = vmax.f32 %v2804, %v2805
        %v2807 = vsel %vm2577, %v2749, -inf
        %v2808 = vsel %vm2577, %v2750, -inf
        %v2809 = vmax.f32 %v2807, %v2808
        %v2810 = vrot.slane %v2809, 4
        %v2811 = vmax.f32 %v2809, %v2810
        %v2812 = vrot.slane %v2811, 2
        %v2813 = vmax.f32 %v2811, %v2812
        %v2814 = vrot.slane %v2813, 1
        %v2815 = vmax.f32 %v2813, %v2814
        %v2816 = vsel %vm2577, %v2751, -inf
        %v2817 = vsel %vm2577, %v2752, -inf
        %v2818 = vmax.f32 %v2816, %v2817
        %v2819 = vrot.slane %v2818, 4
        %v2820 = vmax.f32 %v2818, %v2819
        %v2821 = vrot.slane %v2820, 2
        %v2822 = vmax.f32 %v2820, %v2821
        %v2823 = vrot.slane %v2822, 1
        %v2824 = vmax.f32 %v2822, %v2823
        %v2825 = vsub.f32 %v2737, %v2761
        %v2826 = vsub.f32 %v2738, %v2761
        %v2827 = vsub.f32 %v2739, %v2770
        %v2828 = vsub.f32 %v2740, %v2770
        %v2829 = vsub.f32 %v2741, %v2779
        %v2830 = vsub.f32 %v2742, %v2779
        %v2831 = vsub.f32 %v2743, %v2788
        %v2832 = vsub.f32 %v2744, %v2788
        %v2833 = vsub.f32 %v2745, %v2797
        %v2834 = vsub.f32 %v2746, %v2797
        %v2835 = vsub.f32 %v2747, %v2806
        %v2836 = vsub.f32 %v2748, %v2806
        %v2837 = vsub.f32 %v2749, %v2815
        %v2838 = vsub.f32 %v2750, %v2815
        %v2839 = vsub.f32 %v2751, %v2824
        %v2840 = vsub.f32 %v2752, %v2824
        %v2841 = vmul.f32 %v2825, 1.442695
        %v2842 = vpow.pop %v2841
        %v2843 = vmul.f32 %v2826, 1.442695
        %v2844 = vpow.pop %v2843
        %v2845 = vmul.f32 %v2827, 1.442695
        %v2846 = vpow.pop %v2845
        %v2847 = vmul.f32 %v2828, 1.442695
        %v2848 = vpow.pop %v2847
        %v2849 = vmul.f32 %v2829, 1.442695
        %v2850 = vpow.pop %v2849
        %v2851 = vmul.f32 %v2830, 1.442695
        %v2852 = vpow.pop %v2851
        %v2853 = vmul.f32 %v2831, 1.442695
        %v2854 = vpow.pop %v2853
        %v2855 = vmul.f32 %v2832, 1.442695
        %v2856 = vpow.pop %v2855
        %v2857 = vmul.f32 %v2833, 1.442695
        %v2858 = vpow.pop %v2857
        %v2859 = vmul.f32 %v2834, 1.442695
        %v2860 = vpow.pop %v2859
        %v2861 = vmul.f32 %v2835, 1.442695
        %v2862 = vpow.pop %v2861
        %v2863 = vmul.f32 %v2836, 1.442695
        %v2864 = vpow.pop %v2863
        %v2865 = vmul.f32 %v2837, 1.442695
        %v2866 = vpow.pop %v2865
        %v2867 = vmul.f32 %v2838, 1.442695
        %v2868 = vpow.pop %v2867
        %v2869 = vmul.f32 %v2839, 1.442695
        %v2870 = vpow.pop %v2869
        %v2871 = vmul.f32 %v2840, 1.442695
        %v2872 = vpow.pop %v2871
        %v2873 = vsel %vm2577, %v2842, 0.0
        %v2874 = vsel %vm2577, %v2844, 0.0
        %v2875 = vadd.f32 %v2873, %v2874
        %v2876 = vrot.slane %v2875, 4
        %v2877 = vadd.f32 %v2875, %v2876
        %v2878 = vrot.slane %v2877, 2
        %v2879 = vadd.f32 %v2877, %v2878
        %v2880 = vrot.slane %v2879, 1
        %v2881 = vadd.f32 %v2879, %v2880
        %v2882 = vsel %vm2577, %v2846, 0.0
        %v2883 = vsel %vm2577, %v2848, 0.0
        %v2884 = vadd.f32 %v2882, %v2883
        %v2885 = vrot.slane %v2884, 4
        %v2886 = vadd.f32 %v2884, %v2885
        %v2887 = vrot.slane %v2886, 2
        %v2888 = vadd.f32 %v2886, %v2887
        %v2889 = vrot.slane %v2888, 1
        %v2890 = vadd.f32 %v2888, %v2889
        %v2891 = vsel %vm2577, %v2850, 0.0
        %v2892 = vsel %vm2577, %v2852, 0.0
        %v2893 = vadd.f32 %v2891, %v2892
        %v2894 = vrot.slane %v2893, 4
        %v2895 = vadd.f32 %v2893, %v2894
        %v2896 = vrot.slane %v2895, 2
        %v2897 = vadd.f32 %v2895, %v2896
        %v2898 = vrot.slane %v2897, 1
        %v2899 = vadd.f32 %v2897, %v2898
        %v2900 = vsel %vm2577, %v2854, 0.0
        %v2901 = vsel %vm2577, %v2856, 0.0
        %v2902 = vadd.f32 %v2900, %v2901
        %v2903 = vrot.slane %v2902, 4
        %v2904 = vadd.f32 %v2902, %v2903
        %v2905 = vrot.slane %v2904, 2
        %v2906 = vadd.f32 %v2904, %v2905
        %v2907 = vrot.slane %v2906, 1
        %v2908 = vadd.f32 %v2906, %v2907
        %v2909 = vsel %vm2577, %v2858, 0.0
        %v2910 = vsel %vm2577, %v2860, 0.0
        %v2911 = vadd.f32 %v2909, %v2910
        %v2912 = vrot.slane %v2911, 4
        %v2913 = vadd.f32 %v2911, %v2912
        %v2914 = vrot.slane %v2913, 2
        %v2915 = vadd.f32 %v2913, %v2914
        %v2916 = vrot.slane %v2915, 1
        %v2917 = vadd.f32 %v2915, %v2916
        %v2918 = vsel %vm2577, %v2862, 0.0
        %v2919 = vsel %vm2577, %v2864, 0.0
        %v2920 = vadd.f32 %v2918, %v2919
        %v2921 = vrot.slane %v2920, 4
        %v2922 = vadd.f32 %v2920, %v2921
        %v2923 = vrot.slane %v2922, 2
        %v2924 = vadd.f32 %v2922, %v2923
        %v2925 = vrot.slane %v2924, 1
        %v2926 = vadd.f32 %v2924, %v2925
        %v2927 = vsel %vm2577, %v2866, 0.0
        %v2928 = vsel %vm2577, %v2868, 0.0
        %v2929 = vadd.f32 %v2927, %v2928
        %v2930 = vrot.slane %v2929, 4
        %v2931 = vadd.f32 %v2929, %v2930
        %v2932 = vrot.slane %v2931, 2
        %v2933 = vadd.f32 %v2931, %v2932
        %v2934 = vrot.slane %v2933, 1
        %v2935 = vadd.f32 %v2933, %v2934
        %v2936 = vsel %vm2577, %v2870, 0.0
        %v2937 = vsel %vm2577, %v2872, 0.0
        %v2938 = vadd.f32 %v2936, %v2937
        %v2939 = vrot.slane %v2938, 4
        %v2940 = vadd.f32 %v2938, %v2939
        %v2941 = vrot.slane %v2940, 2
        %v2942 = vadd.f32 %v2940, %v2941
        %v2943 = vrot.slane %v2942, 1
        %v2944 = vadd.f32 %v2942, %v2943
        %v2945 = vrcp.pop %v2881
        %v2946 = vrcp.pop %v2890
        %v2947 = vrcp.pop %v2899
        %v2948 = vrcp.pop %v2908
        %v2949 = vrcp.pop %v2917
        %v2950 = vrcp.pop %v2926
        %v2951 = vrcp.pop %v2935
        %v2952 = vrcp.pop %v2944
        %v2953 = vmul.f32 %v2842, %v2945
        %v2954 = vmul.f32 %v2844, %v2945
        %v2955 = vmul.f32 %v2846, %v2946
        %v2956 = vmul.f32 %v2848, %v2946
        %v2957 = vmul.f32 %v2850, %v2947
        %v2958 = vmul.f32 %v2852, %v2947
        %v2959 = vmul.f32 %v2854, %v2948
        %v2960 = vmul.f32 %v2856, %v2948
        %v2961 = vmul.f32 %v2858, %v2949
        %v2962 = vmul.f32 %v2860, %v2949
        %v2963 = vmul.f32 %v2862, %v2950
        %v2964 = vmul.f32 %v2864, %v2950
        %v2965 = vmul.f32 %v2866, %v2951
        %v2966 = vmul.f32 %v2868, %v2951
        %v2967 = vmul.f32 %v2870, %v2952
        %v2968 = vmul.f32 %v2872, %v2952
        %2969 = vrot.lane.b32.xlu0 %v1738, 64
        %v2970 = vpop.permute.xlu0 %2969
        %2971 = vrot.lane.b32.xlu0 %v1739, 64
        %v2972 = vpop.permute.xlu0 %2971
        %v2975 = vmul.f32 %v2953, %v2970
        %v2976 = vmul.f32 %v2954, %v2972
        %v2977 = vmul.f32 %v2955, %v2970
        %v2978 = vmul.f32 %v2956, %v2972
        %v2979 = vmul.f32 %v2957, %v2970
        %v2980 = vmul.f32 %v2958, %v2972
        %v2981 = vmul.f32 %v2959, %v2970
        %v2982 = vmul.f32 %v2960, %v2972
        %v2983 = vmul.f32 %v2961, %v2970
        %v2984 = vmul.f32 %v2962, %v2972
        %v2985 = vmul.f32 %v2963, %v2970
        %v2986 = vmul.f32 %v2964, %v2972
        %v2987 = vmul.f32 %v2965, %v2970
        %v2988 = vmul.f32 %v2966, %v2972
        %v2989 = vmul.f32 %v2967, %v2970
        %v2990 = vmul.f32 %v2968, %v2972
        %v2991 = vsel %vm2577, %v2975, 0.0
        %v2992 = vsel %vm2577, %v2976, 0.0
        %v2993 = vadd.f32 %v2991, %v2992
        %v2994 = vrot.slane %v2993, 4
        %v2995 = vadd.f32 %v2993, %v2994
        %v2996 = vrot.slane %v2995, 2
        %v2997 = vadd.f32 %v2995, %v2996
        %v2998 = vrot.slane %v2997, 1
        %v2999 = vadd.f32 %v2997, %v2998
        %v3000 = vsel %vm2577, %v2977, 0.0
        %v3001 = vsel %vm2577, %v2978, 0.0
        %v3002 = vadd.f32 %v3000, %v3001
        %v3003 = vrot.slane %v3002, 4
        %v3004 = vadd.f32 %v3002, %v3003
        %v3005 = vrot.slane %v3004, 2
        %v3006 = vadd.f32 %v3004, %v3005
        %v3007 = vrot.slane %v3006, 1
        %v3008 = vadd.f32 %v3006, %v3007
        %v3009 = vsel %vm2577, %v2979, 0.0
        %v3010 = vsel %vm2577, %v2980, 0.0
        %v3011 = vadd.f32 %v3009, %v3010
        %v3012 = vrot.slane %v3011, 4
        %v3013 = vadd.f32 %v3011, %v3012
        %v3014 = vrot.slane %v3013, 2
        %v3015 = vadd.f32 %v3013, %v3014
        %v3016 = vrot.slane %v3015, 1
        %v3017 = vadd.f32 %v3015, %v3016
        %v3018 = vsel %vm2577, %v2981, 0.0
        %v3019 = vsel %vm2577, %v2982, 0.0
        %v3020 = vadd.f32 %v3018, %v3019
        %v3021 = vrot.slane %v3020, 4
        %v3022 = vadd.f32 %v3020, %v3021
        %v3023 = vrot.slane %v3022, 2
        %v3024 = vadd.f32 %v3022, %v3023
        %v3025 = vrot.slane %v3024, 1
        %v3026 = vadd.f32 %v3024, %v3025
        %v3027 = vsel %vm2577, %v2983, 0.0
        %v3028 = vsel %vm2577, %v2984, 0.0
        %v3029 = vadd.f32 %v3027, %v3028
        %v3030 = vrot.slane %v3029, 4
        %v3031 = vadd.f32 %v3029, %v3030
        %v3032 = vrot.slane %v3031, 2
        %v3033 = vadd.f32 %v3031, %v3032
        %v3034 = vrot.slane %v3033, 1
        %v3035 = vadd.f32 %v3033, %v3034
        %v3036 = vsel %vm2577, %v2985, 0.0
        %v3037 = vsel %vm2577, %v2986, 0.0
        %v3038 = vadd.f32 %v3036, %v3037
        %v3039 = vrot.slane %v3038, 4
        %v3040 = vadd.f32 %v3038, %v3039
        %v3041 = vrot.slane %v3040, 2
        %v3042 = vadd.f32 %v3040, %v3041
        %v3043 = vrot.slane %v3042, 1
        %v3044 = vadd.f32 %v3042, %v3043
        %v3045 = vsel %vm2577, %v2987, 0.0
        %v3046 = vsel %vm2577, %v2988, 0.0
        %v3047 = vadd.f32 %v3045, %v3046
        %v3048 = vrot.slane %v3047, 4
        %v3049 = vadd.f32 %v3047, %v3048
        %v3050 = vrot.slane %v3049, 2
        %v3051 = vadd.f32 %v3049, %v3050
        %v3052 = vrot.slane %v3051, 1
        %v3053 = vadd.f32 %v3051, %v3052
        %v3054 = vsel %vm2577, %v2989, 0.0
        %v3055 = vsel %vm2577, %v2990, 0.0
        %v3056 = vadd.f32 %v3054, %v3055
        %v3057 = vrot.slane %v3056, 4
        %v3058 = vadd.f32 %v3056, %v3057
        %v3059 = vrot.slane %v3058, 2
        %v3060 = vadd.f32 %v3058, %v3059
        %v3061 = vrot.slane %v3060, 1
        %v3062 = vadd.f32 %v3060, %v3061
        %vm3071 = vcmask 1041409
        %v3072 = vsel %vm3071, %v3008, %v2999
        %vm3073 = vcmask 1042434
        %v3074 = vsel %vm3073, %v3017, %v3072
        %vm3075 = vcmask 1043459
        %v3076 = vsel %vm3075, %v3026, %v3074
        %vm3077 = vcmask 1044484
        %v3078 = vsel %vm3077, %v3035, %v3076
        %vm3079 = vcmask 1045509
        %v3080 = vsel %vm3079, %v3044, %v3078
        %vm3081 = vcmask 1046534
        %v3082 = vsel %vm3081, %v3053, %v3080
        %vm3083 = vcmask 1047559
        %v3084 = vsel %vm3083, %v3062, %v3082
        %3085 = vrot.lane.b32.xlu0 %v3084, 96
        %v3086 = vpop.permute.xlu0 %3085
        %v3088 = vmul.f32 %v2378, %v3086
        %3090 = vrot.lane.b32.xlu0 %v3088, 96
        %v3091 = vpop.permute.xlu0 %3090
        %v3093 = vadd.f32 %v2464, %v3091
        %v3094 = vld [vmem:[%s17] sm:$0xff]
        %v3095 = vld [vmem:[%s17 + $0x8] sm:$0xff]
        %v3096 = vld [vmem:[%s17 + $0x10] sm:$0xff]
        %v3097 = vld [vmem:[%s17 + $0x18] sm:$0xff]
        %v3098 = vld [vmem:[#allocation27] sm:$0x1]
        %v3100 = vlaneseq
        %v3101 = vshrl.u32 %v3100, 7
        %v3102 = vsub.s32 0, %v3101
        %v3103 = vrot.slane %v3098, %v3102
        %3106 = vrot.lane.b32.xlu0 %v3093, 64
        %v3107 = vpop.permute.xlu0 %3106
        %v3108 = vsel %vm2577, %v3107, 0
        %3110 = vmatprep.subr.mxu0 0.0
        %3111 = vmatpush1.msra.mxu0 0.0
        %3112 = vmatprep.subr.mxu0 0.0
        %3113 = vmatpush1.msra.mxu0 0.0
        %3114 = vmatprep.subr.mxu0 0.0
        %3115 = vmatpush1.msra.mxu0 0.0
        %3116 = vmatprep.subr.mxu0 0.0
        %3117 = vmatpush1.msra.mxu0 0.0
        %3118 = vmatprep.subr.mxu0 0.0
        %3119 = vmatpush1.msra.mxu0 0.0
        %3120 = vmatprep.subr.mxu0 0.0
        %3121 = vmatpush1.msra.mxu0 0.0
        %3122 = vmatprep.subr.mxu0 0.0
        %3123 = vmatpush1.msra.mxu0 0.0
        %3124 = vmatprep.subr.mxu0 0.0
        %3125 = vmatpush1.msra.mxu0 0.0
        %3126 = vmatprep.subr.mxu0 0.0
        %3127 = vmatpush1.msra.mxu0 0.0
        %3128 = vmatprep.subr.mxu0 0.0
        %3129 = vmatpush1.msra.mxu0 0.0
        %3130 = vmatprep.subr.mxu0 0.0
        %3131 = vmatpush1.msra.mxu0 0.0
        %3132 = vmatprep.subr.mxu0 0.0
        %3133 = vmatpush1.msra.mxu0 0.0
        %3134 = vmatprep.subr.mxu0 0.0
        %3135 = vmatpush1.msra.mxu0 %v3097
        %3136 = vmatprep.subr.mxu0 0.0
        %3137 = vmatpush1.msra.mxu0 %v3096
        %3138 = vmatprep.subr.mxu0 0.0
        %3139 = vmatpush1.msra.mxu0 %v3095
        %3140 = vmatprep.subr.mxu0 0.0
        %3141 = vmatpush1.msra.mxu0 %v3094
        %3142 = vmatprep.subr.mxu0 0.0
        %3143 = vmatpush2.msra.mxu0 0.0
        %3144 = vmatprep.subr.mxu0 0.0
        %3145 = vmatpush2.msra.mxu0 0.0
        %3146 = vmatprep.subr.mxu0 0.0
        %3147 = vmatpush2.msra.mxu0 0.0
        %3148 = vmatprep.subr.mxu0 0.0
        %3149 = vmatpush2.msra.mxu0 0.0
        %3150 = vmatprep.subr.mxu0 0.0
        %3151 = vmatpush2.msra.mxu0 0.0
        %3152 = vmatprep.subr.mxu0 0.0
        %3153 = vmatpush2.msra.mxu0 0.0
        %3154 = vmatprep.subr.mxu0 0.0
        %3155 = vmatpush2.msra.mxu0 0.0
        %3156 = vmatprep.subr.mxu0 0.0
        %3157 = vmatpush2.msra.mxu0 0.0
        %3158 = vmatprep.subr.mxu0 0.0
        %3159 = vmatpush2.msra.mxu0 0.0
        %3160 = vmatprep.subr.mxu0 0.0
        %3161 = vmatpush2.msra.mxu0 0.0
        %3162 = vmatprep.subr.mxu0 0.0
        %3163 = vmatpush2.msra.mxu0 0.0
        %3164 = vmatprep.subr.mxu0 0.0
        %3165 = vmatpush2.msra.mxu0 0.0
        %3166 = vmatprep.subr.mxu0 0.0
        %3167 = vmatpush2.msra.mxu0 0.0
        %3168 = vmatprep.subr.mxu0 0.0
        %3169 = vmatpush2.msra.mxu0 0.0
        %3170 = vmatprep.subr.mxu0 0.0
        %3171 = vmatpush2.msra.mxu0 0.0
        %3172 = vmatprep.subr.mxu0 0.0
        %3173 = vmatpush2.msra.mxu0 0.0
        %3174 = vmatprep.mubr.f32.mxu0 0.0
        %3175 = vmatmul.mubr.f32.gmra.mxu0 %v3108
        %v3176 = vpop.f32.mrf.mxu0
        %v3177 = vadd.f32 %v3103, %v3176
        %v3178 = vpop.f32.mrf.mxu0
        %3179 = vdwg.mxu0
        %3180 = vset.pattern.permute.xlu0 0
        %3181 = vperm.xlu0 %3180, %v1114
        %v3182 = vpop.permute.xlu0 %3181
        %v3184 = vmul.f32 %v3177, %v3182
        %3185 = vst.msk [vmem:[%s1078] sm:$0xff] %vm2577, %v3184
        %v3186 = vunpack.c.l.bf16 %v1857
        %v3187 = vunpack.c.l.bf16 %v1858
        %v3188 = vunpack.c.l.bf16 %v1859
        %v3189 = vunpack.c.l.bf16 %v1860
        %v3190 = vunpack.c.l.bf16 %v1861
        %v3191 = vunpack.c.l.bf16 %v1862
        %v3192 = vunpack.c.l.bf16 %v1863
        %v3193 = vunpack.c.l.bf16 %v1864
        %v3194 = vunpack.c.l.bf16 %v1865
        %v3195 = vunpack.c.l.bf16 %v1866
        %v3196 = vunpack.c.l.bf16 %v1867
        %v3197 = vunpack.c.l.bf16 %v1868
        %v3198 = vunpack.c.l.bf16 %v1869
        %v3199 = vunpack.c.l.bf16 %v1870
        %v3200 = vunpack.c.l.bf16 %v1871
        %v3201 = vunpack.c.l.bf16 %v1872
        %v3202 = vld [vmem:[#allocation5] sm:$0x1]
        %v3203 = vsel %vm2042, %v3186, 0.0
        %v3204 = vsel %vm2042, %v3187, 0.0
        %v3205 = vadd.f32 %v3203, %v3204
        %v3206 = vsel %vm2042, %v3188, 0.0
        %v3207 = vadd.f32 %v3205, %v3206
        %v3208 = vsel %vm2042, %v3189, 0.0
        %v3209 = vadd.f32 %v3207, %v3208
        %v3210 = vsel %vm2042, %v3190, 0.0
        %v3211 = vadd.f32 %v3209, %v3210
        %v3212 = vsel %vm2042, %v3191, 0.0
        %v3213 = vadd.f32 %v3211, %v3212
        %v3214 = vsel %vm2042, %v3192, 0.0
        %v3215 = vadd.f32 %v3213, %v3214
        %v3216 = vsel %vm2042, %v3193, 0.0
        %v3217 = vadd.f32 %v3215, %v3216
        %v3218 = vsel %vm2042, %v3194, 0.0
        %v3219 = vadd.f32 %v3217, %v3218
        %v3220 = vsel %vm2042, %v3195, 0.0
        %v3221 = vadd.f32 %v3219, %v3220
        %v3222 = vsel %vm2042, %v3196, 0.0
        %v3223 = vadd.f32 %v3221, %v3222
        %v3224 = vsel %vm2042, %v3197, 0.0
        %v3225 = vadd.f32 %v3223, %v3224
        %v3226 = vsel %vm2042, %v3198, 0.0
        %v3227 = vadd.f32 %v3225, %v3226
        %v3228 = vsel %vm2042, %v3199, 0.0
        %v3229 = vadd.f32 %v3227, %v3228
        %v3230 = vsel %vm2042, %v3200, 0.0
        %v3231 = vadd.f32 %v3229, %v3230
        %v3232 = vsel %vm2042, %v3201, 0.0
        %v3233 = vadd.f32 %v3231, %v3232
        %v3234 = vrot.slane %v3233, 4
        %v3235 = vadd.f32 %v3233, %v3234
        %v3236 = vrot.slane %v3235, 2
        %v3237 = vadd.f32 %v3235, %v3236
        %v3238 = vrot.slane %v3237, 1
        %v3239 = vadd.f32 %v3237, %v3238
        %v3240 = vadd.f32 %v3202, %v3239
        %vm3241 = vcmask 122880
        %3242 = vst.msk [vmem:[#allocation5] sm:$0x1] %vm3241, %v3240
        %v3243 = vld [vmem:[#allocation5 + $0x1] sm:$0x1]
        %v3244 = vmul.f32 %v3186, %v3186
        %v3245 = vmul.f32 %v3187, %v3187
        %v3246 = vmul.f32 %v3188, %v3188
        %v3247 = vmul.f32 %v3189, %v3189
        %v3248 = vmul.f32 %v3190, %v3190
        %v3249 = vmul.f32 %v3191, %v3191
        %v3250 = vmul.f32 %v3192, %v3192
        %v3251 = vmul.f32 %v3193, %v3193
        %v3252 = vmul.f32 %v3194, %v3194
        %v3253 = vmul.f32 %v3195, %v3195
        %v3254 = vmul.f32 %v3196, %v3196
        %v3255 = vmul.f32 %v3197, %v3197
        %v3256 = vmul.f32 %v3198, %v3198
        %v3257 = vmul.f32 %v3199, %v3199
        %v3258 = vmul.f32 %v3200, %v3200
        %v3259 = vmul.f32 %v3201, %v3201
        %v3260 = vsel %vm2042, %v3244, 0.0
        %v3261 = vsel %vm2042, %v3245, 0.0
        %v3262 = vadd.f32 %v3260, %v3261
        %v3263 = vsel %vm2042, %v3246, 0.0
        %v3264 = vadd.f32 %v3262, %v3263
        %v3265 = vsel %vm2042, %v3247, 0.0
        %v3266 = vadd.f32 %v3264, %v3265
        %v3267 = vsel %vm2042, %v3248, 0.0
        %v3268 = vadd.f32 %v3266, %v3267
        %v3269 = vsel %vm2042, %v3249, 0.0
        %v3270 = vadd.f32 %v3268, %v3269
        %v3271 = vsel %vm2042, %v3250, 0.0
        %v3272 = vadd.f32 %v3270, %v3271
        %v3273 = vsel %vm2042, %v3251, 0.0
        %v3274 = vadd.f32 %v3272, %v3273
        %v3275 = vsel %vm2042, %v3252, 0.0
        %v3276 = vadd.f32 %v3274, %v3275
        %v3277 = vsel %vm2042, %v3253, 0.0
        %v3278 = vadd.f32 %v3276, %v3277
        %v3279 = vsel %vm2042, %v3254, 0.0
        %v3280 = vadd.f32 %v3278, %v3279
        %v3281 = vsel %vm2042, %v3255, 0.0
        %v3282 = vadd.f32 %v3280, %v3281
        %v3283 = vsel %vm2042, %v3256, 0.0
        %v3284 = vadd.f32 %v3282, %v3283
        %v3285 = vsel %vm2042, %v3257, 0.0
        %v3286 = vadd.f32 %v3284, %v3285
        %v3287 = vsel %vm2042, %v3258, 0.0
        %v3288 = vadd.f32 %v3286, %v3287
        %v3289 = vsel %vm2042, %v3259, 0.0
        %v3290 = vadd.f32 %v3288, %v3289
        %v3291 = vrot.slane %v3290, 4
        %v3292 = vadd.f32 %v3290, %v3291
        %v3293 = vrot.slane %v3292, 2
        %v3294 = vadd.f32 %v3292, %v3293
        %v3295 = vrot.slane %v3294, 1
        %v3296 = vadd.f32 %v3294, %v3295
        %v3297 = vadd.f32 %v3243, %v3296
        %3298 = vst.msk [vmem:[#allocation5 + $0x1] sm:$0x1] %vm3241, %v3297
        %v3299 = vld [vmem:[#allocation5 + $0x2] sm:$0x1]
        %v3300 = vsel %vm2042, %v3186, inf
        %v3301 = vsel %vm2042, %v3187, inf
        %v3302 = vsel %vm2042, %v3188, inf
        %v3303 = vsel %vm2042, %v3189, inf
        %v3304 = vsel %vm2042, %v3190, inf
        %v3305 = vmin.f32 %v3300, %v3304
        %v3306 = vsel %vm2042, %v3191, inf
        %v3307 = vmin.f32 %v3301, %v3306
        %v3308 = vsel %vm2042, %v3192, inf
        %v3309 = vmin.f32 %v3302, %v3308
        %v3310 = vsel %vm2042, %v3193, inf
        %v3311 = vmin.f32 %v3303, %v3310
        %v3312 = vsel %vm2042, %v3194, inf
        %v3313 = vmin.f32 %v3305, %v3312
        %v3314 = vsel %vm2042, %v3195, inf
        %v3315 = vmin.f32 %v3307, %v3314
        %v3316 = vsel %vm2042, %v3196, inf
        %v3317 = vmin.f32 %v3309, %v3316
        %v3318 = vsel %vm2042, %v3197, inf
        %v3319 = vmin.f32 %v3311, %v3318
        %v3320 = vsel %vm2042, %v3198, inf
        %v3321 = vmin.f32 %v3313, %v3320
        %v3322 = vsel %vm2042, %v3199, inf
        %v3323 = vmin.f32 %v3315, %v3322
        %v3324 = vsel %vm2042, %v3200, inf
        %v3325 = vmin.f32 %v3317, %v3324
        %v3326 = vsel %vm2042, %v3201, inf
        %v3327 = vmin.f32 %v3319, %v3326
        %v3328 = vmin.f32 %v3321, %v3323
        %v3329 = vmin.f32 %v3325, %v3327
        %v3330 = vmin.f32 %v3328, %v3329
        %v3331 = vrot.slane %v3330, 4
        %v3332 = vmin.f32 %v3330, %v3331
        %v3333 = vrot.slane %v3332, 2
        %v3334 = vmin.f32 %v3332, %v3333
        %v3335 = vrot.slane %v3334, 1
        %v3336 = vmin.f32 %v3334, %v3335
        %v3337 = vmin.f32 %v3299, %v3336
        %3338 = vst.msk [vmem:[#allocation5 + $0x2] sm:$0x1] %vm3241, %v3337
        %v3339 = vld [vmem:[#allocation5 + $0x3] sm:$0x1]
        %v3340 = vsel %vm2042, %v3186, -inf
        %v3341 = vsel %vm2042, %v3187, -inf
        %v3342 = vsel %vm2042, %v3188, -inf
        %v3343 = vsel %vm2042, %v3189, -inf
        %v3344 = vsel %vm2042, %v3190, -inf
        %v3345 = vmax.f32 %v3340, %v3344
        %v3346 = vsel %vm2042, %v3191, -inf
        %v3347 = vmax.f32 %v3341, %v3346
        %v3348 = vsel %vm2042, %v3192, -inf
        %v3349 = vmax.f32 %v3342, %v3348
        %v3350 = vsel %vm2042, %v3193, -inf
        %v3351 = vmax.f32 %v3343, %v3350
        %v3352 = vsel %vm2042, %v3194, -inf
        %v3353 = vmax.f32 %v3345, %v3352
        %v3354 = vsel %vm2042, %v3195, -inf
        %v3355 = vmax.f32 %v3347, %v3354
        %v3356 = vsel %vm2042, %v3196, -inf
        %v3357 = vmax.f32 %v3349, %v3356
        %v3358 = vsel %vm2042, %v3197, -inf
        %v3359 = vmax.f32 %v3351, %v3358
        %v3360 = vsel %vm2042, %v3198, -inf
        %v3361 = vmax.f32 %v3353, %v3360
        %v3362 = vsel %vm2042, %v3199, -inf
        %v3363 = vmax.f32 %v3355, %v3362
        %v3364 = vsel %vm2042, %v3200, -inf
        %v3365 = vmax.f32 %v3357, %v3364
        %v3366 = vsel %vm2042, %v3201, -inf
        %v3367 = vmax.f32 %v3359, %v3366
        %v3368 = vmax.f32 %v3361, %v3363
        %v3369 = vmax.f32 %v3365, %v3367
        %v3370 = vmax.f32 %v3368, %v3369
        %v3371 = vrot.slane %v3370, 4
        %v3372 = vmax.f32 %v3370, %v3371
        %v3373 = vrot.slane %v3372, 2
        %v3374 = vmax.f32 %v3372, %v3373
        %v3375 = vrot.slane %v3374, 1
        %v3376 = vmax.f32 %v3374, %v3375
        %v3377 = vmax.f32 %v3339, %v3376
        %3378 = vst.msk [vmem:[#allocation5 + $0x3] sm:$0x1] %vm3241, %v3377
        %p3379 = scmp.eq.s32.totalorder %s60, 1
        // Predicated region
        $region177: #{tpu_custom_call.1} parent=111 // pred_check
          %p3380 = pneg %p3379
        $region178: #{tpu_custom_call.1} parent=111 // pred_check_branch
          %3382 = sbr.rel (%p3380) target = $region180
        $region179: #{tpu_custom_call.1} parent=111 // pred_region
          %v3383 = vld [vmem:[#allocation5] sm:$0x1]
          %v3384 = vmul.f32 %v3383, 0.00390625
          %v3385 = vld [vmem:[#allocation5 + $0x1] sm:$0x1]
          %v3386 = vmul.f32 %v3384, 256.0
          %v3387 = vmul.f32 %v3386, %v3384
          %v3388 = vsub.f32 %v3385, %v3387
          %v3389 = vmax.f32 %v3388, 0.0
          %v3390 = vrcp.pop 255.0
          %v3391 = vmul.f32 %v3389, %v3390
          %v3392 = vrsqrt.pop %v3391
          %v3393 = vmul.f32 %v3391, %v3392
          %vm3394 = vcmp.eq.f32.partialorder %v3391, inf
          %v3395 = vsel %vm3394, %v3391, %v3393
          %vm3396 = vcmp.eq.f32.partialorder %v3391, 0.0
          %v3397 = vand.u32 %v3391, 2147483648
          %v3398 = vsel %vm3396, %v3397, %v3395
          %v3399 = vld [vmem:[#allocation5 + $0x2] sm:$0x1]
          %v3400 = vld [vmem:[#allocation5 + $0x3] sm:$0x1]
          %v3401 = vld [vmem:[%s15] sm:$0xff]
          %v3402 = vld [vmem:[%s15 + $0x8] sm:$0xff]
          %v3403 = vld [vmem:[%s15 + $0x10] sm:$0xff]
          %v3404 = vld [vmem:[%s15 + $0x18] sm:$0xff]
          %v3405 = vld [vmem:[%s15 + $0x20] sm:$0xff]
          %v3406 = vld [vmem:[%s15 + $0x28] sm:$0xff]
          %v3407 = vld [vmem:[%s15 + $0x30] sm:$0xff]
          %v3408 = vld [vmem:[%s15 + $0x38] sm:$0xff]
          %v3410 = vsel %vm2042, %v3399, 0
          %3412 = vmatprep.subr.mxu0 0.0
          %3413 = vmatpush1.msra.mxu0 0.0
          %3414 = vmatprep.subr.mxu0 0.0
          %3415 = vmatpush1.msra.mxu0 0.0
          %3416 = vmatprep.subr.mxu0 0.0
          %3417 = vmatpush1.msra.mxu0 0.0
          %3418 = vmatprep.subr.mxu0 0.0
          %3419 = vmatpush1.msra.mxu0 0.0
          %3420 = vmatprep.subr.mxu0 0.0
          %3421 = vmatpush1.msra.mxu0 0.0
          %3422 = vmatprep.subr.mxu0 0.0
          %3423 = vmatpush1.msra.mxu0 0.0
          %3424 = vmatprep.subr.mxu0 0.0
          %3425 = vmatpush1.msra.mxu0 0.0
          %3426 = vmatprep.subr.mxu0 0.0
          %3427 = vmatpush1.msra.mxu0 0.0
          %3428 = vmatprep.subr.mxu0 0.0
          %3429 = vmatpush1.msra.mxu0 0.0
          %3430 = vmatprep.subr.mxu0 0.0
          %3431 = vmatpush1.msra.mxu0 0.0
          %3432 = vmatprep.subr.mxu0 0.0
          %3433 = vmatpush1.msra.mxu0 0.0
          %3434 = vmatprep.subr.mxu0 0.0
          %3435 = vmatpush1.msra.mxu0 0.0
          %3436 = vmatprep.subr.mxu0 0.0
          %3437 = vmatpush1.msra.mxu0 0.0
          %3438 = vmatprep.subr.mxu0 0.0
          %3439 = vmatpush1.msra.mxu0 0.0
          %3440 = vmatprep.subr.mxu0 0.0
          %3441 = vmatpush1.msra.mxu0 %v3404
          %3442 = vmatprep.subr.mxu0 0.0
          %3443 = vmatpush1.msra.mxu0 %v3403
          %3444 = vmatprep.subr.mxu0 0.0
          %3445 = vmatpush2.msra.mxu0 0.0
          %3446 = vmatprep.subr.mxu0 0.0
          %3447 = vmatpush2.msra.mxu0 0.0
          %3448 = vmatprep.subr.mxu0 0.0
          %3449 = vmatpush2.msra.mxu0 0.0
          %3450 = vmatprep.subr.mxu0 0.0
          %3451 = vmatpush2.msra.mxu0 0.0
          %3452 = vmatprep.subr.mxu0 0.0
          %3453 = vmatpush2.msra.mxu0 0.0
          %3454 = vmatprep.subr.mxu0 0.0
          %3455 = vmatpush2.msra.mxu0 0.0
          %3456 = vmatprep.subr.mxu0 0.0
          %3457 = vmatpush2.msra.mxu0 0.0
          %3458 = vmatprep.subr.mxu0 0.0
          %3459 = vmatpush2.msra.mxu0 0.0
          %3460 = vmatprep.subr.mxu0 0.0
          %3461 = vmatpush2.msra.mxu0 0.0
          %3462 = vmatprep.subr.mxu0 0.0
          %3463 = vmatpush2.msra.mxu0 0.0
          %3464 = vmatprep.subr.mxu0 0.0
          %3465 = vmatpush2.msra.mxu0 0.0
          %3466 = vmatprep.subr.mxu0 0.0
          %3467 = vmatpush2.msra.mxu0 0.0
          %3468 = vmatprep.subr.mxu0 0.0
          %3469 = vmatpush2.msra.mxu0 0.0
          %3470 = vmatprep.subr.mxu0 0.0
          %3471 = vmatpush2.msra.mxu0 0.0
          %3472 = vmatprep.subr.mxu0 0.0
          %3473 = vmatpush2.msra.mxu0 0.0
          %3474 = vmatprep.subr.mxu0 0.0
          %3475 = vmatpush2.msra.mxu0 0.0
          %3476 = vmatprep.mubr.f32.mxu0 0.0
          %3477 = vmatmul.mubr.f32.gmra.mxu0 %v3410
          %v3478 = vpop.f32.mrf.mxu0
          %v3479 = vadd.f32 0.0, %v3478
          %v3480 = vpop.f32.mrf.mxu0
          %3481 = vdwg.mxu0
          %v3483 = vsel %vm2042, %v3384, 0
          %3485 = vmatprep.subr.mxu0 0.0
          %3486 = vmatpush1.msra.mxu0 0.0
          %3487 = vmatprep.subr.mxu0 0.0
          %3488 = vmatpush1.msra.mxu0 0.0
          %3489 = vmatprep.subr.mxu0 0.0
          %3490 = vmatpush1.msra.mxu0 0.0
          %3491 = vmatprep.subr.mxu0 0.0
          %3492 = vmatpush1.msra.mxu0 0.0
          %3493 = vmatprep.subr.mxu0 0.0
          %3494 = vmatpush1.msra.mxu0 0.0
          %3495 = vmatprep.subr.mxu0 0.0
          %3496 = vmatpush1.msra.mxu0 0.0
          %3497 = vmatprep.subr.mxu0 0.0
          %3498 = vmatpush1.msra.mxu0 0.0
          %3499 = vmatprep.subr.mxu0 0.0
          %3500 = vmatpush1.msra.mxu0 0.0
          %3501 = vmatprep.subr.mxu0 0.0
          %3502 = vmatpush1.msra.mxu0 0.0
          %3503 = vmatprep.subr.mxu0 0.0
          %3504 = vmatpush1.msra.mxu0 0.0
          %3505 = vmatprep.subr.mxu0 0.0
          %3506 = vmatpush1.msra.mxu0 0.0
          %3507 = vmatprep.subr.mxu0 0.0
          %3508 = vmatpush1.msra.mxu0 0.0
          %3509 = vmatprep.subr.mxu0 0.0
          %3510 = vmatpush1.msra.mxu0 0.0
          %3511 = vmatprep.subr.mxu0 0.0
          %3512 = vmatpush1.msra.mxu0 0.0
          %3513 = vmatprep.subr.mxu0 0.0
          %3514 = vmatpush1.msra.mxu0 %v3402
          %3515 = vmatprep.subr.mxu0 0.0
          %3516 = vmatpush1.msra.mxu0 %v3401
          %3517 = vmatprep.subr.mxu0 0.0
          %3518 = vmatpush2.msra.mxu0 0.0
          %3519 = vmatprep.subr.mxu0 0.0
          %3520 = vmatpush2.msra.mxu0 0.0
          %3521 = vmatprep.subr.mxu0 0.0
          %3522 = vmatpush2.msra.mxu0 0.0
          %3523 = vmatprep.subr.mxu0 0.0
          %3524 = vmatpush2.msra.mxu0 0.0
          %3525 = vmatprep.subr.mxu0 0.0
          %3526 = vmatpush2.msra.mxu0 0.0
          %3527 = vmatprep.subr.mxu0 0.0
          %3528 = vmatpush2.msra.mxu0 0.0
          %3529 = vmatprep.subr.mxu0 0.0
          %3530 = vmatpush2.msra.mxu0 0.0
          %3531 = vmatprep.subr.mxu0 0.0
          %3532 = vmatpush2.msra.mxu0 0.0
          %3533 = vmatprep.subr.mxu0 0.0
          %3534 = vmatpush2.msra.mxu0 0.0
          %3535 = vmatprep.subr.mxu0 0.0
          %3536 = vmatpush2.msra.mxu0 0.0
          %3537 = vmatprep.subr.mxu0 0.0
          %3538 = vmatpush2.msra.mxu0 0.0
          %3539 = vmatprep.subr.mxu0 0.0
          %3540 = vmatpush2.msra.mxu0 0.0
          %3541 = vmatprep.subr.mxu0 0.0
          %3542 = vmatpush2.msra.mxu0 0.0
          %3543 = vmatprep.subr.mxu0 0.0
          %3544 = vmatpush2.msra.mxu0 0.0
          %3545 = vmatprep.subr.mxu0 0.0
          %3546 = vmatpush2.msra.mxu0 0.0
          %3547 = vmatprep.subr.mxu0 0.0
          %3548 = vmatpush2.msra.mxu0 0.0
          %3549 = vmatprep.mubr.f32.mxu0 0.0
          %3550 = vmatmul.mubr.f32.gmra.mxu0 %v3483
          %v3551 = vpop.f32.mrf.mxu0
          %v3552 = vadd.f32 %v3479, %v3551
          %v3553 = vpop.f32.mrf.mxu0
          %3554 = vdwg.mxu0
          %v3556 = vsel %vm2042, %v3400, 0
          %3558 = vmatprep.subr.mxu0 0.0
          %3559 = vmatpush1.msra.mxu0 0.0
          %3560 = vmatprep.subr.mxu0 0.0
          %3561 = vmatpush1.msra.mxu0 0.0
          %3562 = vmatprep.subr.mxu0 0.0
          %3563 = vmatpush1.msra.mxu0 0.0
          %3564 = vmatprep.subr.mxu0 0.0
          %3565 = vmatpush1.msra.mxu0 0.0
          %3566 = vmatprep.subr.mxu0 0.0
          %3567 = vmatpush1.msra.mxu0 0.0
          %3568 = vmatprep.subr.mxu0 0.0
          %3569 = vmatpush1.msra.mxu0 0.0
          %3570 = vmatprep.subr.mxu0 0.0
          %3571 = vmatpush1.msra.mxu0 0.0
          %3572 = vmatprep.subr.mxu0 0.0
          %3573 = vmatpush1.msra.mxu0 0.0
          %3574 = vmatprep.subr.mxu0 0.0
          %3575 = vmatpush1.msra.mxu0 0.0
          %3576 = vmatprep.subr.mxu0 0.0
          %3577 = vmatpush1.msra.mxu0 0.0
          %3578 = vmatprep.subr.mxu0 0.0
          %3579 = vmatpush1.msra.mxu0 0.0
          %3580 = vmatprep.subr.mxu0 0.0
          %3581 = vmatpush1.msra.mxu0 0.0
          %3582 = vmatprep.subr.mxu0 0.0
          %3583 = vmatpush1.msra.mxu0 0.0
          %3584 = vmatprep.subr.mxu0 0.0
          %3585 = vmatpush1.msra.mxu0 0.0
          %3586 = vmatprep.subr.mxu0 0.0
          %3587 = vmatpush1.msra.mxu0 %v3406
          %3588 = vmatprep.subr.mxu0 0.0
          %3589 = vmatpush1.msra.mxu0 %v3405
          %3590 = vmatprep.subr.mxu0 0.0
          %3591 = vmatpush2.msra.mxu0 0.0
          %3592 = vmatprep.subr.mxu0 0.0
          %3593 = vmatpush2.msra.mxu0 0.0
          %3594 = vmatprep.subr.mxu0 0.0
          %3595 = vmatpush2.msra.mxu0 0.0
          %3596 = vmatprep.subr.mxu0 0.0
          %3597 = vmatpush2.msra.mxu0 0.0
          %3598 = vmatprep.subr.mxu0 0.0
          %3599 = vmatpush2.msra.mxu0 0.0
          %3600 = vmatprep.subr.mxu0 0.0
          %3601 = vmatpush2.msra.mxu0 0.0
          %3602 = vmatprep.subr.mxu0 0.0
          %3603 = vmatpush2.msra.mxu0 0.0
          %3604 = vmatprep.subr.mxu0 0.0
          %3605 = vmatpush2.msra.mxu0 0.0
          %3606 = vmatprep.subr.mxu0 0.0
          %3607 = vmatpush2.msra.mxu0 0.0
          %3608 = vmatprep.subr.mxu0 0.0
          %3609 = vmatpush2.msra.mxu0 0.0
          %3610 = vmatprep.subr.mxu0 0.0
          %3611 = vmatpush2.msra.mxu0 0.0
          %3612 = vmatprep.subr.mxu0 0.0
          %3613 = vmatpush2.msra.mxu0 0.0
          %3614 = vmatprep.subr.mxu0 0.0
          %3615 = vmatpush2.msra.mxu0 0.0
          %3616 = vmatprep.subr.mxu0 0.0
          %3617 = vmatpush2.msra.mxu0 0.0
          %3618 = vmatprep.subr.mxu0 0.0
          %3619 = vmatpush2.msra.mxu0 0.0
          %3620 = vmatprep.subr.mxu0 0.0
          %3621 = vmatpush2.msra.mxu0 0.0
          %3622 = vmatprep.mubr.f32.mxu0 0.0
          %3623 = vmatmul.mubr.f32.gmra.mxu0 %v3556
          %v3624 = vpop.f32.mrf.mxu0
          %v3625 = vadd.f32 0.0, %v3624
          %v3626 = vpop.f32.mrf.mxu0
          %3627 = vdwg.mxu0
          %v3628 = vadd.f32 %v3552, %v3625
          %v3630 = vsel %vm2042, %v3398, 0
          %3632 = vmatprep.subr.mxu0 0.0
          %3633 = vmatpush1.msra.mxu0 0.0
          %3634 = vmatprep.subr.mxu0 0.0
          %3635 = vmatpush1.msra.mxu0 0.0
          %3636 = vmatprep.subr.mxu0 0.0
          %3637 = vmatpush1.msra.mxu0 0.0
          %3638 = vmatprep.subr.mxu0 0.0
          %3639 = vmatpush1.msra.mxu0 0.0
          %3640 = vmatprep.subr.mxu0 0.0
          %3641 = vmatpush1.msra.mxu0 0.0
          %3642 = vmatprep.subr.mxu0 0.0
          %3643 = vmatpush1.msra.mxu0 0.0
          %3644 = vmatprep.subr.mxu0 0.0
          %3645 = vmatpush1.msra.mxu0 0.0
          %3646 = vmatprep.subr.mxu0 0.0
          %3647 = vmatpush1.msra.mxu0 0.0
          %3648 = vmatprep.subr.mxu0 0.0
          %3649 = vmatpush1.msra.mxu0 0.0
          %3650 = vmatprep.subr.mxu0 0.0
          %3651 = vmatpush1.msra.mxu0 0.0
          %3652 = vmatprep.subr.mxu0 0.0
          %3653 = vmatpush1.msra.mxu0 0.0
          %3654 = vmatprep.subr.mxu0 0.0
          %3655 = vmatpush1.msra.mxu0 0.0
          %3656 = vmatprep.subr.mxu0 0.0
          %3657 = vmatpush1.msra.mxu0 0.0
          %3658 = vmatprep.subr.mxu0 0.0
          %3659 = vmatpush1.msra.mxu0 0.0
          %3660 = vmatprep.subr.mxu0 0.0
          %3661 = vmatpush1.msra.mxu0 %v3408
          %3662 = vmatprep.subr.mxu0 0.0
          %3663 = vmatpush1.msra.mxu0 %v3407
          %3664 = vmatprep.subr.mxu0 0.0
          %3665 = vmatpush2.msra.mxu0 0.0
          %3666 = vmatprep.subr.mxu0 0.0
          %3667 = vmatpush2.msra.mxu0 0.0
          %3668 = vmatprep.subr.mxu0 0.0
          %3669 = vmatpush2.msra.mxu0 0.0
          %3670 = vmatprep.subr.mxu0 0.0
          %3671 = vmatpush2.msra.mxu0 0.0
          %3672 = vmatprep.subr.mxu0 0.0
          %3673 = vmatpush2.msra.mxu0 0.0
          %3674 = vmatprep.subr.mxu0 0.0
          %3675 = vmatpush2.msra.mxu0 0.0
          %3676 = vmatprep.subr.mxu0 0.0
          %3677 = vmatpush2.msra.mxu0 0.0
          %3678 = vmatprep.subr.mxu0 0.0
          %3679 = vmatpush2.msra.mxu0 0.0
          %3680 = vmatprep.subr.mxu0 0.0
          %3681 = vmatpush2.msra.mxu0 0.0
          %3682 = vmatprep.subr.mxu0 0.0
          %3683 = vmatpush2.msra.mxu0 0.0
          %3684 = vmatprep.subr.mxu0 0.0
          %3685 = vmatpush2.msra.mxu0 0.0
          %3686 = vmatprep.subr.mxu0 0.0
          %3687 = vmatpush2.msra.mxu0 0.0
          %3688 = vmatprep.subr.mxu0 0.0
          %3689 = vmatpush2.msra.mxu0 0.0
          %3690 = vmatprep.subr.mxu0 0.0
          %3691 = vmatpush2.msra.mxu0 0.0
          %3692 = vmatprep.subr.mxu0 0.0
          %3693 = vmatpush2.msra.mxu0 0.0
          %3694 = vmatprep.subr.mxu0 0.0
          %3695 = vmatpush2.msra.mxu0 0.0
          %3696 = vmatprep.mubr.f32.mxu0 0.0
          %3697 = vmatmul.mubr.f32.gmra.mxu0 %v3630
          %v3698 = vpop.f32.mrf.mxu0
          %v3699 = vadd.f32 0.0, %v3698
          %v3700 = vpop.f32.mrf.mxu0
          %3701 = vdwg.mxu0
          %v3702 = vadd.f32 %v3628, %v3699
          %v3703 = vld [vmem:[#allocation26] sm:$0x1]
          %v3704 = vadd.f32 %v3702, %v3703
          %v3705 = vld [vmem:[#allocation4] sm:$0x1]
          %v3706 = vadd.f32 %v3705, %v3704
          %v3707 = vld [vmem:[#allocation29] sm:$0xff]
          %v3708 = vld [vmem:[#allocation29 + $0x8] sm:$0xff]
          %v3709 = vld [vmem:[%s22] sm:$0x1]
          %v3711 = vsel %vm2042, %v3706, 0
          %3713 = vmatprep.subr.mxu0 0.0
          %3714 = vmatpush1.msra.mxu0 0.0
          %3715 = vmatprep.subr.mxu0 0.0
          %3716 = vmatpush1.msra.mxu0 0.0
          %3717 = vmatprep.subr.mxu0 0.0
          %3718 = vmatpush1.msra.mxu0 0.0
          %3719 = vmatprep.subr.mxu0 0.0
          %3720 = vmatpush1.msra.mxu0 0.0
          %3721 = vmatprep.subr.mxu0 0.0
          %3722 = vmatpush1.msra.mxu0 0.0
          %3723 = vmatprep.subr.mxu0 0.0
          %3724 = vmatpush1.msra.mxu0 0.0
          %3725 = vmatprep.subr.mxu0 0.0
          %3726 = vmatpush1.msra.mxu0 0.0
          %3727 = vmatprep.subr.mxu0 0.0
          %3728 = vmatpush1.msra.mxu0 0.0
          %3729 = vmatprep.subr.mxu0 0.0
          %3730 = vmatpush1.msra.mxu0 0.0
          %3731 = vmatprep.subr.mxu0 0.0
          %3732 = vmatpush1.msra.mxu0 0.0
          %3733 = vmatprep.subr.mxu0 0.0
          %3734 = vmatpush1.msra.mxu0 0.0
          %3735 = vmatprep.subr.mxu0 0.0
          %3736 = vmatpush1.msra.mxu0 0.0
          %3737 = vmatprep.subr.mxu0 0.0
          %3738 = vmatpush1.msra.mxu0 0.0
          %3739 = vmatprep.subr.mxu0 0.0
          %3740 = vmatpush1.msra.mxu0 0.0
          %3741 = vmatprep.subr.mxu0 0.0
          %3742 = vmatpush1.msra.mxu0 %v3708
          %3743 = vmatprep.subr.mxu0 0.0
          %3744 = vmatpush1.msra.mxu0 %v3707
          %3745 = vmatprep.subr.mxu0 0.0
          %3746 = vmatpush2.msra.mxu0 0.0
          %3747 = vmatprep.subr.mxu0 0.0
          %3748 = vmatpush2.msra.mxu0 0.0
          %3749 = vmatprep.subr.mxu0 0.0
          %3750 = vmatpush2.msra.mxu0 0.0
          %3751 = vmatprep.subr.mxu0 0.0
          %3752 = vmatpush2.msra.mxu0 0.0
          %3753 = vmatprep.subr.mxu0 0.0
          %3754 = vmatpush2.msra.mxu0 0.0
          %3755 = vmatprep.subr.mxu0 0.0
          %3756 = vmatpush2.msra.mxu0 0.0
          %3757 = vmatprep.subr.mxu0 0.0
          %3758 = vmatpush2.msra.mxu0 0.0
          %3759 = vmatprep.subr.mxu0 0.0
          %3760 = vmatpush2.msra.mxu0 0.0
          %3761 = vmatprep.subr.mxu0 0.0
          %3762 = vmatpush2.msra.mxu0 0.0
          %3763 = vmatprep.subr.mxu0 0.0
          %3764 = vmatpush2.msra.mxu0 0.0
          %3765 = vmatprep.subr.mxu0 0.0
          %3766 = vmatpush2.msra.mxu0 0.0
          %3767 = vmatprep.subr.mxu0 0.0
          %3768 = vmatpush2.msra.mxu0 0.0
          %3769 = vmatprep.subr.mxu0 0.0
          %3770 = vmatpush2.msra.mxu0 0.0
          %3771 = vmatprep.subr.mxu0 0.0
          %3772 = vmatpush2.msra.mxu0 0.0
          %3773 = vmatprep.subr.mxu0 0.0
          %3774 = vmatpush2.msra.mxu0 0.0
          %3775 = vmatprep.subr.mxu0 0.0
          %3776 = vmatpush2.msra.mxu0 0.0
          %3777 = vmatprep.mubr.f32.mxu0 0.0
          %3778 = vmatmul.mubr.f32.gmra.mxu0 %v3711
          %v3779 = vpop.f32.mrf.mxu0
          %v3780 = vadd.f32 %v3709, %v3779
          %v3781 = vpop.f32.mrf.mxu0
          %3782 = vdwg.mxu0
          %v3783 = vmax.f32 %v3780, 0.0
          %s3784 = scalar_lea.vmem [#allocation29], 16
          %v3785 = vld [vmem:[%s3784] sm:$0xff]
          %v3786 = vld [vmem:[%s3784 + $0x8] sm:$0xff]
          %s3787 = scalar_lea.vmem %s22, 1
          %v3788 = vld [vmem:[%s3787] sm:$0x1]
          %v3790 = vsel %vm2042, %v3783, 0
          %3792 = vmatprep.subr.mxu0 0.0
          %3793 = vmatpush1.msra.mxu0 0.0
          %3794 = vmatprep.subr.mxu0 0.0
          %3795 = vmatpush1.msra.mxu0 0.0
          %3796 = vmatprep.subr.mxu0 0.0
          %3797 = vmatpush1.msra.mxu0 0.0
          %3798 = vmatprep.subr.mxu0 0.0
          %3799 = vmatpush1.msra.mxu0 0.0
          %3800 = vmatprep.subr.mxu0 0.0
          %3801 = vmatpush1.msra.mxu0 0.0
          %3802 = vmatprep.subr.mxu0 0.0
          %3803 = vmatpush1.msra.mxu0 0.0
          %3804 = vmatprep.subr.mxu0 0.0
          %3805 = vmatpush1.msra.mxu0 0.0
          %3806 = vmatprep.subr.mxu0 0.0
          %3807 = vmatpush1.msra.mxu0 0.0
          %3808 = vmatprep.subr.mxu0 0.0
          %3809 = vmatpush1.msra.mxu0 0.0
          %3810 = vmatprep.subr.mxu0 0.0
          %3811 = vmatpush1.msra.mxu0 0.0
          %3812 = vmatprep.subr.mxu0 0.0
          %3813 = vmatpush1.msra.mxu0 0.0
          %3814 = vmatprep.subr.mxu0 0.0
          %3815 = vmatpush1.msra.mxu0 0.0
          %3816 = vmatprep.subr.mxu0 0.0
          %3817 = vmatpush1.msra.mxu0 0.0
          %3818 = vmatprep.subr.mxu0 0.0
          %3819 = vmatpush1.msra.mxu0 0.0
          %3820 = vmatprep.subr.mxu0 0.0
          %3821 = vmatpush1.msra.mxu0 %v3786
          %3822 = vmatprep.subr.mxu0 0.0
          %3823 = vmatpush1.msra.mxu0 %v3785
          %3824 = vmatprep.subr.mxu0 0.0
          %3825 = vmatpush2.msra.mxu0 0.0
          %3826 = vmatprep.subr.mxu0 0.0
          %3827 = vmatpush2.msra.mxu0 0.0
          %3828 = vmatprep.subr.mxu0 0.0
          %3829 = vmatpush2.msra.mxu0 0.0
          %3830 = vmatprep.subr.mxu0 0.0
          %3831 = vmatpush2.msra.mxu0 0.0
          %3832 = vmatprep.subr.mxu0 0.0
          %3833 = vmatpush2.msra.mxu0 0.0
          %3834 = vmatprep.subr.mxu0 0.0
          %3835 = vmatpush2.msra.mxu0 0.0
          %3836 = vmatprep.subr.mxu0 0.0
          %3837 = vmatpush2.msra.mxu0 0.0
          %3838 = vmatprep.subr.mxu0 0.0
          %3839 = vmatpush2.msra.mxu0 0.0
          %3840 = vmatprep.subr.mxu0 0.0
          %3841 = vmatpush2.msra.mxu0 0.0
          %3842 = vmatprep.subr.mxu0 0.0
          %3843 = vmatpush2.msra.mxu0 0.0
          %3844 = vmatprep.subr.mxu0 0.0
          %3845 = vmatpush2.msra.mxu0 0.0
          %3846 = vmatprep.subr.mxu0 0.0
          %3847 = vmatpush2.msra.mxu0 0.0
          %3848 = vmatprep.subr.mxu0 0.0
          %3849 = vmatpush2.msra.mxu0 0.0
          %3850 = vmatprep.subr.mxu0 0.0
          %3851 = vmatpush2.msra.mxu0 0.0
          %3852 = vmatprep.subr.mxu0 0.0
          %3853 = vmatpush2.msra.mxu0 0.0
          %3854 = vmatprep.subr.mxu0 0.0
          %3855 = vmatpush2.msra.mxu0 0.0
          %3856 = vmatprep.mubr.f32.mxu0 0.0
          %3857 = vmatmul.mubr.f32.gmra.mxu0 %v3790
          %v3858 = vpop.f32.mrf.mxu0
          %v3859 = vadd.f32 %v3788, %v3858
          %v3860 = vpop.f32.mrf.mxu0
          %3861 = vdwg.mxu0
          %3862 = vst.msk [vmem:[%s1091] sm:$0x1] %vm3241, %v3859
        $region180: #{tpu_custom_call.1} parent=111 // pred_fallthru
          _
        %s3863 = sand.u32 %s589, 1
        %s3864 = scalar_lea.sflag [#allocation8], %s3863
        %s3865 = sand.u32 %s589, 1
        %s3866 = smul.addr %s3865, 8
        %s3867 = scalar_lea.vmem [#allocation30], %s3866
        %s3868 = sand.u32 %s55, 1
        %s3869 = scalar_lea.sflag [#allocation32], %s3868
        %s3870 = sand.u32 %s617, 1
        %s3871 = smul.addr %s3870, 128
        %s3872 = scalar_lea.vmem [#allocation31], %s3871
        %s3873 = sand.u32 %s55, 1
        %s3874 = scalar_lea.sflag [#allocation32], %s3873
        %s3875 = sand.u32 %s643, 1
        %s3876 = scalar_lea.vmem [#allocation33], %s3875
        // Predicated region
        $region181: #{tpu_custom_call.1} parent=111 // pred_check
          %p3877 = pneg %p599
        $region182: #{tpu_custom_call.1} parent=111 // pred_check_branch
          %3879 = sbr.rel (%p3877) target = $region184
        $region183: #{tpu_custom_call.1} parent=111 // pred_region
          %s3881 = ssub.s32 128, 128
          %3882 = vsyncadd %s3864, %s3881
          %s3883 = smul.addr %s59, 2
          %s3884 = sadd.s32 %s60, %s3883
          %s3885 = smul.addr %s3884, 128
          %s3886 = scalar_lea.hbm %s23, %s3885
          %s3888 = sshll.u32 %s3867, 4
          %s3889 = int_to_ptr.vmem [resolvable:$true] %s3888
          %3891 = dma.vmem_to_hbm [thread:$0]  %s3889, 128, %s3886, %s3864
        $region184: #{tpu_custom_call.1} parent=111 // pred_fallthru
          _
        // Predicated region
        $region185: #{tpu_custom_call.1} parent=111 // pred_check
          %p3892 = pneg %p627
        $region186: #{tpu_custom_call.1} parent=111 // pred_check_branch
          %3894 = sbr.rel (%p3892) target = $region188
        $region187: #{tpu_custom_call.1} parent=111 // pred_region
          %s3895 = smul.u32 8, %s60
          %s3897 = ssub.s32 2048, 2048
          %3898 = vsyncadd %s3869, %s3897
          %s3899 = smul.addr %s3895, 2
          %s3900 = smul.addr %s59, 32
          %s3901 = sadd.s32 %s3899, %s3900
          %s3902 = smul.addr %s3901, 128
          %s3903 = scalar_lea.hbm %s24, %s3902
          %s3904 = sshll.u32 %s3872, 4
          %s3905 = int_to_ptr.vmem [resolvable:$true] %s3904
          %3910 = dma.vmem_to_hbm [thread:$0]  %s3905, 2048, %s3903, %s3869, 128, 128, 8
        $region188: #{tpu_custom_call.1} parent=111 // pred_fallthru
          _
        // Predicated region
        $region189: #{tpu_custom_call.1} parent=111 // pred_check
          %p3911 = pneg %p653
        $region190: #{tpu_custom_call.1} parent=111 // pred_check_branch
          %3913 = sbr.rel (%p3911) target = $region192
        $region191: #{tpu_custom_call.1} parent=111 // pred_region
          %s3915 = ssub.s32 16, 16
          %3916 = vsyncadd %s3874, %s3915
          %s3917 = smul.addr %s59, 16
          %s3918 = scalar_lea.hbm %s25, %s3917
          %s3920 = sshll.u32 %s3876, 4
          %s3921 = int_to_ptr.vmem [resolvable:$true] %s3920
          %3923 = dma.vmem_to_hbm [thread:$0]  %s3921, 16, %s3918, %s3874
        $region192: #{tpu_custom_call.1} parent=111 // pred_fallthru
          _
      $region112: #{tpu_custom_call.1} parent=5 // pred_fallthru
        _
      %p3924 = scmp.le.s32.totalorder 2, %s50
      // Predicated region
      $region193: #{tpu_custom_call.1} parent=5 // pred_check
        %p3925 = pneg %p3924
      $region194: #{tpu_custom_call.1} parent=5 // pred_check_branch
        %3927 = sbr.rel (%p3925) target = $region196
      $region195: #{tpu_custom_call.1} parent=5 // pred_region
        %s3928 = ssub.s32 %s50, 2
        // Predicated region
        $region197: #{tpu_custom_call.1} parent=195 // pred_check
          %p3929 = pneg %p605
        $region198: #{tpu_custom_call.1} parent=195 // pred_check_branch
          %3931 = sbr.rel (%p3929) target = $region200
        $region199: #{tpu_custom_call.1} parent=195 // pred_region
          %s3932 = sand.u32 %s590, 1
          %s3933 = scalar_lea.sflag [#allocation8], %s3932
          %s3934 = sand.u32 %s590, 1
          %s3935 = smul.addr %s3934, 8
          %s3936 = scalar_lea.vmem [#allocation30], %s3935
          %3937 = dma.done %s3933, 128
        $region200: #{tpu_custom_call.1} parent=195 // pred_fallthru
          _
        // Predicated region
        $region201: #{tpu_custom_call.1} parent=195 // pred_check
          %p3938 = pneg %p633
        $region202: #{tpu_custom_call.1} parent=195 // pred_check_branch
          %3940 = sbr.rel (%p3938) target = $region204
        $region203: #{tpu_custom_call.1} parent=195 // pred_region
          %s3941 = sand.u32 %s56, 1
          %s3942 = scalar_lea.sflag [#allocation32], %s3941
          %s3943 = sand.u32 %s618, 1
          %s3944 = smul.addr %s3943, 128
          %s3945 = scalar_lea.vmem [#allocation31], %s3944
          %3946 = dma.done %s3942, 2048
        $region204: #{tpu_custom_call.1} parent=195 // pred_fallthru
          _
        // Predicated region
        $region205: #{tpu_custom_call.1} parent=195 // pred_check
          %p3947 = pneg %p659
        $region206: #{tpu_custom_call.1} parent=195 // pred_check_branch
          %3949 = sbr.rel (%p3947) target = $region208
        $region207: #{tpu_custom_call.1} parent=195 // pred_region
          %s3950 = sand.u32 %s56, 1
          %s3951 = scalar_lea.sflag [#allocation32], %s3950
          %s3952 = sand.u32 %s644, 1
          %s3953 = scalar_lea.vmem [#allocation33], %s3952
          %3954 = dma.done %s3951, 16
        $region208: #{tpu_custom_call.1} parent=195 // pred_fallthru
          _
      $region196: #{tpu_custom_call.1} parent=5 // pred_fallthru
        _
    $region6: #{tpu_custom_call.1} parent=1 // loop_footer
      %s54 = sadd.s32 1, %s50
    $region7: #{tpu_custom_call.1} parent=1 // loop_footer_branch
      %49 = sbr.rel target = $region3
    $region8: #{tpu_custom_call.1} parent=1 // loop_exit
      _
    %3955 = vsyncpa [#allocation7], 1
    %s3956 = scalar_lea.sflag [#allocation7], 1
    %3957 = vsyncpa %s3956, 1
    %3958 = vsyncpa [#allocation10], 1
    %s3959 = scalar_lea.sflag [#allocation10], 1
    %3960 = vsyncpa %s3959, 1
    %3961 = vsyncpa [#allocation13], 1
    %3962 = vsyncpa [#allocation16], 1
    %3963 = vsyncpa [#allocation19], 1
    %3964 = vsyncpa [#allocation22], 1
    %3965 = vsyncpa [#allocation25], 1
    %3966 = vsyncpa [#allocation28], 1
    %3967 = vsyncpa [#allocation8], 1
    %s3968 = scalar_lea.sflag [#allocation8], 1
    %3969 = vsyncpa %s3968, 1
    %3970 = vsyncpa [#allocation32], 1
    %s3971 = scalar_lea.sflag [#allocation32], 1
    %3972 = vsyncpa %s3971, 1

</llo_original>
